<compile_context>
chip_gen: v6e
topology: v6e:2x2x1
jax: 0.10.0
libtpu: 0.0.40
codegen_flags: <defaults>
</compile_context>

<pallas_src>
import functools

import jax
import jax.numpy as jnp
from jax import lax
from jax.experimental import pallas as pl
from jax.experimental.pallas import tpu as pltpu


_MASK_BIAS = -1e30   # finite "minus infinity": exp() underflows to exactly 0 for masked keys
_TQ_CAP = 512        # query-tile cap
_TK_CAP = 1024       # kv-tile cap


def _flash_attention_kernel(flags_ref,             # SMEM (N * num_kv,) int32 tile flags
                            q_ref, k_ref, v_ref,   # (1, tq, H*D), (1, tk, H*D), (1, tk, H*D)
                            qm_ref, kb_ref,        # (1, 1, tq) f32, (1, tk, 1) f32
                            o_ref,                 # (1, H*D, tq)  (transposed output layout)
                            m_ref, l_ref, acc_ref, # (H,1,tq), (H,1,tq), (H,D,tq) f32 scratch
                            *, num_heads, head_dim):
    n_idx = pl.program_id(0)
    kv_idx = pl.program_id(2)
    num_kv = pl.num_programs(2)

    @pl.when(kv_idx == 0)
    def _init():
        m_ref[...] = jnp.full(m_ref.shape, -jnp.inf, dtype=m_ref.dtype)
        l_ref[...] = jnp.zeros(l_ref.shape, dtype=l_ref.dtype)
        acc_ref[...] = jnp.zeros(acc_ref.shape, dtype=acc_ref.dtype)

    flag = flags_ref[n_idx * num_kv + kv_idx]
    scale = 1.0 / (head_dim ** 0.5)

    def _step(apply_mask):
        if apply_mask:
            kv_bias = kb_ref[0]                                    # (tk, 1) additive bias
        for h in range(num_heads):                                 # static unroll over heads
            lo = h * head_dim
            # Per-head lane slices of the (t, H*D) blocks; scale q on L*D (not L*S), then
            # cast MXU operands to bf16 (f32 accumulation via preferred_element_type).
            q = (q_ref[0, :, pl.ds(lo, head_dim)] * scale).astype(jnp.bfloat16)   # (tq, D)
            k = k_ref[0, :, pl.ds(lo, head_dim)].astype(jnp.bfloat16)             # (tk, D)
            v = v_ref[0, :, pl.ds(lo, head_dim)].astype(jnp.bfloat16)             # (tk, D)

            # Transposed scores: s[kk, qq] = sum_d k[kk, d] * q[qq, d]  -> (tk, tq).
            s = lax.dot_general(k, q, (((1,), (1,)), ((), ())),
                                preferred_element_type=jnp.float32)
            if apply_mask:
                s = s + kv_bias                                    # (tk, 1) broadcasts over lanes

            m_prev = m_ref[h]                                      # (1, tq)
            m_new = jnp.maximum(m_prev, jnp.max(s, axis=0, keepdims=True))
            alpha = jnp.exp(m_prev - m_new)                        # (1, tq)
            p = jnp.exp(s - m_new)                                 # (tk, tq) f32

            l_ref[h] = alpha * l_ref[h] + jnp.sum(p, axis=0, keepdims=True)
            # PV with lane-dense output: pv[d, qq] = sum_kk v[kk, d] * p[kk, qq] -> (D, tq).
            pv = lax.dot_general(v, p.astype(jnp.bfloat16),
                                 (((0,), (0,)), ((), ())),
                                 preferred_element_type=jnp.float32)
            acc_ref[h] = alpha * acc_ref[h] + pv
            m_ref[h] = m_new

    @pl.when(flag == 2)          # fully valid kv tile -> no bias add
    def _full_tile():
        _step(apply_mask=False)

    @pl.when(flag == 1)          # partially masked kv tile -> additive bias
    def _partial_tile():
        _step(apply_mask=True)
    # flag == 0: fully masked / pure padding tile -> all MXU/EUP/VALU work skipped.

    @pl.when(kv_idx == num_kv - 1)
    def _finalize():
        # One exact reciprocal over the whole denominator scratch (off the critical path).
        # max(.., tiny) keeps fully-masked rows finite (zeros), acc is 0 there anyway.
        inv = 1.0 / jnp.maximum(l_ref[...], 1e-30)                 # (H, 1, tq)
        out = acc_ref[...] * inv * qm_ref[...]                     # (H, D, tq), qm zeroes padded/masked queries
        # Free leading-dim merge -> single full-width store into the (H*D, tq) output block.
        o_ref[0] = out.reshape(num_heads * head_dim, out.shape[-1]).astype(o_ref.dtype)


def _round_up(x, m):
    return ((x + m - 1) // m) * m


def _cdiv(a, b):
    return (a + b - 1) // b


def _pick_q_tile(L, N):
    """Query tile (multiple of 8; multiple of 128 or == padded L so the transposed
    output / q-mask blocks satisfy the lane-dim constraint)."""
    Lp0 = _round_up(L, 8)
    if Lp0 <= _TQ_CAP:
        tq = Lp0
        # v7x has 2 TensorCores sharding the parallel grid axes: when N == 1, try to
        # create >= 2 (n, lq) blocks, unless that requires excessive query padding.
        if N == 1 and L > 128:
            t2 = _round_up(_cdiv(Lp0, 2), 128)
            if _round_up(L, t2) <= Lp0 + Lp0 // 8:
                tq = t2
        return tq
    return _TQ_CAP


def _pick_kv_tile(S):
    """KV tile: full (8-padded) length if it fits the cap, else the cap (multiple of 8)."""
    Sp0 = _round_up(S, 8)
    return Sp0 if Sp0 <= _TK_CAP else _TK_CAP


def full_attention(queries, keys, values, q_mask=None, kv_mask=None):
    """queries: [N, L, H, D]; keys/values: [N, S, H, D]; masks: [N, L] / [N, S] bool.
    Returns: [N, L, H, D] (same forward semantics as the PyTorch FullAttention module)."""
    N, L, H, D = queries.shape
    S = keys.shape[1]
    HD = H * D

    if q_mask is None:
        q_mask = jnp.ones((N, L), dtype=bool)
    if kv_mask is None:
        kv_mask = jnp.ones((N, S), dtype=bool)

    tq = _pick_q_tile(L, N)
    tk = _pick_kv_tile(S)
    Lp = _round_up(L, tq)
    Sp = _round_up(S, tk)
    num_lq = Lp // tq
    num_kv = Sp // tk

    # Pad to tile multiples: padded queries are masked out / sliced off, padded keys are
    # masked via the additive bias and whole-tile skip flags.
    q2 = jnp.pad(queries.reshape(N, L, HD), ((0, 0), (0, Lp - L), (0, 0)))
    k2 = jnp.pad(keys.reshape(N, S, HD), ((0, 0), (0, Sp - S), (0, 0)))
    v2 = jnp.pad(values.reshape(N, S, HD), ((0, 0), (0, Sp - S), (0, 0)))

    qm_p = jnp.pad(q_mask, ((0, 0), (0, Lp - L)), constant_values=False)
    kvm_p = jnp.pad(kv_mask, ((0, 0), (0, Sp - S)), constant_values=False)

    qm = qm_p.astype(jnp.float32).reshape(N, 1, Lp)                          # 1 valid / 0 pad
    kv_bias = jnp.where(kvm_p, 0.0, _MASK_BIAS).astype(jnp.float32).reshape(N, Sp, 1)

    # Per-(batch, kv-tile) validity flags (scalar prefetch, SMEM):
    # 0 = fully masked/padded, 1 = partially masked, 2 = fully valid.
    valid = kvm_p.reshape(N, num_kv, tk).sum(axis=-1)
    kv_flags = jnp.where(valid == 0, 0, jnp.where(valid == tk, 2, 1))
    kv_flags = kv_flags.astype(jnp.int32).reshape(N * num_kv)

    grid = (N, num_lq, num_kv)
    kernel = functools.partial(_flash_attention_kernel, num_heads=H, head_dim=D)

    # Rough VMEM need: double-buffered q/out + k/v blocks, scratch, transient score tiles.
    est = 4 * (4 * tq * HD            # q + out blocks (double-buffered)
               + 4 * tk * HD          # k + v blocks (double-buffered)
               + HD * tq              # acc scratch
               + 4 * H * tq           # m / l scratch
               + 4 * tk * tq)         # transient (tk, tq) score / prob tiles
    vmem_limit = int(min(max(2 * est, 32 * 1024 * 1024), 64 * 1024 * 1024))  # 64 MiB cap: valid on v7x

    out_t = pl.pallas_call(
        kernel,
        out_shape=jax.ShapeDtypeStruct((N, HD, Lp), queries.dtype),
        grid_spec=pltpu.PrefetchScalarGridSpec(
            num_scalar_prefetch=1,
            grid=grid,
            in_specs=[
                # q / q_mask blocks are constant across kv -> fetched once per (n, lq).
                pl.BlockSpec((1, tq, HD), lambda n, lq, kv, flags: (n, lq, 0)),
                pl.BlockSpec((1, tk, HD), lambda n, lq, kv, flags: (n, kv, 0)),
                pl.BlockSpec((1, tk, HD), lambda n, lq, kv, flags: (n, kv, 0)),
                pl.BlockSpec((1, 1, tq),  lambda n, lq, kv, flags: (n, 0, lq)),
                pl.BlockSpec((1, tk, 1),  lambda n, lq, kv, flags: (n, kv, 0)),
            ],
            # Output block constant across kv -> stays VMEM-resident (accumulator pattern).
            out_specs=pl.BlockSpec((1, HD, tq), lambda n, lq, kv, flags: (n, 0, lq)),
            scratch_shapes=[
                pltpu.VMEM((H, 1, tq), jnp.float32),   # running max  m  (lane-dense)
                pltpu.VMEM((H, 1, tq), jnp.float32),   # running sum  l  (lane-dense)
                pltpu.VMEM((H, D, tq), jnp.float32),   # running numerator acc (lane-dense)
            ],
        ),
        compiler_params=pltpu.CompilerParams(
            dimension_semantics=("parallel", "parallel", "arbitrary"),
            vmem_limit_bytes=vmem_limit),
    )(kv_flags, q2, k2, v2, qm, kv_bias)

    # (N, H*D, Lp) -> (N, L, H, D): one cheap XLA layout transpose on the small output.
    out = jnp.transpose(out_t, (0, 2, 1))[:, :L, :]
    return out.reshape(N, L, H, D)


def _reference_attention(queries, keys, values, q_mask, kv_mask):
    QK = jnp.einsum('nlhd,nshd->nlsh', queries, keys)
    mask = q_mask[:, :, None, None] & kv_mask[:, None, :, None]
    QK = jnp.where(mask, QK, -jnp.inf)
    softmax_temp = 1.0 / (queries.shape[3] ** 0.5)
    A = jax.nn.softmax(softmax_temp * QK, axis=2)
    return jnp.einsum('nlsh,nshd->nlhd', A, values)


if __name__ == "__main__":
    # --- Test 1: small shapes matching the module's documented layout -------------------
    N, L, S, H, D = 2, 8, 8, 4, 32
    key = jax.random.PRNGKey(0)
    kq, kk, kv_ = jax.random.split(key, 3)
    queries = jax.random.normal(kq, (N, L, H, D), dtype=jnp.float32)
    keys_ = jax.random.normal(kk, (N, S, H, D), dtype=jnp.float32)
    values = jax.random.normal(kv_, (N, S, H, D), dtype=jnp.float32)

    q_mask = jnp.ones((N, L), dtype=bool)
    kv_mask = jnp.arange(S)[None, :] < jnp.array([[S], [S - 2]])   # (N, S) bool, batch 1 padded

    out = jax.block_until_ready(full_attention(queries, keys_, values, q_mask, kv_mask))
    ref = _reference_attention(queries, keys_, values, q_mask, kv_mask)
    assert out.shape == (N, L, H, D)
    err1 = float(jnp.max(jnp.abs(out - ref)))
    # Tolerance reflects bf16 MXU operands (f32 accumulation) vs. the all-f32 reference.
    assert jnp.allclose(out, ref, atol=2e-2, rtol=2e-2), f"test1 mismatch: max|diff|={err1}"

    # --- Test 2: non-tile-multiple lengths, multiple kv tiles, mixed tile flags ---------
    N2, L2, S2, H2, D2 = 1, 300, 1300, 2, 64
    k2q, k2k, k2v = jax.random.split(jax.random.PRNGKey(1), 3)
    q_2 = jax.random.normal(k2q, (N2, L2, H2, D2), dtype=jnp.float32)
    k_2 = jax.random.normal(k2k, (N2, S2, H2, D2), dtype=jnp.float32)
    v_2 = jax.random.normal(k2v, (N2, S2, H2, D2), dtype=jnp.float32)
    qm2 = jnp.ones((N2, L2), dtype=bool)
    kvm2 = jnp.arange(S2)[None, :] < 1100      # fully-valid first kv tile, partial second

    out2 = jax.block_until_ready(full_attention(q_2, k_2, v_2, qm2, kvm2))
    ref2 = _reference_attention(q_2, k_2, v_2, qm2, kvm2)
    assert out2.shape == (N2, L2, H2, D2)
    err2 = float(jnp.max(jnp.abs(out2 - ref2)))
    assert jnp.allclose(out2, ref2, atol=2e-2, rtol=2e-2), f"test2 mismatch: max|diff|={err2}"

    print("KERNEL_OK")
</pallas_src>

<mosaic_0001>
module attributes {stable_mosaic.version = 11 : i64} {
  func.func @_flash_attention_kernel(%arg0: i32, %arg1: i32, %arg2: i32, %arg3: memref<2xi32, #tpu.memory_space<smem>>, %arg4: memref<1x8x128xf32, #tpu.memory_space<vmem>>, %arg5: memref<1x8x128xf32, #tpu.memory_space<vmem>>, %arg6: memref<1x8x128xf32, #tpu.memory_space<vmem>>, %arg7: memref<1x1x8xf32, #tpu.memory_space<vmem>>, %arg8: memref<1x8x1xf32, #tpu.memory_space<vmem>>, %arg9: memref<1x128x8xf32, #tpu.memory_space<vmem>>, %arg10: memref<4x1x8xf32, #tpu.memory_space<vmem>>, %arg11: memref<4x1x8xf32, #tpu.memory_space<vmem>>, %arg12: memref<4x32x8xf32, #tpu.memory_space<vmem>>) attributes {dimension_semantics = [#tpu.dimension_semantics<parallel>, #tpu.dimension_semantics<parallel>, #tpu.dimension_semantics<arbitrary>], iteration_bounds = array<i64: 2, 1, 1>, scalar_prefetch = 1 : i64, scratch_operands = 3 : i64, tpu.core_type = #tpu.core_type<tc>, window_params = [{transform_indices = @transform_0, window_bounds = array<i64: 1, 8, 128>}, {transform_indices = @transform_1, window_bounds = array<i64: 1, 8, 128>}, {transform_indices = @transform_2, window_bounds = array<i64: 1, 8, 128>}, {transform_indices = @transform_3, window_bounds = array<i64: 1, 1, 8>}, {transform_indices = @transform_4, window_bounds = array<i64: 1, 8, 1>}, {transform_indices = @transform_5, window_bounds = array<i64: 1, 128, 8>}]} {
    %c0_i32 = arith.constant 0 : i32
    %0 = arith.cmpi eq, %arg2, %c0_i32 : i32
    %1 = arith.extui %0 : i1 to i32
    %c0_i32_0 = arith.constant 0 : i32
    %2 = arith.cmpi ne, %1, %c0_i32_0 : i32
    scf.if %2 {
      %cst = arith.constant 0xFF800000 : f32
      %16 = vector.broadcast %cst : f32 to vector<4x1x8xf32>
      %c0 = arith.constant 0 : index
      %c0_6 = arith.constant 0 : index
      %c0_7 = arith.constant 0 : index
      %17 = vector.load %arg10[%c0, %c0_6, %c0_7] : memref<4x1x8xf32, #tpu.memory_space<vmem>>, vector<4x1x8xf32>
      tpu.vector_store %arg10[%c0, %c0_6, %c0_7], %16 {strides = array<i32>} : memref<4x1x8xf32, #tpu.memory_space<vmem>>, vector<4x1x8xf32>,
      %cst_8 = arith.constant 0.000000e+00 : f32
      %18 = vector.broadcast %cst_8 : f32 to vector<4x1x8xf32>
      %c0_9 = arith.constant 0 : index
      %c0_10 = arith.constant 0 : index
      %c0_11 = arith.constant 0 : index
      %19 = vector.load %arg11[%c0_9, %c0_10, %c0_11] : memref<4x1x8xf32, #tpu.memory_space<vmem>>, vector<4x1x8xf32>
      tpu.vector_store %arg11[%c0_9, %c0_10, %c0_11], %18 {strides = array<i32>} : memref<4x1x8xf32, #tpu.memory_space<vmem>>, vector<4x1x8xf32>,
      %cst_12 = arith.constant 0.000000e+00 : f32
      %20 = vector.broadcast %cst_12 : f32 to vector<4x32x8xf32>
      %c0_13 = arith.constant 0 : index
      %c0_14 = arith.constant 0 : index
      %c0_15 = arith.constant 0 : index
      %21 = vector.load %arg12[%c0_13, %c0_14, %c0_15] : memref<4x32x8xf32, #tpu.memory_space<vmem>>, vector<4x32x8xf32>
      tpu.vector_store %arg12[%c0_13, %c0_14, %c0_15], %20 {strides = array<i32>} : memref<4x32x8xf32, #tpu.memory_space<vmem>>, vector<4x32x8xf32>,
    } else {
    }
    %c1_i32 = arith.constant 1 : i32
    %3 = arith.muli %arg0, %c1_i32 : i32
    %4 = arith.addi %3, %arg2 : i32
    %5 = arith.index_cast %4 : i32 to index
    %6 = memref.load %arg3[%5] : memref<2xi32, #tpu.memory_space<smem>>
    %c2_i32 = arith.constant 2 : i32
    %7 = arith.cmpi eq, %6, %c2_i32 : i32
    %8 = arith.extui %7 : i1 to i32
    %c0_i32_1 = arith.constant 0 : i32
    %9 = arith.cmpi ne, %8, %c0_i32_1 : i32
    scf.if %9 {
      %c0 = arith.constant 0 : index
      %c0_6 = arith.constant 0 : index
      %c0_7 = arith.constant 0 : index
      %16 = vector.load %arg4[%c0, %c0_6, %c0_7] : memref<1x8x128xf32, #tpu.memory_space<vmem>>, vector<1x8x32xf32>
      %17 = vector.shape_cast %16 : vector<1x8x32xf32> to vector<8x32xf32>
      %cst = arith.constant 0.176776692 : f32
      %18 = vector.broadcast %cst : f32 to vector<8x32xf32>
      %19 = arith.mulf %17, %18 : vector<8x32xf32>
      %20 = arith.truncf %19 : vector<8x32xf32> to vector<8x32xbf16>
      %c0_8 = arith.constant 0 : index
      %c0_9 = arith.constant 0 : index
      %c0_10 = arith.constant 0 : index
      %21 = vector.load %arg5[%c0_8, %c0_9, %c0_10] : memref<1x8x128xf32, #tpu.memory_space<vmem>>, vector<1x8x32xf32>
      %22 = vector.shape_cast %21 : vector<1x8x32xf32> to vector<8x32xf32>
      %23 = arith.truncf %22 : vector<8x32xf32> to vector<8x32xbf16>
      %c0_11 = arith.constant 0 : index
      %c0_12 = arith.constant 0 : index
      %c0_13 = arith.constant 0 : index
      %24 = vector.load %arg6[%c0_11, %c0_12, %c0_13] : memref<1x8x128xf32, #tpu.memory_space<vmem>>, vector<1x8x32xf32>
      %25 = vector.shape_cast %24 : vector<1x8x32xf32> to vector<8x32xf32>
      %26 = arith.truncf %25 : vector<8x32xf32> to vector<8x32xbf16>
      %cst_14 = arith.constant dense<0.000000e+00> : vector<8x8xf32>
      %27 = tpu.matmul %23, %20, %cst_14 {dimension_numbers = #tpu.dot_dimension_numbers<[1], [1], [0], [0], [0, 0, 1, 0], [], []>} : vector<8x32xbf16>, vector<8x32xbf16>, vector<8x8xf32> -> vector<8x8xf32>
      %c0_15 = arith.constant 0 : index
      %c0_16 = arith.constant 0 : index
      %c0_17 = arith.constant 0 : index
      %28 = vector.load %arg10[%c0_15, %c0_16, %c0_17] : memref<4x1x8xf32, #tpu.memory_space<vmem>>, vector<1x1x8xf32>
      %29 = vector.shape_cast %28 : vector<1x1x8xf32> to vector<1x8xf32>
      %cst_18 = arith.constant dense<0xFF800000> : vector<8xf32>
      %30 = vector.multi_reduction <maximumf>, %27, %cst_18 [0] : vector<8x8xf32> to vector<8xf32>
      %31 = vector.shape_cast %30 : vector<8xf32> to vector<1x8xf32>
      %32 = arith.maximumf %29, %31 : vector<1x8xf32>
      %33 = arith.subf %29, %32 : vector<1x8xf32>
      %34 = math.exp %33 : vector<1x8xf32>
      %35 = vector.broadcast %32 : vector<1x8xf32> to vector<8x8xf32>
      %36 = arith.subf %27, %35 : vector<8x8xf32>
      %37 = math.exp %36 : vector<8x8xf32>
      %c0_19 = arith.constant 0 : index
      %c0_20 = arith.constant 0 : index
      %c0_21 = arith.constant 0 : index
      %38 = vector.load %arg11[%c0_19, %c0_20, %c0_21] : memref<4x1x8xf32, #tpu.memory_space<vmem>>, vector<1x1x8xf32>
      %39 = vector.shape_cast %38 : vector<1x1x8xf32> to vector<1x8xf32>
      %40 = arith.mulf %34, %39 : vector<1x8xf32>
      %cst_22 = arith.constant dense<0.000000e+00> : vector<8xf32>
      %41 = vector.multi_reduction <add>, %37, %cst_22 [0] : vector<8x8xf32> to vector<8xf32>
      %42 = vector.shape_cast %41 : vector<8xf32> to vector<1x8xf32>
      %43 = arith.addf %40, %42 : vector<1x8xf32>
      %c0_23 = arith.constant 0 : index
      %c0_24 = arith.constant 0 : index
      %c0_25 = arith.constant 0 : index
      %44 = vector.load %arg11[%c0_23, %c0_24, %c0_25] : memref<4x1x8xf32, #tpu.memory_space<vmem>>, vector<1x1x8xf32>
      %45 = vector.shape_cast %44 : vector<1x1x8xf32> to vector<1x8xf32>
      %46 = vector.shape_cast %43 : vector<1x8xf32> to vector<1x1x8xf32>
      tpu.vector_store %arg11[%c0_23, %c0_24, %c0_25], %46 {strides = array<i32>} : memref<4x1x8xf32, #tpu.memory_space<vmem>>, vector<1x1x8xf32>,
      %47 = arith.truncf %37 : vector<8x8xf32> to vector<8x8xbf16>
      %cst_26 = arith.constant dense<0.000000e+00> : vector<32x8xf32>
      %48 = tpu.matmul %26, %47, %cst_26 {dimension_numbers = #tpu.dot_dimension_numbers<[0], [0], [1], [1], [0, 1, 1, 1], [], []>} : vector<8x32xbf16>, vector<8x8xbf16>, vector<32x8xf32> -> vector<32x8xf32>
      %c0_27 = arith.constant 0 : index
      %c0_28 = arith.constant 0 : index
      %c0_29 = arith.constant 0 : index
      %49 = vector.load %arg12[%c0_27, %c0_28, %c0_29] : memref<4x32x8xf32, #tpu.memory_space<vmem>>, vector<1x32x8xf32>
      %50 = vector.shape_cast %49 : vector<1x32x8xf32> to vector<32x8xf32>
      %51 = vector.broadcast %34 : vector<1x8xf32> to vector<32x8xf32>
      %52 = arith.mulf %51, %50 : vector<32x8xf32>
      %53 = arith.addf %52, %48 : vector<32x8xf32>
      %c0_30 = arith.constant 0 : index
      %c0_31 = arith.constant 0 : index
      %c0_32 = arith.constant 0 : index
      %54 = vector.load %arg12[%c0_30, %c0_31, %c0_32] : memref<4x32x8xf32, #tpu.memory_space<vmem>>, vector<1x32x8xf32>
      %55 = vector.shape_cast %54 : vector<1x32x8xf32> to vector<32x8xf32>
      %56 = vector.shape_cast %53 : vector<32x8xf32> to vector<1x32x8xf32>
      tpu.vector_store %arg12[%c0_30, %c0_31, %c0_32], %56 {strides = array<i32>} : memref<4x32x8xf32, #tpu.memory_space<vmem>>, vector<1x32x8xf32>,
      %c0_33 = arith.constant 0 : index
      %c0_34 = arith.constant 0 : index
      %c0_35 = arith.constant 0 : index
      %57 = vector.load %arg10[%c0_33, %c0_34, %c0_35] : memref<4x1x8xf32, #tpu.memory_space<vmem>>, vector<1x1x8xf32>
      %58 = vector.shape_cast %57 : vector<1x1x8xf32> to vector<1x8xf32>
      %59 = vector.shape_cast %32 : vector<1x8xf32> to vector<1x1x8xf32>
      tpu.vector_store %arg10[%c0_33, %c0_34, %c0_35], %59 {strides = array<i32>} : memref<4x1x8xf32, #tpu.memory_space<vmem>>, vector<1x1x8xf32>,
      %c0_36 = arith.constant 0 : index
      %c0_37 = arith.constant 0 : index
      %c32 = arith.constant 32 : index
      %60 = vector.load %arg4[%c0_36, %c0_37, %c32] : memref<1x8x128xf32, #tpu.memory_space<vmem>>, vector<1x8x32xf32>
      %61 = vector.shape_cast %60 : vector<1x8x32xf32> to vector<8x32xf32>
      %cst_38 = arith.constant 0.176776692 : f32
      %62 = vector.broadcast %cst_38 : f32 to vector<8x32xf32>
      %63 = arith.mulf %61, %62 : vector<8x32xf32>
      %64 = arith.truncf %63 : vector<8x32xf32> to vector<8x32xbf16>
      %c0_39 = arith.constant 0 : index
      %c0_40 = arith.constant 0 : index
      %c32_41 = arith.constant 32 : index
      %65 = vector.load %arg5[%c0_39, %c0_40, %c32_41] : memref<1x8x128xf32, #tpu.memory_space<vmem>>, vector<1x8x32xf32>
      %66 = vector.shape_cast %65 : vector<1x8x32xf32> to vector<8x32xf32>
      %67 = arith.truncf %66 : vector<8x32xf32> to vector<8x32xbf16>
      %c0_42 = arith.constant 0 : index
      %c0_43 = arith.constant 0 : index
      %c32_44 = arith.constant 32 : index
      %68 = vector.load %arg6[%c0_42, %c0_43, %c32_44] : memref<1x8x128xf32, #tpu.memory_space<vmem>>, vector<1x8x32xf32>
      %69 = vector.shape_cast %68 : vector<1x8x32xf32> to vector<8x32xf32>
      %70 = arith.truncf %69 : vector<8x32xf32> to vector<8x32xbf16>
      %cst_45 = arith.constant dense<0.000000e+00> : vector<8x8xf32>
      %71 = tpu.matmul %67, %64, %cst_45 {dimension_numbers = #tpu.dot_dimension_numbers<[1], [1], [0], [0], [0, 0, 1, 0], [], []>} : vector<8x32xbf16>, vector<8x32xbf16>, vector<8x8xf32> -> vector<8x8xf32>
      %c1 = arith.constant 1 : index
      %c0_46 = arith.constant 0 : index
      %c0_47 = arith.constant 0 : index
      %72 = vector.load %arg10[%c1, %c0_46, %c0_47] : memref<4x1x8xf32, #tpu.memory_space<vmem>>, vector<1x1x8xf32>
      %73 = vector.shape_cast %72 : vector<1x1x8xf32> to vector<1x8xf32>
      %cst_48 = arith.constant dense<0xFF800000> : vector<8xf32>
      %74 = vector.multi_reduction <maximumf>, %71, %cst_48 [0] : vector<8x8xf32> to vector<8xf32>
      %75 = vector.shape_cast %74 : vector<8xf32> to vector<1x8xf32>
      %76 = arith.maximumf %73, %75 : vector<1x8xf32>
      %77 = arith.subf %73, %76 : vector<1x8xf32>
      %78 = math.exp %77 : vector<1x8xf32>
      %79 = vector.broadcast %76 : vector<1x8xf32> to vector<8x8xf32>
      %80 = arith.subf %71, %79 : vector<8x8xf32>
      %81 = math.exp %80 : vector<8x8xf32>
      %c1_49 = arith.constant 1 : index
      %c0_50 = arith.constant 0 : index
      %c0_51 = arith.constant 0 : index
      %82 = vector.load %arg11[%c1_49, %c0_50, %c0_51] : memref<4x1x8xf32, #tpu.memory_space<vmem>>, vector<1x1x8xf32>
      %83 = vector.shape_cast %82 : vector<1x1x8xf32> to vector<1x8xf32>
      %84 = arith.mulf %78, %83 : vector<1x8xf32>
      %cst_52 = arith.constant dense<0.000000e+00> : vector<8xf32>
      %85 = vector.multi_reduction <add>, %81, %cst_52 [0] : vector<8x8xf32> to vector<8xf32>
      %86 = vector.shape_cast %85 : vector<8xf32> to vector<1x8xf32>
      %87 = arith.addf %84, %86 : vector<1x8xf32>
      %c1_53 = arith.constant 1 : index
      %c0_54 = arith.constant 0 : index
      %c0_55 = arith.constant 0 : index
      %88 = vector.load %arg11[%c1_53, %c0_54, %c0_55] : memref<4x1x8xf32, #tpu.memory_space<vmem>>, vector<1x1x8xf32>
      %89 = vector.shape_cast %88 : vector<1x1x8xf32> to vector<1x8xf32>
      %90 = vector.shape_cast %87 : vector<1x8xf32> to vector<1x1x8xf32>
      tpu.vector_store %arg11[%c1_53, %c0_54, %c0_55], %90 {strides = array<i32>} : memref<4x1x8xf32, #tpu.memory_space<vmem>>, vector<1x1x8xf32>,
      %91 = arith.truncf %81 : vector<8x8xf32> to vector<8x8xbf16>
      %cst_56 = arith.constant dense<0.000000e+00> : vector<32x8xf32>
      %92 = tpu.matmul %70, %91, %cst_56 {dimension_numbers = #tpu.dot_dimension_numbers<[0], [0], [1], [1], [0, 1, 1, 1], [], []>} : vector<8x32xbf16>, vector<8x8xbf16>, vector<32x8xf32> -> vector<32x8xf32>
      %c1_57 = arith.constant 1 : index
      %c0_58 = arith.constant 0 : index
      %c0_59 = arith.constant 0 : index
      %93 = vector.load %arg12[%c1_57, %c0_58, %c0_59] : memref<4x32x8xf32, #tpu.memory_space<vmem>>, vector<1x32x8xf32>
      %94 = vector.shape_cast %93 : vector<1x32x8xf32> to vector<32x8xf32>
      %95 = vector.broadcast %78 : vector<1x8xf32> to vector<32x8xf32>
      %96 = arith.mulf %95, %94 : vector<32x8xf32>
      %97 = arith.addf %96, %92 : vector<32x8xf32>
      %c1_60 = arith.constant 1 : index
      %c0_61 = arith.constant 0 : index
      %c0_62 = arith.constant 0 : index
      %98 = vector.load %arg12[%c1_60, %c0_61, %c0_62] : memref<4x32x8xf32, #tpu.memory_space<vmem>>, vector<1x32x8xf32>
      %99 = vector.shape_cast %98 : vector<1x32x8xf32> to vector<32x8xf32>
      %100 = vector.shape_cast %97 : vector<32x8xf32> to vector<1x32x8xf32>
      tpu.vector_store %arg12[%c1_60, %c0_61, %c0_62], %100 {strides = array<i32>} : memref<4x32x8xf32, #tpu.memory_space<vmem>>, vector<1x32x8xf32>,
      %c1_63 = arith.constant 1 : index
      %c0_64 = arith.constant 0 : index
      %c0_65 = arith.constant 0 : index
      %101 = vector.load %arg10[%c1_63, %c0_64, %c0_65] : memref<4x1x8xf32, #tpu.memory_space<vmem>>, vector<1x1x8xf32>
      %102 = vector.shape_cast %101 : vector<1x1x8xf32> to vector<1x8xf32>
      %103 = vector.shape_cast %76 : vector<1x8xf32> to vector<1x1x8xf32>
      tpu.vector_store %arg10[%c1_63, %c0_64, %c0_65], %103 {strides = array<i32>} : memref<4x1x8xf32, #tpu.memory_space<vmem>>, vector<1x1x8xf32>,
      %c0_66 = arith.constant 0 : index
      %c0_67 = arith.constant 0 : index
      %c64 = arith.constant 64 : index
      %104 = vector.load %arg4[%c0_66, %c0_67, %c64] : memref<1x8x128xf32, #tpu.memory_space<vmem>>, vector<1x8x32xf32>
      %105 = vector.shape_cast %104 : vector<1x8x32xf32> to vector<8x32xf32>
      %cst_68 = arith.constant 0.176776692 : f32
      %106 = vector.broadcast %cst_68 : f32 to vector<8x32xf32>
      %107 = arith.mulf %105, %106 : vector<8x32xf32>
      %108 = arith.truncf %107 : vector<8x32xf32> to vector<8x32xbf16>
      %c0_69 = arith.constant 0 : index
      %c0_70 = arith.constant 0 : index
      %c64_71 = arith.constant 64 : index
      %109 = vector.load %arg5[%c0_69, %c0_70, %c64_71] : memref<1x8x128xf32, #tpu.memory_space<vmem>>, vector<1x8x32xf32>
      %110 = vector.shape_cast %109 : vector<1x8x32xf32> to vector<8x32xf32>
      %111 = arith.truncf %110 : vector<8x32xf32> to vector<8x32xbf16>
      %c0_72 = arith.constant 0 : index
      %c0_73 = arith.constant 0 : index
      %c64_74 = arith.constant 64 : index
      %112 = vector.load %arg6[%c0_72, %c0_73, %c64_74] : memref<1x8x128xf32, #tpu.memory_space<vmem>>, vector<1x8x32xf32>
      %113 = vector.shape_cast %112 : vector<1x8x32xf32> to vector<8x32xf32>
      %114 = arith.truncf %113 : vector<8x32xf32> to vector<8x32xbf16>
      %cst_75 = arith.constant dense<0.000000e+00> : vector<8x8xf32>
      %115 = tpu.matmul %111, %108, %cst_75 {dimension_numbers = #tpu.dot_dimension_numbers<[1], [1], [0], [0], [0, 0, 1, 0], [], []>} : vector<8x32xbf16>, vector<8x32xbf16>, vector<8x8xf32> -> vector<8x8xf32>
      %c2 = arith.constant 2 : index
      %c0_76 = arith.constant 0 : index
      %c0_77 = arith.constant 0 : index
      %116 = vector.load %arg10[%c2, %c0_76, %c0_77] : memref<4x1x8xf32, #tpu.memory_space<vmem>>, vector<1x1x8xf32>
      %117 = vector.shape_cast %116 : vector<1x1x8xf32> to vector<1x8xf32>
      %cst_78 = arith.constant dense<0xFF800000> : vector<8xf32>
      %118 = vector.multi_reduction <maximumf>, %115, %cst_78 [0] : vector<8x8xf32> to vector<8xf32>
      %119 = vector.shape_cast %118 : vector<8xf32> to vector<1x8xf32>
      %120 = arith.maximumf %117, %119 : vector<1x8xf32>
      %121 = arith.subf %117, %120 : vector<1x8xf32>
      %122 = math.exp %121 : vector<1x8xf32>
      %123 = vector.broadcast %120 : vector<1x8xf32> to vector<8x8xf32>
      %124 = arith.subf %115, %123 : vector<8x8xf32>
      %125 = math.exp %124 : vector<8x8xf32>
      %c2_79 = arith.constant 2 : index
      %c0_80 = arith.constant 0 : index
      %c0_81 = arith.constant 0 : index
      %126 = vector.load %arg11[%c2_79, %c0_80, %c0_81] : memref<4x1x8xf32, #tpu.memory_space<vmem>>, vector<1x1x8xf32>
      %127 = vector.shape_cast %126 : vector<1x1x8xf32> to vector<1x8xf32>
      %128 = arith.mulf %122, %127 : vector<1x8xf32>
      %cst_82 = arith.constant dense<0.000000e+00> : vector<8xf32>
      %129 = vector.multi_reduction <add>, %125, %cst_82 [0] : vector<8x8xf32> to vector<8xf32>
      %130 = vector.shape_cast %129 : vector<8xf32> to vector<1x8xf32>
      %131 = arith.addf %128, %130 : vector<1x8xf32>
      %c2_83 = arith.constant 2 : index
      %c0_84 = arith.constant 0 : index
      %c0_85 = arith.constant 0 : index
      %132 = vector.load %arg11[%c2_83, %c0_84, %c0_85] : memref<4x1x8xf32, #tpu.memory_space<vmem>>, vector<1x1x8xf32>
      %133 = vector.shape_cast %132 : vector<1x1x8xf32> to vector<1x8xf32>
      %134 = vector.shape_cast %131 : vector<1x8xf32> to vector<1x1x8xf32>
      tpu.vector_store %arg11[%c2_83, %c0_84, %c0_85], %134 {strides = array<i32>} : memref<4x1x8xf32, #tpu.memory_space<vmem>>, vector<1x1x8xf32>,
      %135 = arith.truncf %125 : vector<8x8xf32> to vector<8x8xbf16>
      %cst_86 = arith.constant dense<0.000000e+00> : vector<32x8xf32>
      %136 = tpu.matmul %114, %135, %cst_86 {dimension_numbers = #tpu.dot_dimension_numbers<[0], [0], [1], [1], [0, 1, 1, 1], [], []>} : vector<8x32xbf16>, vector<8x8xbf16>, vector<32x8xf32> -> vector<32x8xf32>
      %c2_87 = arith.constant 2 : index
      %c0_88 = arith.constant 0 : index
      %c0_89 = arith.constant 0 : index
      %137 = vector.load %arg12[%c2_87, %c0_88, %c0_89] : memref<4x32x8xf32, #tpu.memory_space<vmem>>, vector<1x32x8xf32>
      %138 = vector.shape_cast %137 : vector<1x32x8xf32> to vector<32x8xf32>
      %139 = vector.broadcast %122 : vector<1x8xf32> to vector<32x8xf32>
      %140 = arith.mulf %139, %138 : vector<32x8xf32>
      %141 = arith.addf %140, %136 : vector<32x8xf32>
      %c2_90 = arith.constant 2 : index
      %c0_91 = arith.constant 0 : index
      %c0_92 = arith.constant 0 : index
      %142 = vector.load %arg12[%c2_90, %c0_91, %c0_92] : memref<4x32x8xf32, #tpu.memory_space<vmem>>, vector<1x32x8xf32>
      %143 = vector.shape_cast %142 : vector<1x32x8xf32> to vector<32x8xf32>
      %144 = vector.shape_cast %141 : vector<32x8xf32> to vector<1x32x8xf32>
      tpu.vector_store %arg12[%c2_90, %c0_91, %c0_92], %144 {strides = array<i32>} : memref<4x32x8xf32, #tpu.memory_space<vmem>>, vector<1x32x8xf32>,
      %c2_93 = arith.constant 2 : index
      %c0_94 = arith.constant 0 : index
      %c0_95 = arith.constant 0 : index
      %145 = vector.load %arg10[%c2_93, %c0_94, %c0_95] : memref<4x1x8xf32, #tpu.memory_space<vmem>>, vector<1x1x8xf32>
      %146 = vector.shape_cast %145 : vector<1x1x8xf32> to vector<1x8xf32>
      %147 = vector.shape_cast %120 : vector<1x8xf32> to vector<1x1x8xf32>
      tpu.vector_store %arg10[%c2_93, %c0_94, %c0_95], %147 {strides = array<i32>} : memref<4x1x8xf32, #tpu.memory_space<vmem>>, vector<1x1x8xf32>,
      %c0_96 = arith.constant 0 : index
      %c0_97 = arith.constant 0 : index
      %c96 = arith.constant 96 : index
      %148 = vector.load %arg4[%c0_96, %c0_97, %c96] : memref<1x8x128xf32, #tpu.memory_space<vmem>>, vector<1x8x32xf32>
      %149 = vector.shape_cast %148 : vector<1x8x32xf32> to vector<8x32xf32>
      %cst_98 = arith.constant 0.176776692 : f32
      %150 = vector.broadcast %cst_98 : f32 to vector<8x32xf32>
      %151 = arith.mulf %149, %150 : vector<8x32xf32>
      %152 = arith.truncf %151 : vector<8x32xf32> to vector<8x32xbf16>
      %c0_99 = arith.constant 0 : index
      %c0_100 = arith.constant 0 : index
      %c96_101 = arith.constant 96 : index
      %153 = vector.load %arg5[%c0_99, %c0_100, %c96_101] : memref<1x8x128xf32, #tpu.memory_space<vmem>>, vector<1x8x32xf32>
      %154 = vector.shape_cast %153 : vector<1x8x32xf32> to vector<8x32xf32>
      %155 = arith.truncf %154 : vector<8x32xf32> to vector<8x32xbf16>
      %c0_102 = arith.constant 0 : index
      %c0_103 = arith.constant 0 : index
      %c96_104 = arith.constant 96 : index
      %156 = vector.load %arg6[%c0_102, %c0_103, %c96_104] : memref<1x8x128xf32, #tpu.memory_space<vmem>>, vector<1x8x32xf32>
      %157 = vector.shape_cast %156 : vector<1x8x32xf32> to vector<8x32xf32>
      %158 = arith.truncf %157 : vector<8x32xf32> to vector<8x32xbf16>
      %cst_105 = arith.constant dense<0.000000e+00> : vector<8x8xf32>
      %159 = tpu.matmul %155, %152, %cst_105 {dimension_numbers = #tpu.dot_dimension_numbers<[1], [1], [0], [0], [0, 0, 1, 0], [], []>} : vector<8x32xbf16>, vector<8x32xbf16>, vector<8x8xf32> -> vector<8x8xf32>
      %c3 = arith.constant 3 : index
      %c0_106 = arith.constant 0 : index
      %c0_107 = arith.constant 0 : index
      %160 = vector.load %arg10[%c3, %c0_106, %c0_107] : memref<4x1x8xf32, #tpu.memory_space<vmem>>, vector<1x1x8xf32>
      %161 = vector.shape_cast %160 : vector<1x1x8xf32> to vector<1x8xf32>
      %cst_108 = arith.constant dense<0xFF800000> : vector<8xf32>
      %162 = vector.multi_reduction <maximumf>, %159, %cst_108 [0] : vector<8x8xf32> to vector<8xf32>
      %163 = vector.shape_cast %162 : vector<8xf32> to vector<1x8xf32>
      %164 = arith.maximumf %161, %163 : vector<1x8xf32>
      %165 = arith.subf %161, %164 : vector<1x8xf32>
      %166 = math.exp %165 : vector<1x8xf32>
      %167 = vector.broadcast %164 : vector<1x8xf32> to vector<8x8xf32>
      %168 = arith.subf %159, %167 : vector<8x8xf32>
      %169 = math.exp %168 : vector<8x8xf32>
      %c3_109 = arith.constant 3 : index
      %c0_110 = arith.constant 0 : index
      %c0_111 = arith.constant 0 : index
      %170 = vector.load %arg11[%c3_109, %c0_110, %c0_111] : memref<4x1x8xf32, #tpu.memory_space<vmem>>, vector<1x1x8xf32>
      %171 = vector.shape_cast %170 : vector<1x1x8xf32> to vector<1x8xf32>
      %172 = arith.mulf %166, %171 : vector<1x8xf32>
      %cst_112 = arith.constant dense<0.000000e+00> : vector<8xf32>
      %173 = vector.multi_reduction <add>, %169, %cst_112 [0] : vector<8x8xf32> to vector<8xf32>
      %174 = vector.shape_cast %173 : vector<8xf32> to vector<1x8xf32>
      %175 = arith.addf %172, %174 : vector<1x8xf32>
      %c3_113 = arith.constant 3 : index
      %c0_114 = arith.constant 0 : index
      %c0_115 = arith.constant 0 : index
      %176 = vector.load %arg11[%c3_113, %c0_114, %c0_115] : memref<4x1x8xf32, #tpu.memory_space<vmem>>, vector<1x1x8xf32>
      %177 = vector.shape_cast %176 : vector<1x1x8xf32> to vector<1x8xf32>
      %178 = vector.shape_cast %175 : vector<1x8xf32> to vector<1x1x8xf32>
      tpu.vector_store %arg11[%c3_113, %c0_114, %c0_115], %178 {strides = array<i32>} : memref<4x1x8xf32, #tpu.memory_space<vmem>>, vector<1x1x8xf32>,
      %179 = arith.truncf %169 : vector<8x8xf32> to vector<8x8xbf16>
      %cst_116 = arith.constant dense<0.000000e+00> : vector<32x8xf32>
      %180 = tpu.matmul %158, %179, %cst_116 {dimension_numbers = #tpu.dot_dimension_numbers<[0], [0], [1], [1], [0, 1, 1, 1], [], []>} : vector<8x32xbf16>, vector<8x8xbf16>, vector<32x8xf32> -> vector<32x8xf32>
      %c3_117 = arith.constant 3 : index
      %c0_118 = arith.constant 0 : index
      %c0_119 = arith.constant 0 : index
      %181 = vector.load %arg12[%c3_117, %c0_118, %c0_119] : memref<4x32x8xf32, #tpu.memory_space<vmem>>, vector<1x32x8xf32>
      %182 = vector.shape_cast %181 : vector<1x32x8xf32> to vector<32x8xf32>
      %183 = vector.broadcast %166 : vector<1x8xf32> to vector<32x8xf32>
      %184 = arith.mulf %183, %182 : vector<32x8xf32>
      %185 = arith.addf %184, %180 : vector<32x8xf32>
      %c3_120 = arith.constant 3 : index
      %c0_121 = arith.constant 0 : index
      %c0_122 = arith.constant 0 : index
      %186 = vector.load %arg12[%c3_120, %c0_121, %c0_122] : memref<4x32x8xf32, #tpu.memory_space<vmem>>, vector<1x32x8xf32>
      %187 = vector.shape_cast %186 : vector<1x32x8xf32> to vector<32x8xf32>
      %188 = vector.shape_cast %185 : vector<32x8xf32> to vector<1x32x8xf32>
      tpu.vector_store %arg12[%c3_120, %c0_121, %c0_122], %188 {strides = array<i32>} : memref<4x32x8xf32, #tpu.memory_space<vmem>>, vector<1x32x8xf32>,
      %c3_123 = arith.constant 3 : index
      %c0_124 = arith.constant 0 : index
      %c0_125 = arith.constant 0 : index
      %189 = vector.load %arg10[%c3_123, %c0_124, %c0_125] : memref<4x1x8xf32, #tpu.memory_space<vmem>>, vector<1x1x8xf32>
      %190 = vector.shape_cast %189 : vector<1x1x8xf32> to vector<1x8xf32>
      %191 = vector.shape_cast %164 : vector<1x8xf32> to vector<1x1x8xf32>
      tpu.vector_store %arg10[%c3_123, %c0_124, %c0_125], %191 {strides = array<i32>} : memref<4x1x8xf32, #tpu.memory_space<vmem>>, vector<1x1x8xf32>,
    } else {
    }
    %c1_i32_2 = arith.constant 1 : i32
    %10 = arith.cmpi eq, %6, %c1_i32_2 : i32
    %11 = arith.extui %10 : i1 to i32
    %c0_i32_3 = arith.constant 0 : i32
    %12 = arith.cmpi ne, %11, %c0_i32_3 : i32
    scf.if %12 {
      %c0 = arith.constant 0 : index
      %c0_6 = arith.constant 0 : index
      %c0_7 = arith.constant 0 : index
      %16 = vector.load %arg8[%c0, %c0_6, %c0_7] : memref<1x8x1xf32, #tpu.memory_space<vmem>>, vector<1x8x1xf32>
      %17 = vector.shape_cast %16 : vector<1x8x1xf32> to vector<8x1xf32>
      %c0_8 = arith.constant 0 : index
      %c0_9 = arith.constant 0 : index
      %c0_10 = arith.constant 0 : index
      %18 = vector.load %arg4[%c0_8, %c0_9, %c0_10] : memref<1x8x128xf32, #tpu.memory_space<vmem>>, vector<1x8x32xf32>
      %19 = vector.shape_cast %18 : vector<1x8x32xf32> to vector<8x32xf32>
      %cst = arith.constant 0.176776692 : f32
      %20 = vector.broadcast %cst : f32 to vector<8x32xf32>
      %21 = arith.mulf %19, %20 : vector<8x32xf32>
      %22 = arith.truncf %21 : vector<8x32xf32> to vector<8x32xbf16>
      %c0_11 = arith.constant 0 : index
      %c0_12 = arith.constant 0 : index
      %c0_13 = arith.constant 0 : index
      %23 = vector.load %arg5[%c0_11, %c0_12, %c0_13] : memref<1x8x128xf32, #tpu.memory_space<vmem>>, vector<1x8x32xf32>
      %24 = vector.shape_cast %23 : vector<1x8x32xf32> to vector<8x32xf32>
      %25 = arith.truncf %24 : vector<8x32xf32> to vector<8x32xbf16>
      %c0_14 = arith.constant 0 : index
      %c0_15 = arith.constant 0 : index
      %c0_16 = arith.constant 0 : index
      %26 = vector.load %arg6[%c0_14, %c0_15, %c0_16] : memref<1x8x128xf32, #tpu.memory_space<vmem>>, vector<1x8x32xf32>
      %27 = vector.shape_cast %26 : vector<1x8x32xf32> to vector<8x32xf32>
      %28 = arith.truncf %27 : vector<8x32xf32> to vector<8x32xbf16>
      %cst_17 = arith.constant dense<0.000000e+00> : vector<8x8xf32>
      %29 = tpu.matmul %25, %22, %cst_17 {dimension_numbers = #tpu.dot_dimension_numbers<[1], [1], [0], [0], [0, 0, 1, 0], [], []>} : vector<8x32xbf16>, vector<8x32xbf16>, vector<8x8xf32> -> vector<8x8xf32>
      %30 = vector.broadcast %17 : vector<8x1xf32> to vector<8x8xf32>
      %31 = arith.addf %29, %30 : vector<8x8xf32>
      %c0_18 = arith.constant 0 : index
      %c0_19 = arith.constant 0 : index
      %c0_20 = arith.constant 0 : index
      %32 = vector.load %arg10[%c0_18, %c0_19, %c0_20] : memref<4x1x8xf32, #tpu.memory_space<vmem>>, vector<1x1x8xf32>
      %33 = vector.shape_cast %32 : vector<1x1x8xf32> to vector<1x8xf32>
      %cst_21 = arith.constant dense<0xFF800000> : vector<8xf32>
      %34 = vector.multi_reduction <maximumf>, %31, %cst_21 [0] : vector<8x8xf32> to vector<8xf32>
      %35 = vector.shape_cast %34 : vector<8xf32> to vector<1x8xf32>
      %36 = arith.maximumf %33, %35 : vector<1x8xf32>
      %37 = arith.subf %33, %36 : vector<1x8xf32>
      %38 = math.exp %37 : vector<1x8xf32>
      %39 = vector.broadcast %36 : vector<1x8xf32> to vector<8x8xf32>
      %40 = arith.subf %31, %39 : vector<8x8xf32>
      %41 = math.exp %40 : vector<8x8xf32>
      %c0_22 = arith.constant 0 : index
      %c0_23 = arith.constant 0 : index
      %c0_24 = arith.constant 0 : index
      %42 = vector.load %arg11[%c0_22, %c0_23, %c0_24] : memref<4x1x8xf32, #tpu.memory_space<vmem>>, vector<1x1x8xf32>
      %43 = vector.shape_cast %42 : vector<1x1x8xf32> to vector<1x8xf32>
      %44 = arith.mulf %38, %43 : vector<1x8xf32>
      %cst_25 = arith.constant dense<0.000000e+00> : vector<8xf32>
      %45 = vector.multi_reduction <add>, %41, %cst_25 [0] : vector<8x8xf32> to vector<8xf32>
      %46 = vector.shape_cast %45 : vector<8xf32> to vector<1x8xf32>
      %47 = arith.addf %44, %46 : vector<1x8xf32>
      %c0_26 = arith.constant 0 : index
      %c0_27 = arith.constant 0 : index
      %c0_28 = arith.constant 0 : index
      %48 = vector.load %arg11[%c0_26, %c0_27, %c0_28] : memref<4x1x8xf32, #tpu.memory_space<vmem>>, vector<1x1x8xf32>
      %49 = vector.shape_cast %48 : vector<1x1x8xf32> to vector<1x8xf32>
      %50 = vector.shape_cast %47 : vector<1x8xf32> to vector<1x1x8xf32>
      tpu.vector_store %arg11[%c0_26, %c0_27, %c0_28], %50 {strides = array<i32>} : memref<4x1x8xf32, #tpu.memory_space<vmem>>, vector<1x1x8xf32>,
      %51 = arith.truncf %41 : vector<8x8xf32> to vector<8x8xbf16>
      %cst_29 = arith.constant dense<0.000000e+00> : vector<32x8xf32>
      %52 = tpu.matmul %28, %51, %cst_29 {dimension_numbers = #tpu.dot_dimension_numbers<[0], [0], [1], [1], [0, 1, 1, 1], [], []>} : vector<8x32xbf16>, vector<8x8xbf16>, vector<32x8xf32> -> vector<32x8xf32>
      %c0_30 = arith.constant 0 : index
      %c0_31 = arith.constant 0 : index
      %c0_32 = arith.constant 0 : index
      %53 = vector.load %arg12[%c0_30, %c0_31, %c0_32] : memref<4x32x8xf32, #tpu.memory_space<vmem>>, vector<1x32x8xf32>
      %54 = vector.shape_cast %53 : vector<1x32x8xf32> to vector<32x8xf32>
      %55 = vector.broadcast %38 : vector<1x8xf32> to vector<32x8xf32>
      %56 = arith.mulf %55, %54 : vector<32x8xf32>
      %57 = arith.addf %56, %52 : vector<32x8xf32>
      %c0_33 = arith.constant 0 : index
      %c0_34 = arith.constant 0 : index
      %c0_35 = arith.constant 0 : index
      %58 = vector.load %arg12[%c0_33, %c0_34, %c0_35] : memref<4x32x8xf32, #tpu.memory_space<vmem>>, vector<1x32x8xf32>
      %59 = vector.shape_cast %58 : vector<1x32x8xf32> to vector<32x8xf32>
      %60 = vector.shape_cast %57 : vector<32x8xf32> to vector<1x32x8xf32>
      tpu.vector_store %arg12[%c0_33, %c0_34, %c0_35], %60 {strides = array<i32>} : memref<4x32x8xf32, #tpu.memory_space<vmem>>, vector<1x32x8xf32>,
      %c0_36 = arith.constant 0 : index
      %c0_37 = arith.constant 0 : index
      %c0_38 = arith.constant 0 : index
      %61 = vector.load %arg10[%c0_36, %c0_37, %c0_38] : memref<4x1x8xf32, #tpu.memory_space<vmem>>, vector<1x1x8xf32>
      %62 = vector.shape_cast %61 : vector<1x1x8xf32> to vector<1x8xf32>
      %63 = vector.shape_cast %36 : vector<1x8xf32> to vector<1x1x8xf32>
      tpu.vector_store %arg10[%c0_36, %c0_37, %c0_38], %63 {strides = array<i32>} : memref<4x1x8xf32, #tpu.memory_space<vmem>>, vector<1x1x8xf32>,
      %c0_39 = arith.constant 0 : index
      %c0_40 = arith.constant 0 : index
      %c32 = arith.constant 32 : index
      %64 = vector.load %arg4[%c0_39, %c0_40, %c32] : memref<1x8x128xf32, #tpu.memory_space<vmem>>, vector<1x8x32xf32>
      %65 = vector.shape_cast %64 : vector<1x8x32xf32> to vector<8x32xf32>
      %cst_41 = arith.constant 0.176776692 : f32
      %66 = vector.broadcast %cst_41 : f32 to vector<8x32xf32>
      %67 = arith.mulf %65, %66 : vector<8x32xf32>
      %68 = arith.truncf %67 : vector<8x32xf32> to vector<8x32xbf16>
      %c0_42 = arith.constant 0 : index
      %c0_43 = arith.constant 0 : index
      %c32_44 = arith.constant 32 : index
      %69 = vector.load %arg5[%c0_42, %c0_43, %c32_44] : memref<1x8x128xf32, #tpu.memory_space<vmem>>, vector<1x8x32xf32>
      %70 = vector.shape_cast %69 : vector<1x8x32xf32> to vector<8x32xf32>
      %71 = arith.truncf %70 : vector<8x32xf32> to vector<8x32xbf16>
      %c0_45 = arith.constant 0 : index
      %c0_46 = arith.constant 0 : index
      %c32_47 = arith.constant 32 : index
      %72 = vector.load %arg6[%c0_45, %c0_46, %c32_47] : memref<1x8x128xf32, #tpu.memory_space<vmem>>, vector<1x8x32xf32>
      %73 = vector.shape_cast %72 : vector<1x8x32xf32> to vector<8x32xf32>
      %74 = arith.truncf %73 : vector<8x32xf32> to vector<8x32xbf16>
      %cst_48 = arith.constant dense<0.000000e+00> : vector<8x8xf32>
      %75 = tpu.matmul %71, %68, %cst_48 {dimension_numbers = #tpu.dot_dimension_numbers<[1], [1], [0], [0], [0, 0, 1, 0], [], []>} : vector<8x32xbf16>, vector<8x32xbf16>, vector<8x8xf32> -> vector<8x8xf32>
      %76 = vector.broadcast %17 : vector<8x1xf32> to vector<8x8xf32>
      %77 = arith.addf %75, %76 : vector<8x8xf32>
      %c1 = arith.constant 1 : index
      %c0_49 = arith.constant 0 : index
      %c0_50 = arith.constant 0 : index
      %78 = vector.load %arg10[%c1, %c0_49, %c0_50] : memref<4x1x8xf32, #tpu.memory_space<vmem>>, vector<1x1x8xf32>
      %79 = vector.shape_cast %78 : vector<1x1x8xf32> to vector<1x8xf32>
      %cst_51 = arith.constant dense<0xFF800000> : vector<8xf32>
      %80 = vector.multi_reduction <maximumf>, %77, %cst_51 [0] : vector<8x8xf32> to vector<8xf32>
      %81 = vector.shape_cast %80 : vector<8xf32> to vector<1x8xf32>
      %82 = arith.maximumf %79, %81 : vector<1x8xf32>
      %83 = arith.subf %79, %82 : vector<1x8xf32>
      %84 = math.exp %83 : vector<1x8xf32>
      %85 = vector.broadcast %82 : vector<1x8xf32> to vector<8x8xf32>
      %86 = arith.subf %77, %85 : vector<8x8xf32>
      %87 = math.exp %86 : vector<8x8xf32>
      %c1_52 = arith.constant 1 : index
      %c0_53 = arith.constant 0 : index
      %c0_54 = arith.constant 0 : index
      %88 = vector.load %arg11[%c1_52, %c0_53, %c0_54] : memref<4x1x8xf32, #tpu.memory_space<vmem>>, vector<1x1x8xf32>
      %89 = vector.shape_cast %88 : vector<1x1x8xf32> to vector<1x8xf32>
      %90 = arith.mulf %84, %89 : vector<1x8xf32>
      %cst_55 = arith.constant dense<0.000000e+00> : vector<8xf32>
      %91 = vector.multi_reduction <add>, %87, %cst_55 [0] : vector<8x8xf32> to vector<8xf32>
      %92 = vector.shape_cast %91 : vector<8xf32> to vector<1x8xf32>
      %93 = arith.addf %90, %92 : vector<1x8xf32>
      %c1_56 = arith.constant 1 : index
      %c0_57 = arith.constant 0 : index
      %c0_58 = arith.constant 0 : index
      %94 = vector.load %arg11[%c1_56, %c0_57, %c0_58] : memref<4x1x8xf32, #tpu.memory_space<vmem>>, vector<1x1x8xf32>
      %95 = vector.shape_cast %94 : vector<1x1x8xf32> to vector<1x8xf32>
      %96 = vector.shape_cast %93 : vector<1x8xf32> to vector<1x1x8xf32>
      tpu.vector_store %arg11[%c1_56, %c0_57, %c0_58], %96 {strides = array<i32>} : memref<4x1x8xf32, #tpu.memory_space<vmem>>, vector<1x1x8xf32>,
      %97 = arith.truncf %87 : vector<8x8xf32> to vector<8x8xbf16>
      %cst_59 = arith.constant dense<0.000000e+00> : vector<32x8xf32>
      %98 = tpu.matmul %74, %97, %cst_59 {dimension_numbers = #tpu.dot_dimension_numbers<[0], [0], [1], [1], [0, 1, 1, 1], [], []>} : vector<8x32xbf16>, vector<8x8xbf16>, vector<32x8xf32> -> vector<32x8xf32>
      %c1_60 = arith.constant 1 : index
      %c0_61 = arith.constant 0 : index
      %c0_62 = arith.constant 0 : index
      %99 = vector.load %arg12[%c1_60, %c0_61, %c0_62] : memref<4x32x8xf32, #tpu.memory_space<vmem>>, vector<1x32x8xf32>
      %100 = vector.shape_cast %99 : vector<1x32x8xf32> to vector<32x8xf32>
      %101 = vector.broadcast %84 : vector<1x8xf32> to vector<32x8xf32>
      %102 = arith.mulf %101, %100 : vector<32x8xf32>
      %103 = arith.addf %102, %98 : vector<32x8xf32>
      %c1_63 = arith.constant 1 : index
      %c0_64 = arith.constant 0 : index
      %c0_65 = arith.constant 0 : index
      %104 = vector.load %arg12[%c1_63, %c0_64, %c0_65] : memref<4x32x8xf32, #tpu.memory_space<vmem>>, vector<1x32x8xf32>
      %105 = vector.shape_cast %104 : vector<1x32x8xf32> to vector<32x8xf32>
      %106 = vector.shape_cast %103 : vector<32x8xf32> to vector<1x32x8xf32>
      tpu.vector_store %arg12[%c1_63, %c0_64, %c0_65], %106 {strides = array<i32>} : memref<4x32x8xf32, #tpu.memory_space<vmem>>, vector<1x32x8xf32>,
      %c1_66 = arith.constant 1 : index
      %c0_67 = arith.constant 0 : index
      %c0_68 = arith.constant 0 : index
      %107 = vector.load %arg10[%c1_66, %c0_67, %c0_68] : memref<4x1x8xf32, #tpu.memory_space<vmem>>, vector<1x1x8xf32>
      %108 = vector.shape_cast %107 : vector<1x1x8xf32> to vector<1x8xf32>
      %109 = vector.shape_cast %82 : vector<1x8xf32> to vector<1x1x8xf32>
      tpu.vector_store %arg10[%c1_66, %c0_67, %c0_68], %109 {strides = array<i32>} : memref<4x1x8xf32, #tpu.memory_space<vmem>>, vector<1x1x8xf32>,
      %c0_69 = arith.constant 0 : index
      %c0_70 = arith.constant 0 : index
      %c64 = arith.constant 64 : index
      %110 = vector.load %arg4[%c0_69, %c0_70, %c64] : memref<1x8x128xf32, #tpu.memory_space<vmem>>, vector<1x8x32xf32>
      %111 = vector.shape_cast %110 : vector<1x8x32xf32> to vector<8x32xf32>
      %cst_71 = arith.constant 0.176776692 : f32
      %112 = vector.broadcast %cst_71 : f32 to vector<8x32xf32>
      %113 = arith.mulf %111, %112 : vector<8x32xf32>
      %114 = arith.truncf %113 : vector<8x32xf32> to vector<8x32xbf16>
      %c0_72 = arith.constant 0 : index
      %c0_73 = arith.constant 0 : index
      %c64_74 = arith.constant 64 : index
      %115 = vector.load %arg5[%c0_72, %c0_73, %c64_74] : memref<1x8x128xf32, #tpu.memory_space<vmem>>, vector<1x8x32xf32>
      %116 = vector.shape_cast %115 : vector<1x8x32xf32> to vector<8x32xf32>
      %117 = arith.truncf %116 : vector<8x32xf32> to vector<8x32xbf16>
      %c0_75 = arith.constant 0 : index
      %c0_76 = arith.constant 0 : index
      %c64_77 = arith.constant 64 : index
      %118 = vector.load %arg6[%c0_75, %c0_76, %c64_77] : memref<1x8x128xf32, #tpu.memory_space<vmem>>, vector<1x8x32xf32>
      %119 = vector.shape_cast %118 : vector<1x8x32xf32> to vector<8x32xf32>
      %120 = arith.truncf %119 : vector<8x32xf32> to vector<8x32xbf16>
      %cst_78 = arith.constant dense<0.000000e+00> : vector<8x8xf32>
      %121 = tpu.matmul %117, %114, %cst_78 {dimension_numbers = #tpu.dot_dimension_numbers<[1], [1], [0], [0], [0, 0, 1, 0], [], []>} : vector<8x32xbf16>, vector<8x32xbf16>, vector<8x8xf32> -> vector<8x8xf32>
      %122 = vector.broadcast %17 : vector<8x1xf32> to vector<8x8xf32>
      %123 = arith.addf %121, %122 : vector<8x8xf32>
      %c2 = arith.constant 2 : index
      %c0_79 = arith.constant 0 : index
      %c0_80 = arith.constant 0 : index
      %124 = vector.load %arg10[%c2, %c0_79, %c0_80] : memref<4x1x8xf32, #tpu.memory_space<vmem>>, vector<1x1x8xf32>
      %125 = vector.shape_cast %124 : vector<1x1x8xf32> to vector<1x8xf32>
      %cst_81 = arith.constant dense<0xFF800000> : vector<8xf32>
      %126 = vector.multi_reduction <maximumf>, %123, %cst_81 [0] : vector<8x8xf32> to vector<8xf32>
      %127 = vector.shape_cast %126 : vector<8xf32> to vector<1x8xf32>
      %128 = arith.maximumf %125, %127 : vector<1x8xf32>
      %129 = arith.subf %125, %128 : vector<1x8xf32>
      %130 = math.exp %129 : vector<1x8xf32>
      %131 = vector.broadcast %128 : vector<1x8xf32> to vector<8x8xf32>
      %132 = arith.subf %123, %131 : vector<8x8xf32>
      %133 = math.exp %132 : vector<8x8xf32>
      %c2_82 = arith.constant 2 : index
      %c0_83 = arith.constant 0 : index
      %c0_84 = arith.constant 0 : index
      %134 = vector.load %arg11[%c2_82, %c0_83, %c0_84] : memref<4x1x8xf32, #tpu.memory_space<vmem>>, vector<1x1x8xf32>
      %135 = vector.shape_cast %134 : vector<1x1x8xf32> to vector<1x8xf32>
      %136 = arith.mulf %130, %135 : vector<1x8xf32>
      %cst_85 = arith.constant dense<0.000000e+00> : vector<8xf32>
      %137 = vector.multi_reduction <add>, %133, %cst_85 [0] : vector<8x8xf32> to vector<8xf32>
      %138 = vector.shape_cast %137 : vector<8xf32> to vector<1x8xf32>
      %139 = arith.addf %136, %138 : vector<1x8xf32>
      %c2_86 = arith.constant 2 : index
      %c0_87 = arith.constant 0 : index
      %c0_88 = arith.constant 0 : index
      %140 = vector.load %arg11[%c2_86, %c0_87, %c0_88] : memref<4x1x8xf32, #tpu.memory_space<vmem>>, vector<1x1x8xf32>
      %141 = vector.shape_cast %140 : vector<1x1x8xf32> to vector<1x8xf32>
      %142 = vector.shape_cast %139 : vector<1x8xf32> to vector<1x1x8xf32>
      tpu.vector_store %arg11[%c2_86, %c0_87, %c0_88], %142 {strides = array<i32>} : memref<4x1x8xf32, #tpu.memory_space<vmem>>, vector<1x1x8xf32>,
      %143 = arith.truncf %133 : vector<8x8xf32> to vector<8x8xbf16>
      %cst_89 = arith.constant dense<0.000000e+00> : vector<32x8xf32>
      %144 = tpu.matmul %120, %143, %cst_89 {dimension_numbers = #tpu.dot_dimension_numbers<[0], [0], [1], [1], [0, 1, 1, 1], [], []>} : vector<8x32xbf16>, vector<8x8xbf16>, vector<32x8xf32> -> vector<32x8xf32>
      %c2_90 = arith.constant 2 : index
      %c0_91 = arith.constant 0 : index
      %c0_92 = arith.constant 0 : index
      %145 = vector.load %arg12[%c2_90, %c0_91, %c0_92] : memref<4x32x8xf32, #tpu.memory_space<vmem>>, vector<1x32x8xf32>
      %146 = vector.shape_cast %145 : vector<1x32x8xf32> to vector<32x8xf32>
      %147 = vector.broadcast %130 : vector<1x8xf32> to vector<32x8xf32>
      %148 = arith.mulf %147, %146 : vector<32x8xf32>
      %149 = arith.addf %148, %144 : vector<32x8xf32>
      %c2_93 = arith.constant 2 : index
      %c0_94 = arith.constant 0 : index
      %c0_95 = arith.constant 0 : index
      %150 = vector.load %arg12[%c2_93, %c0_94, %c0_95] : memref<4x32x8xf32, #tpu.memory_space<vmem>>, vector<1x32x8xf32>
      %151 = vector.shape_cast %150 : vector<1x32x8xf32> to vector<32x8xf32>
      %152 = vector.shape_cast %149 : vector<32x8xf32> to vector<1x32x8xf32>
      tpu.vector_store %arg12[%c2_93, %c0_94, %c0_95], %152 {strides = array<i32>} : memref<4x32x8xf32, #tpu.memory_space<vmem>>, vector<1x32x8xf32>,
      %c2_96 = arith.constant 2 : index
      %c0_97 = arith.constant 0 : index
      %c0_98 = arith.constant 0 : index
      %153 = vector.load %arg10[%c2_96, %c0_97, %c0_98] : memref<4x1x8xf32, #tpu.memory_space<vmem>>, vector<1x1x8xf32>
      %154 = vector.shape_cast %153 : vector<1x1x8xf32> to vector<1x8xf32>
      %155 = vector.shape_cast %128 : vector<1x8xf32> to vector<1x1x8xf32>
      tpu.vector_store %arg10[%c2_96, %c0_97, %c0_98], %155 {strides = array<i32>} : memref<4x1x8xf32, #tpu.memory_space<vmem>>, vector<1x1x8xf32>,
      %c0_99 = arith.constant 0 : index
      %c0_100 = arith.constant 0 : index
      %c96 = arith.constant 96 : index
      %156 = vector.load %arg4[%c0_99, %c0_100, %c96] : memref<1x8x128xf32, #tpu.memory_space<vmem>>, vector<1x8x32xf32>
      %157 = vector.shape_cast %156 : vector<1x8x32xf32> to vector<8x32xf32>
      %cst_101 = arith.constant 0.176776692 : f32
      %158 = vector.broadcast %cst_101 : f32 to vector<8x32xf32>
      %159 = arith.mulf %157, %158 : vector<8x32xf32>
      %160 = arith.truncf %159 : vector<8x32xf32> to vector<8x32xbf16>
      %c0_102 = arith.constant 0 : index
      %c0_103 = arith.constant 0 : index
      %c96_104 = arith.constant 96 : index
      %161 = vector.load %arg5[%c0_102, %c0_103, %c96_104] : memref<1x8x128xf32, #tpu.memory_space<vmem>>, vector<1x8x32xf32>
      %162 = vector.shape_cast %161 : vector<1x8x32xf32> to vector<8x32xf32>
      %163 = arith.truncf %162 : vector<8x32xf32> to vector<8x32xbf16>
      %c0_105 = arith.constant 0 : index
      %c0_106 = arith.constant 0 : index
      %c96_107 = arith.constant 96 : index
      %164 = vector.load %arg6[%c0_105, %c0_106, %c96_107] : memref<1x8x128xf32, #tpu.memory_space<vmem>>, vector<1x8x32xf32>
      %165 = vector.shape_cast %164 : vector<1x8x32xf32> to vector<8x32xf32>
      %166 = arith.truncf %165 : vector<8x32xf32> to vector<8x32xbf16>
      %cst_108 = arith.constant dense<0.000000e+00> : vector<8x8xf32>
      %167 = tpu.matmul %163, %160, %cst_108 {dimension_numbers = #tpu.dot_dimension_numbers<[1], [1], [0], [0], [0, 0, 1, 0], [], []>} : vector<8x32xbf16>, vector<8x32xbf16>, vector<8x8xf32> -> vector<8x8xf32>
      %168 = vector.broadcast %17 : vector<8x1xf32> to vector<8x8xf32>
      %169 = arith.addf %167, %168 : vector<8x8xf32>
      %c3 = arith.constant 3 : index
      %c0_109 = arith.constant 0 : index
      %c0_110 = arith.constant 0 : index
      %170 = vector.load %arg10[%c3, %c0_109, %c0_110] : memref<4x1x8xf32, #tpu.memory_space<vmem>>, vector<1x1x8xf32>
      %171 = vector.shape_cast %170 : vector<1x1x8xf32> to vector<1x8xf32>
      %cst_111 = arith.constant dense<0xFF800000> : vector<8xf32>
      %172 = vector.multi_reduction <maximumf>, %169, %cst_111 [0] : vector<8x8xf32> to vector<8xf32>
      %173 = vector.shape_cast %172 : vector<8xf32> to vector<1x8xf32>
      %174 = arith.maximumf %171, %173 : vector<1x8xf32>
      %175 = arith.subf %171, %174 : vector<1x8xf32>
      %176 = math.exp %175 : vector<1x8xf32>
      %177 = vector.broadcast %174 : vector<1x8xf32> to vector<8x8xf32>
      %178 = arith.subf %169, %177 : vector<8x8xf32>
      %179 = math.exp %178 : vector<8x8xf32>
      %c3_112 = arith.constant 3 : index
      %c0_113 = arith.constant 0 : index
      %c0_114 = arith.constant 0 : index
      %180 = vector.load %arg11[%c3_112, %c0_113, %c0_114] : memref<4x1x8xf32, #tpu.memory_space<vmem>>, vector<1x1x8xf32>
      %181 = vector.shape_cast %180 : vector<1x1x8xf32> to vector<1x8xf32>
      %182 = arith.mulf %176, %181 : vector<1x8xf32>
      %cst_115 = arith.constant dense<0.000000e+00> : vector<8xf32>
      %183 = vector.multi_reduction <add>, %179, %cst_115 [0] : vector<8x8xf32> to vector<8xf32>
      %184 = vector.shape_cast %183 : vector<8xf32> to vector<1x8xf32>
      %185 = arith.addf %182, %184 : vector<1x8xf32>
      %c3_116 = arith.constant 3 : index
      %c0_117 = arith.constant 0 : index
      %c0_118 = arith.constant 0 : index
      %186 = vector.load %arg11[%c3_116, %c0_117, %c0_118] : memref<4x1x8xf32, #tpu.memory_space<vmem>>, vector<1x1x8xf32>
      %187 = vector.shape_cast %186 : vector<1x1x8xf32> to vector<1x8xf32>
      %188 = vector.shape_cast %185 : vector<1x8xf32> to vector<1x1x8xf32>
      tpu.vector_store %arg11[%c3_116, %c0_117, %c0_118], %188 {strides = array<i32>} : memref<4x1x8xf32, #tpu.memory_space<vmem>>, vector<1x1x8xf32>,
      %189 = arith.truncf %179 : vector<8x8xf32> to vector<8x8xbf16>
      %cst_119 = arith.constant dense<0.000000e+00> : vector<32x8xf32>
      %190 = tpu.matmul %166, %189, %cst_119 {dimension_numbers = #tpu.dot_dimension_numbers<[0], [0], [1], [1], [0, 1, 1, 1], [], []>} : vector<8x32xbf16>, vector<8x8xbf16>, vector<32x8xf32> -> vector<32x8xf32>
      %c3_120 = arith.constant 3 : index
      %c0_121 = arith.constant 0 : index
      %c0_122 = arith.constant 0 : index
      %191 = vector.load %arg12[%c3_120, %c0_121, %c0_122] : memref<4x32x8xf32, #tpu.memory_space<vmem>>, vector<1x32x8xf32>
      %192 = vector.shape_cast %191 : vector<1x32x8xf32> to vector<32x8xf32>
      %193 = vector.broadcast %176 : vector<1x8xf32> to vector<32x8xf32>
      %194 = arith.mulf %193, %192 : vector<32x8xf32>
      %195 = arith.addf %194, %190 : vector<32x8xf32>
      %c3_123 = arith.constant 3 : index
      %c0_124 = arith.constant 0 : index
      %c0_125 = arith.constant 0 : index
      %196 = vector.load %arg12[%c3_123, %c0_124, %c0_125] : memref<4x32x8xf32, #tpu.memory_space<vmem>>, vector<1x32x8xf32>
      %197 = vector.shape_cast %196 : vector<1x32x8xf32> to vector<32x8xf32>
      %198 = vector.shape_cast %195 : vector<32x8xf32> to vector<1x32x8xf32>
      tpu.vector_store %arg12[%c3_123, %c0_124, %c0_125], %198 {strides = array<i32>} : memref<4x32x8xf32, #tpu.memory_space<vmem>>, vector<1x32x8xf32>,
      %c3_126 = arith.constant 3 : index
      %c0_127 = arith.constant 0 : index
      %c0_128 = arith.constant 0 : index
      %199 = vector.load %arg10[%c3_126, %c0_127, %c0_128] : memref<4x1x8xf32, #tpu.memory_space<vmem>>, vector<1x1x8xf32>
      %200 = vector.shape_cast %199 : vector<1x1x8xf32> to vector<1x8xf32>
      %201 = vector.shape_cast %174 : vector<1x8xf32> to vector<1x1x8xf32>
      tpu.vector_store %arg10[%c3_126, %c0_127, %c0_128], %201 {strides = array<i32>} : memref<4x1x8xf32, #tpu.memory_space<vmem>>, vector<1x1x8xf32>,
    } else {
    }
    %c0_i32_4 = arith.constant 0 : i32
    %13 = arith.cmpi eq, %arg2, %c0_i32_4 : i32
    %14 = arith.extui %13 : i1 to i32
    %c0_i32_5 = arith.constant 0 : i32
    %15 = arith.cmpi ne, %14, %c0_i32_5 : i32
    scf.if %15 {
      %c0 = arith.constant 0 : index
      %c0_6 = arith.constant 0 : index
      %c0_7 = arith.constant 0 : index
      %16 = vector.load %arg11[%c0, %c0_6, %c0_7] : memref<4x1x8xf32, #tpu.memory_space<vmem>>, vector<4x1x8xf32>
      %cst = arith.constant 1.000000e-30 : f32
      %17 = vector.broadcast %cst : f32 to vector<4x1x8xf32>
      %18 = arith.maximumf %16, %17 : vector<4x1x8xf32>
      %cst_8 = arith.constant 1.000000e+00 : f32
      %19 = vector.broadcast %cst_8 : f32 to vector<4x1x8xf32>
      %20 = arith.divf %19, %18 : vector<4x1x8xf32>
      %c0_9 = arith.constant 0 : index
      %c0_10 = arith.constant 0 : index
      %c0_11 = arith.constant 0 : index
      %21 = vector.load %arg12[%c0_9, %c0_10, %c0_11] : memref<4x32x8xf32, #tpu.memory_space<vmem>>, vector<4x32x8xf32>
      %22 = vector.broadcast %20 : vector<4x1x8xf32> to vector<4x32x8xf32>
      %23 = arith.mulf %21, %22 : vector<4x32x8xf32>
      %c0_12 = arith.constant 0 : index
      %c0_13 = arith.constant 0 : index
      %c0_14 = arith.constant 0 : index
      %24 = vector.load %arg7[%c0_12, %c0_13, %c0_14] : memref<1x1x8xf32, #tpu.memory_space<vmem>>, vector<1x1x8xf32>
      %25 = vector.broadcast %24 : vector<1x1x8xf32> to vector<4x32x8xf32>
      %26 = arith.mulf %23, %25 : vector<4x32x8xf32>
      %27 = vector.shape_cast %26 : vector<4x32x8xf32> to vector<128x8xf32>
      %c0_15 = arith.constant 0 : index
      %c0_16 = arith.constant 0 : index
      %c0_17 = arith.constant 0 : index
      %28 = vector.load %arg9[%c0_15, %c0_16, %c0_17] : memref<1x128x8xf32, #tpu.memory_space<vmem>>, vector<1x128x8xf32>
      %29 = vector.shape_cast %28 : vector<1x128x8xf32> to vector<128x8xf32>
      %30 = vector.shape_cast %27 : vector<128x8xf32> to vector<1x128x8xf32>
      tpu.vector_store %arg9[%c0_15, %c0_16, %c0_17], %30 {strides = array<i32>} : memref<1x128x8xf32, #tpu.memory_space<vmem>>, vector<1x128x8xf32>,
    } else {
    }
    return
  }
  func.func @transform_0(%arg0: i32, %arg1: i32, %arg2: i32, %arg3: memref<2xi32, #tpu.memory_space<smem>>) -> (i32, i32, i32) {
    %c0_i32 = arith.constant 0 : i32
    %c0_i32_0 = arith.constant 0 : i32
    return %arg0, %arg1, %c0_i32 : i32, i32, i32
  }
  func.func @transform_1(%arg0: i32, %arg1: i32, %arg2: i32, %arg3: memref<2xi32, #tpu.memory_space<smem>>) -> (i32, i32, i32) {
    %c0_i32 = arith.constant 0 : i32
    %c0_i32_0 = arith.constant 0 : i32
    return %arg0, %arg2, %c0_i32 : i32, i32, i32
  }
  func.func @transform_2(%arg0: i32, %arg1: i32, %arg2: i32, %arg3: memref<2xi32, #tpu.memory_space<smem>>) -> (i32, i32, i32) {
    %c0_i32 = arith.constant 0 : i32
    %c0_i32_0 = arith.constant 0 : i32
    return %arg0, %arg2, %c0_i32 : i32, i32, i32
  }
  func.func @transform_3(%arg0: i32, %arg1: i32, %arg2: i32, %arg3: memref<2xi32, #tpu.memory_space<smem>>) -> (i32, i32, i32) {
    %c0_i32 = arith.constant 0 : i32
    %c0_i32_0 = arith.constant 0 : i32
    return %arg0, %c0_i32, %arg1 : i32, i32, i32
  }
  func.func @transform_4(%arg0: i32, %arg1: i32, %arg2: i32, %arg3: memref<2xi32, #tpu.memory_space<smem>>) -> (i32, i32, i32) {
    %c0_i32 = arith.constant 0 : i32
    %c0_i32_0 = arith.constant 0 : i32
    return %arg0, %arg2, %c0_i32 : i32, i32, i32
  }
  func.func @transform_5(%arg0: i32, %arg1: i32, %arg2: i32, %arg3: memref<2xi32, #tpu.memory_space<smem>>) -> (i32, i32, i32) {
    %c0_i32 = arith.constant 0 : i32
    %c0_i32_0 = arith.constant 0 : i32
    return %arg0, %c0_i32, %arg1 : i32, i32, i32
  }
}

</mosaic_0001>

<llo_original>
// kernel: tpu_custom_call.1
$region0: #{tpu_custom_call.1}
  #allocation0 [shape = 'u32[]', space=smem, size = 0x4, offset = 0x4, fixed_abs, tag = 'smem constant byte address 0x4 - core index']
  #allocation1 [shape = 'u32[144,128]{1,0:T(1,128)}', space=vmem, size = 0x12000, scoped, tag = 'internal scratch']
  #allocation2 [shape = 'f32[4,1,8]{2,1,0:T(1,128)}', space=vmem, size = 0x800, scoped, tag = 'scratch operand']
  #allocation3 [shape = 'f32[4,1,8]{2,1,0:T(1,128)}', space=vmem, size = 0x800, scoped, tag = 'scratch operand']
  #allocation4 [shape = 'f32[4,32,8]{2,1,0:T(8,128)}', space=vmem, size = 0x10000, scoped, tag = 'scratch operand']
  #allocation5 [shape = 's32[1]{0}', space=sflag, size = 0x4, scoped, tag = 'scoped memory for tpu_custom_call.1']
  #allocation6 [shape = 'u8[512]{0}', space=smem, size = 0x200, scoped, tag = 'prefetched SMEM operand 0']
  %s0 = inlined_call_operand.vmem [shape: s32[2], index: 0, kind: input, shape index: {}]
  %s1 = inlined_call_operand.vmem [shape: f32[2,8,128], index: 1, kind: input, shape index: {}]
  %s2 = inlined_call_operand.hbm [shape: f32[2,8,128], index: 2, kind: input, shape index: {}]
  %s3 = inlined_call_operand.hbm [shape: f32[2,8,128], index: 3, kind: input, shape index: {}]
  %s4 = inlined_call_operand.vmem [shape: f32[2,1,8], index: 4, kind: input, shape index: {}]
  %s5 = inlined_call_operand.vmem [shape: f32[2,8,1], index: 5, kind: input, shape index: {}]
  %s6 = inlined_call_operand.vmem [shape: f32[2,128,8], index: 6, kind: output, shape index: {}]
  %s7 = sld [smem:[#allocation0]]
  $region77: #{tpu_custom_call.1} parent=0
    _
  %s9 = ssub.s32 1, %s7
  %s10 = scalar_select 0, %s9, %s7
  %s11 = sshll.u32 %s0, 4
  %s12 = int_to_ptr.vmem [resolvable:$true] %s11
  %14 = dma.vmem_to_smem %s12, 16, [#allocation6], [#allocation5]
  %15 = dma.done [#allocation5], 16
  %16 = sfence
  $region1: #{tpu_custom_call.1} parent=0
    #allocation7 [shape = 'u8[8192]{0}', space=vmem, size = 0x2000, scoped, tag = 'input window, operand 2']
    #allocation8 [shape = 's32[2]{0}', space=sflag, size = 0x8, scoped, tag = 'scoped memory for tpu_custom_call.1']
    #allocation9 [shape = 'u8[8192]{0}', space=vmem, size = 0x2000, scoped, tag = 'input window, operand 3']
    #allocation10 [shape = 's32[2]{0}', space=sflag, size = 0x8, scoped, tag = 'scoped memory for tpu_custom_call.1']
    %17 = vsyncpa [#allocation8], 0
    %s18 = scalar_lea.sflag [#allocation8], 1
    %19 = vsyncpa %s18, 0
    %20 = vsyncpa [#allocation10], 0
    %s21 = scalar_lea.sflag [#allocation10], 1
    %22 = vsyncpa %s21, 0
    loop: start=0, step=1, limit=4
    $region2: #{tpu_custom_call.1} parent=1 // loop_pre_header
      _
    $region3: #{tpu_custom_call.1} parent=1 // loop_header
      %s24 = sphi 0, %s28
      %p25 = scmp.ge.s32.totalorder %s24, 4
      %s31 = sphi 0, %s50
      %s32 = sphi 0, %s46
      %s33 = sphi 0, %s42
      %s34 = sphi 0, %s31
      %s35 = sphi 0, %s32
      %s36 = sphi 0, %s33
      %s37 = sphi 0, %s34
      %s38 = sphi 0, %s35
      %s39 = sphi 0, %s36
      %s55 = sphi 0, %s57
      %s58 = sphi 0, %s55
      %s59 = sphi 0, %s58
      %s75 = sphi 0, %s59
      %s83 = sphi 0, %s85
      %s86 = sphi 0, %s83
      %s87 = sphi 0, %s86
      %s103 = sphi 0, %s87
      %s111 = sphi 0, %s113
      %s114 = sphi 0, %s111
      %s115 = sphi 0, %s114
      %s131 = sphi 0, %s115
      %s139 = sphi 0, %s141
      %s142 = sphi 0, %s139
      %s143 = sphi 0, %s142
      %s159 = sphi 0, %s143
      %s167 = sphi 0, %s169
      %s170 = sphi 0, %s167
      %s171 = sphi 0, %s170
      %s187 = sphi 0, %s171
      %s195 = sphi 0, %s197
      %s198 = sphi 0, %s195
      %s199 = sphi 0, %s198
      %s215 = sphi 0, %s199
    $region4: #{tpu_custom_call.1} parent=1 // loop_header_branch
      %27 = sbr.rel (%p25) target = $region8
    $region5: #{tpu_custom_call.1} parent=1 // loop_body
      %s29 = ssub.s32 %s24, 1
      %s30 = ssub.s32 %s24, 2
      %s40 = sadd.s32 1, %s33
      %p41 = scmp.ge.s32.totalorder %s40, 1
      %s42 = scalar_select %p41, 0, %s40
      %s43 = sadd.s32 1, %s32
      %s44 = scalar_select %p41, %s43, %s32
      %p45 = scmp.ge.s32.totalorder %s44, 1
      %s46 = scalar_select %p45, 0, %s44
      %s47 = sadd.s32 1, %s31
      %s48 = scalar_select %p45, %s47, %s31
      %p49 = scmp.ge.s32.totalorder %s48, 2
      %s50 = scalar_select %p49, 0, %s48
      %s51 = ssub.s32 %s31, %s50
      %s52 = ssub.s32 %s32, %s46
      %s53 = sor.u32 %s51, %s52
      %p54 = scmp.eq.s32.totalorder %s53, 0
      %s56 = sadd.s32 %s55, 1
      %s57 = scalar_select %p54, %s55, %s56
      %p60 = pneg %p54
      %p61 = scmp.eq.s32.totalorder %s24, 1
      %p62 = por %p60, %p61
      %p63 = scmp.ne.s32.totalorder %s55, %s58
      %p64 = scmp.eq.s32.totalorder %s24, 0
      %p65 = por %p63, %p64
      %p66 = scmp.ne.s32.totalorder %s55, %s58
      %p67 = scmp.eq.s32.totalorder %s29, 1
      %p68 = por %p66, %p67
      %p69 = scmp.ne.s32.totalorder %s58, %s59
      %p70 = scmp.eq.s32.totalorder %s29, 0
      %p71 = por %p69, %p70
      %p72 = scmp.ne.s32.totalorder %s58, %s59
      %p73 = scmp.eq.s32.totalorder %s30, 1
      %p74 = por %p72, %p73
      %p76 = scmp.ne.s32.totalorder %s59, %s75
      %p77 = scmp.eq.s32.totalorder %s30, 0
      %p78 = por %p76, %p77
      %s79 = ssub.s32 %s31, %s50
      %s80 = ssub.s32 %s33, %s42
      %s81 = sor.u32 %s79, %s80
      %p82 = scmp.eq.s32.totalorder %s81, 0
      %s84 = sadd.s32 %s83, 1
      %s85 = scalar_select %p82, %s83, %s84
      %p88 = pneg %p82
      %p89 = scmp.eq.s32.totalorder %s24, 1
      %p90 = por %p88, %p89
      %p91 = scmp.ne.s32.totalorder %s83, %s86
      %p92 = scmp.eq.s32.totalorder %s24, 0
      %p93 = por %p91, %p92
      %p94 = scmp.ne.s32.totalorder %s83, %s86
      %p95 = scmp.eq.s32.totalorder %s29, 1
      %p96 = por %p94, %p95
      %p97 = scmp.ne.s32.totalorder %s86, %s87
      %p98 = scmp.eq.s32.totalorder %s29, 0
      %p99 = por %p97, %p98
      %p100 = scmp.ne.s32.totalorder %s86, %s87
      %p101 = scmp.eq.s32.totalorder %s30, 1
      %p102 = por %p100, %p101
      %p104 = scmp.ne.s32.totalorder %s87, %s103
      %p105 = scmp.eq.s32.totalorder %s30, 0
      %p106 = por %p104, %p105
      %s107 = ssub.s32 %s31, %s50
      %s108 = ssub.s32 %s33, %s42
      %s109 = sor.u32 %s107, %s108
      %p110 = scmp.eq.s32.totalorder %s109, 0
      %s112 = sadd.s32 %s111, 1
      %s113 = scalar_select %p110, %s111, %s112
      %p116 = pneg %p110
      %p117 = scmp.eq.s32.totalorder %s24, 1
      %p118 = por %p116, %p117
      %p119 = scmp.ne.s32.totalorder %s111, %s114
      %p120 = scmp.eq.s32.totalorder %s24, 0
      %p121 = por %p119, %p120
      %p122 = scmp.ne.s32.totalorder %s111, %s114
      %p123 = scmp.eq.s32.totalorder %s29, 1
      %p124 = por %p122, %p123
      %p125 = scmp.ne.s32.totalorder %s114, %s115
      %p126 = scmp.eq.s32.totalorder %s29, 0
      %p127 = por %p125, %p126
      %p128 = scmp.ne.s32.totalorder %s114, %s115
      %p129 = scmp.eq.s32.totalorder %s30, 1
      %p130 = por %p128, %p129
      %p132 = scmp.ne.s32.totalorder %s115, %s131
      %p133 = scmp.eq.s32.totalorder %s30, 0
      %p134 = por %p132, %p133
      %s135 = ssub.s32 %s31, %s50
      %s136 = ssub.s32 %s32, %s46
      %s137 = sor.u32 %s135, %s136
      %p138 = scmp.eq.s32.totalorder %s137, 0
      %s140 = sadd.s32 %s139, 1
      %s141 = scalar_select %p138, %s139, %s140
      %p144 = pneg %p138
      %p145 = scmp.eq.s32.totalorder %s24, 1
      %p146 = por %p144, %p145
      %p147 = scmp.ne.s32.totalorder %s139, %s142
      %p148 = scmp.eq.s32.totalorder %s24, 0
      %p149 = por %p147, %p148
      %p150 = scmp.ne.s32.totalorder %s139, %s142
      %p151 = scmp.eq.s32.totalorder %s29, 1
      %p152 = por %p150, %p151
      %p153 = scmp.ne.s32.totalorder %s142, %s143
      %p154 = scmp.eq.s32.totalorder %s29, 0
      %p155 = por %p153, %p154
      %p156 = scmp.ne.s32.totalorder %s142, %s143
      %p157 = scmp.eq.s32.totalorder %s30, 1
      %p158 = por %p156, %p157
      %p160 = scmp.ne.s32.totalorder %s143, %s159
      %p161 = scmp.eq.s32.totalorder %s30, 0
      %p162 = por %p160, %p161
      %s163 = ssub.s32 %s31, %s50
      %s164 = ssub.s32 %s33, %s42
      %s165 = sor.u32 %s163, %s164
      %p166 = scmp.eq.s32.totalorder %s165, 0
      %s168 = sadd.s32 %s167, 1
      %s169 = scalar_select %p166, %s167, %s168
      %p172 = pneg %p166
      %p173 = scmp.eq.s32.totalorder %s24, 1
      %p174 = por %p172, %p173
      %p175 = scmp.ne.s32.totalorder %s167, %s170
      %p176 = scmp.eq.s32.totalorder %s24, 0
      %p177 = por %p175, %p176
      %p178 = scmp.ne.s32.totalorder %s167, %s170
      %p179 = scmp.eq.s32.totalorder %s29, 1
      %p180 = por %p178, %p179
      %p181 = scmp.ne.s32.totalorder %s170, %s171
      %p182 = scmp.eq.s32.totalorder %s29, 0
      %p183 = por %p181, %p182
      %p184 = scmp.ne.s32.totalorder %s170, %s171
      %p185 = scmp.eq.s32.totalorder %s30, 1
      %p186 = por %p184, %p185
      %p188 = scmp.ne.s32.totalorder %s171, %s187
      %p189 = scmp.eq.s32.totalorder %s30, 0
      %p190 = por %p188, %p189
      %s191 = ssub.s32 %s31, %s50
      %s192 = ssub.s32 %s32, %s46
      %s193 = sor.u32 %s191, %s192
      %p194 = scmp.eq.s32.totalorder %s193, 0
      %s196 = sadd.s32 %s195, 1
      %s197 = scalar_select %p194, %s195, %s196
      %p200 = pneg %p194
      %p201 = scmp.eq.s32.totalorder %s24, 1
      %p202 = por %p200, %p201
      %p203 = scmp.ne.s32.totalorder %s195, %s198
      %p204 = scmp.eq.s32.totalorder %s24, 0
      %p205 = por %p203, %p204
      %p206 = scmp.ne.s32.totalorder %s195, %s198
      %p207 = scmp.eq.s32.totalorder %s29, 1
      %p208 = por %p206, %p207
      %p209 = scmp.ne.s32.totalorder %s198, %s199
      %p210 = scmp.eq.s32.totalorder %s29, 0
      %p211 = por %p209, %p210
      %p212 = scmp.ne.s32.totalorder %s198, %s199
      %p213 = scmp.eq.s32.totalorder %s30, 1
      %p214 = por %p212, %p213
      %p216 = scmp.ne.s32.totalorder %s199, %s215
      %p217 = scmp.eq.s32.totalorder %s30, 0
      %p218 = por %p216, %p217
      %p219 = scmp.le.s32.totalorder 1, %s24
      %p220 = scmp.lt.s32.totalorder %s24, 3
      %p221 = pnand %p219, %p220
      %p222 = pneg %p221
      // Predicated region
      $region9: #{tpu_custom_call.1} parent=5 // pred_check
        _
      $region10: #{tpu_custom_call.1} parent=5 // pred_check_branch
        %224 = sbr.rel (%p221) target = $region12
      $region11: #{tpu_custom_call.1} parent=5 // pred_region
        %s225 = ssub.s32 %s24, 1
      $region12: #{tpu_custom_call.1} parent=5 // pred_fallthru
        _
      %p226 = scmp.lt.s32.totalorder %s24, 2
      // Predicated region
      $region13: #{tpu_custom_call.1} parent=5 // pred_check
        %p227 = pneg %p226
      $region14: #{tpu_custom_call.1} parent=5 // pred_check_branch
        %229 = sbr.rel (%p227) target = $region16
      $region15: #{tpu_custom_call.1} parent=5 // pred_region
        // Predicated region
        $region17: #{tpu_custom_call.1} parent=15 // pred_check
          %p230 = pneg %p65
        $region18: #{tpu_custom_call.1} parent=15 // pred_check_branch
          %232 = sbr.rel (%p230) target = $region20
        $region19: #{tpu_custom_call.1} parent=15 // pred_region
          %p233 = scmp.lt.s32.totalorder %s31, 1
          %s234 = scalar_select %p233, %s31, 1
          %p235 = scmp.lt.s32.totalorder %s32, 0
          %s236 = scalar_select %p235, %s32, 0
          %s237 = sadd.s32 %s236, %s234
          %s238 = smul.addr %s237, 8
          %s239 = scalar_lea.vmem %s1, %s238
        $region20: #{tpu_custom_call.1} parent=15 // pred_fallthru
          _
        // Predicated region
        $region21: #{tpu_custom_call.1} parent=15 // pred_check
          %p240 = pneg %p93
        $region22: #{tpu_custom_call.1} parent=15 // pred_check_branch
          %242 = sbr.rel (%p240) target = $region24
        $region23: #{tpu_custom_call.1} parent=15 // pred_region
          %s243 = sand.u32 %s83, 1
          %s244 = scalar_lea.sflag [#allocation8], %s243
          %s245 = sand.u32 %s83, 1
          %s246 = smul.addr %s245, 8
          %s247 = scalar_lea.vmem [#allocation7], %s246
          %s249 = ssub.s32 128, 128
          %250 = vsyncadd %s244, %s249
          %s251 = sadd.s32 %s33, %s31
          %s252 = smul.addr %s251, 128
          %s253 = scalar_lea.hbm %s2, %s252
          %s255 = sshll.u32 %s247, 4
          %s256 = int_to_ptr.vmem [resolvable:$true] %s255
          %258 = dma.hbm_to_vmem [thread:$0]  %s253, 128, %s256, %s244
        $region24: #{tpu_custom_call.1} parent=15 // pred_fallthru
          _
        // Predicated region
        $region25: #{tpu_custom_call.1} parent=15 // pred_check
          %p259 = pneg %p121
        $region26: #{tpu_custom_call.1} parent=15 // pred_check_branch
          %261 = sbr.rel (%p259) target = $region28
        $region27: #{tpu_custom_call.1} parent=15 // pred_region
          %s262 = sand.u32 %s111, 1
          %s263 = scalar_lea.sflag [#allocation10], %s262
          %s264 = sand.u32 %s111, 1
          %s265 = smul.addr %s264, 8
          %s266 = scalar_lea.vmem [#allocation9], %s265
          %s268 = ssub.s32 128, 128
          %269 = vsyncadd %s263, %s268
          %s270 = sadd.s32 %s33, %s31
          %s271 = smul.addr %s270, 128
          %s272 = scalar_lea.hbm %s3, %s271
          %s274 = sshll.u32 %s266, 4
          %s275 = int_to_ptr.vmem [resolvable:$true] %s274
          %277 = dma.hbm_to_vmem [thread:$0]  %s272, 128, %s275, %s263
        $region28: #{tpu_custom_call.1} parent=15 // pred_fallthru
          _
        // Predicated region
        $region29: #{tpu_custom_call.1} parent=15 // pred_check
          %p278 = pneg %p149
        $region30: #{tpu_custom_call.1} parent=15 // pred_check_branch
          %280 = sbr.rel (%p278) target = $region32
        $region31: #{tpu_custom_call.1} parent=15 // pred_region
          %p281 = scmp.lt.s32.totalorder %s31, 1
          %s282 = scalar_select %p281, %s31, 1
          %p283 = scmp.lt.s32.totalorder %s32, 0
          %s284 = scalar_select %p283, %s32, 0
          %s285 = sadd.s32 %s284, %s282
          %s286 = scalar_lea.vmem %s4, %s285
        $region32: #{tpu_custom_call.1} parent=15 // pred_fallthru
          _
        // Predicated region
        $region33: #{tpu_custom_call.1} parent=15 // pred_check
          %p287 = pneg %p177
        $region34: #{tpu_custom_call.1} parent=15 // pred_check_branch
          %289 = sbr.rel (%p287) target = $region36
        $region35: #{tpu_custom_call.1} parent=15 // pred_region
          %p290 = scmp.lt.s32.totalorder %s31, 1
          %s291 = scalar_select %p290, %s31, 1
          %p292 = scmp.lt.s32.totalorder %s33, 0
          %s293 = scalar_select %p292, %s33, 0
          %s294 = sadd.s32 %s293, %s291
          %s295 = smul.addr %s294, 8
          %s296 = scalar_lea.vmem %s5, %s295
        $region36: #{tpu_custom_call.1} parent=15 // pred_fallthru
          _
      $region16: #{tpu_custom_call.1} parent=5 // pred_fallthru
        _
      %p297 = scmp.le.s32.totalorder 1, %s24
      %p298 = scmp.lt.s32.totalorder %s24, 3
      %p299 = pnand %p297, %p298
      %p300 = pneg %p299
      // Predicated region
      $region37: #{tpu_custom_call.1} parent=5 // pred_check
        _
      $region38: #{tpu_custom_call.1} parent=5 // pred_check_branch
        %302 = sbr.rel (%p299) target = $region40
      $region39: #{tpu_custom_call.1} parent=5 // pred_region
        %s303 = ssub.s32 %s24, 1
        %s304 = sand.u32 %s86, 1
        %s305 = scalar_lea.sflag [#allocation8], %s304
        %s306 = sand.u32 %s86, 1
        %s307 = smul.addr %s306, 8
        %s308 = scalar_lea.vmem [#allocation7], %s307
        // Predicated region
        $region41: #{tpu_custom_call.1} parent=39 // pred_check
          %p309 = pneg %p99
        $region42: #{tpu_custom_call.1} parent=39 // pred_check_branch
          %311 = sbr.rel (%p309) target = $region44
        $region43: #{tpu_custom_call.1} parent=39 // pred_region
          %312 = dma.done %s305, 128
        $region44: #{tpu_custom_call.1} parent=39 // pred_fallthru
          _
        %s313 = sand.u32 %s114, 1
        %s314 = scalar_lea.sflag [#allocation10], %s313
        %s315 = sand.u32 %s114, 1
        %s316 = smul.addr %s315, 8
        %s317 = scalar_lea.vmem [#allocation9], %s316
        // Predicated region
        $region45: #{tpu_custom_call.1} parent=39 // pred_check
          %p318 = pneg %p127
        $region46: #{tpu_custom_call.1} parent=39 // pred_check_branch
          %320 = sbr.rel (%p318) target = $region48
        $region47: #{tpu_custom_call.1} parent=39 // pred_region
          %321 = dma.done %s314, 128
        $region48: #{tpu_custom_call.1} parent=39 // pred_fallthru
          _
        %p322 = scmp.lt.s32.totalorder %s34, 1
        %s323 = scalar_select %p322, %s34, 1
        %p324 = scmp.lt.s32.totalorder %s35, 0
        %s325 = scalar_select %p324, %s35, 0
        %s326 = sadd.s32 %s325, %s323
        %s327 = smul.addr %s326, 8
        %s328 = scalar_lea.vmem %s1, %s327
        %p329 = pneg %p71
        %p330 = pneg %p68
        %s331 = sand.u32 %s86, 1
        %s332 = scalar_lea.sflag [#allocation8], %s331
        %s333 = sand.u32 %s86, 1
        %s334 = smul.addr %s333, 8
        %s335 = scalar_lea.vmem [#allocation7], %s334
        %p336 = pneg %p99
        %p337 = pneg %p96
        %s338 = sand.u32 %s114, 1
        %s339 = scalar_lea.sflag [#allocation10], %s338
        %s340 = sand.u32 %s114, 1
        %s341 = smul.addr %s340, 8
        %s342 = scalar_lea.vmem [#allocation9], %s341
        %p343 = pneg %p127
        %p344 = pneg %p124
        %p345 = scmp.lt.s32.totalorder %s34, 1
        %s346 = scalar_select %p345, %s34, 1
        %p347 = scmp.lt.s32.totalorder %s35, 0
        %s348 = scalar_select %p347, %s35, 0
        %s349 = sadd.s32 %s348, %s346
        %s350 = scalar_lea.vmem %s4, %s349
        %p351 = pneg %p155
        %p352 = pneg %p152
        %p353 = scmp.lt.s32.totalorder %s34, 1
        %s354 = scalar_select %p353, %s34, 1
        %p355 = scmp.lt.s32.totalorder %s36, 0
        %s356 = scalar_select %p355, %s36, 0
        %s357 = sadd.s32 %s356, %s354
        %s358 = smul.addr %s357, 8
        %s359 = scalar_lea.vmem %s5, %s358
        %p360 = pneg %p183
        %p361 = pneg %p180
        %p362 = pneg %p211
        %p363 = pneg %p208
        %p364 = scmp.lt.s32.totalorder %s34, 1
        %s365 = scalar_select %p364, %s34, 1
        %p366 = scmp.lt.s32.totalorder %s35, 0
        %s367 = scalar_select %p366, %s35, 0
        %s368 = smul.addr %s365, 16
        %s369 = sadd.s32 %s367, %s368
        %s370 = smul.addr %s369, 8
        %s371 = scalar_lea.vmem %s6, %s370
        %p372 = scmp.lt.s32.totalorder %s34, 1
        %s373 = scalar_select %p372, %s34, 1
        %p374 = scmp.lt.s32.totalorder %s35, 0
        %s375 = scalar_select %p374, %s35, 0
        %s376 = sadd.s32 %s375, %s373
        %s377 = smul.addr %s376, 8
        %s378 = scalar_lea.vmem %s1, %s377
        %p379 = scmp.lt.s32.totalorder %s34, 1
        %s380 = scalar_select %p379, %s34, 1
        %p381 = scmp.lt.s32.totalorder %s35, 0
        %s382 = scalar_select %p381, %s35, 0
        %s383 = sadd.s32 %s382, %s380
        %s384 = scalar_lea.vmem %s4, %s383
        %p385 = scmp.lt.s32.totalorder %s34, 1
        %s386 = scalar_select %p385, %s34, 1
        %p387 = scmp.lt.s32.totalorder %s36, 0
        %s388 = scalar_select %p387, %s36, 0
        %s389 = sadd.s32 %s388, %s386
        %s390 = smul.addr %s389, 8
        %s391 = scalar_lea.vmem %s5, %s390
        %p392 = scmp.lt.s32.totalorder %s34, 1
        %s393 = scalar_select %p392, %s34, 1
        %p394 = scmp.lt.s32.totalorder %s35, 0
        %s395 = scalar_select %p394, %s35, 0
        %s396 = smul.addr %s393, 16
        %s397 = sadd.s32 %s395, %s396
        %s398 = smul.addr %s397, 8
        %s399 = scalar_lea.vmem %s6, %s398
        %p401 = scmp.eq.s32.totalorder %s36, 0
        // Predicated region
        $region49: #{tpu_custom_call.1} parent=39 // pred_check
          %p402 = pneg %p401
        $region50: #{tpu_custom_call.1} parent=39 // pred_check_branch
          %404 = sbr.rel (%p402) target = $region52
        $region51: #{tpu_custom_call.1} parent=39 // pred_region
          %vm405 = vcmask 57344
          %406 = vst.msk [vmem:[#allocation2] sm:$0x1] %vm405, -inf
          %407 = vst.msk [vmem:[#allocation2 + $0x1] sm:$0x1] %vm405, -inf
          %408 = vst.msk [vmem:[#allocation2 + $0x2] sm:$0x1] %vm405, -inf
          %409 = vst.msk [vmem:[#allocation2 + $0x3] sm:$0x1] %vm405, -inf
          %410 = vst.msk [vmem:[#allocation3] sm:$0x1] %vm405, 0.0
          %411 = vst.msk [vmem:[#allocation3 + $0x1] sm:$0x1] %vm405, 0.0
          %412 = vst.msk [vmem:[#allocation3 + $0x2] sm:$0x1] %vm405, 0.0
          %413 = vst.msk [vmem:[#allocation3 + $0x3] sm:$0x1] %vm405, 0.0
          %vm414 = vcmask 64512
          %415 = vst.msk [vmem:[#allocation4] sm:$0xff] %vm414, 0.0
          %416 = vst.msk [vmem:[#allocation4 + $0x8] sm:$0xff] %vm414, 0.0
          %417 = vst.msk [vmem:[#allocation4 + $0x10] sm:$0xff] %vm414, 0.0
          %418 = vst.msk [vmem:[#allocation4 + $0x18] sm:$0xff] %vm414, 0.0
          %419 = vst.msk [vmem:[#allocation4 + $0x20] sm:$0xff] %vm414, 0.0
          %420 = vst.msk [vmem:[#allocation4 + $0x28] sm:$0xff] %vm414, 0.0
          %421 = vst.msk [vmem:[#allocation4 + $0x30] sm:$0xff] %vm414, 0.0
          %422 = vst.msk [vmem:[#allocation4 + $0x38] sm:$0xff] %vm414, 0.0
          %423 = vst.msk [vmem:[#allocation4 + $0x40] sm:$0xff] %vm414, 0.0
          %424 = vst.msk [vmem:[#allocation4 + $0x48] sm:$0xff] %vm414, 0.0
          %425 = vst.msk [vmem:[#allocation4 + $0x50] sm:$0xff] %vm414, 0.0
          %426 = vst.msk [vmem:[#allocation4 + $0x58] sm:$0xff] %vm414, 0.0
          %427 = vst.msk [vmem:[#allocation4 + $0x60] sm:$0xff] %vm414, 0.0
          %428 = vst.msk [vmem:[#allocation4 + $0x68] sm:$0xff] %vm414, 0.0
          %429 = vst.msk [vmem:[#allocation4 + $0x70] sm:$0xff] %vm414, 0.0
          %430 = vst.msk [vmem:[#allocation4 + $0x78] sm:$0xff] %vm414, 0.0
        $region52: #{tpu_custom_call.1} parent=39 // pred_fallthru
          _
        %s431 = sadd.s32 %s34, %s36
        %s432 = sld [smem:[#allocation6 + %s431]]
        %p433 = scmp.eq.s32.totalorder %s432, 2
        // Predicated region
        $region53: #{tpu_custom_call.1} parent=39 // pred_check
          %p434 = pneg %p433
        $region54: #{tpu_custom_call.1} parent=39 // pred_check_branch
          %436 = sbr.rel (%p434) target = $region56
        $region55: #{tpu_custom_call.1} parent=39 // pred_region
          %v437 = vld [vmem:[%s378] sm:$0xff]
          %v438 = vmul.f32 %v437, 0.17677669
          %v439 = vpack.c.bf16 %v438, %v438
          %v440 = vld [vmem:[%s308] sm:$0xff]
          %v441 = vpack.c.bf16 %v440, %v440
          %v442 = vld [vmem:[%s317] sm:$0xff]
          %v443 = vpack.c.bf16 %v442, %v442
          %vm444 = vcmask 261120
          %v446 = vsel %vm444, %v441, 0
          %v449 = vsel %vm444, %v439, 0
          %451 = vmatprep.subr.bf16.mxu0 0
          %452 = vmatpush1.bf16.xpose.msra.mxu0 0
          %453 = vmatprep.subr.bf16.mxu0 0
          %454 = vmatpush1.bf16.xpose.msra.mxu0 0
          %455 = vmatprep.subr.bf16.mxu0 0
          %456 = vmatpush1.bf16.xpose.msra.mxu0 0
          %457 = vmatprep.subr.bf16.mxu0 0
          %458 = vmatpush1.bf16.xpose.msra.mxu0 0
          %459 = vmatprep.subr.bf16.mxu0 0
          %460 = vmatpush1.bf16.xpose.msra.mxu0 0
          %461 = vmatprep.subr.bf16.mxu0 0
          %462 = vmatpush1.bf16.xpose.msra.mxu0 0
          %463 = vmatprep.subr.bf16.mxu0 0
          %464 = vmatpush1.bf16.xpose.msra.mxu0 0
          %465 = vmatprep.subr.bf16.mxu0 0
          %466 = vmatpush1.bf16.xpose.msra.mxu0 %v449
          %467 = vmatprep.subr.bf16.mxu0 0
          %468 = vmatpush2.bf16.xpose.msra.mxu0 0
          %469 = vmatprep.subr.bf16.mxu0 0
          %470 = vmatpush2.bf16.xpose.msra.mxu0 0
          %471 = vmatprep.subr.bf16.mxu0 0
          %472 = vmatpush2.bf16.xpose.msra.mxu0 0
          %473 = vmatprep.subr.bf16.mxu0 0
          %474 = vmatpush2.bf16.xpose.msra.mxu0 0
          %475 = vmatprep.subr.bf16.mxu0 0
          %476 = vmatpush2.bf16.xpose.msra.mxu0 0
          %477 = vmatprep.subr.bf16.mxu0 0
          %478 = vmatpush2.bf16.xpose.msra.mxu0 0
          %479 = vmatprep.subr.bf16.mxu0 0
          %480 = vmatpush2.bf16.xpose.msra.mxu0 0
          %481 = vmatprep.subr.bf16.mxu0 0
          %482 = vmatpush2.bf16.xpose.msra.mxu0 0
          %483 = vmatprep.mubr.bf16.mxu0 0
          %484 = vmatmul.mubr.bf16.gmra.mxu0 %v446
          %v485 = vpop.f32.mrf.mxu0
          %v486 = vadd.f32 0.0, %v485
          %v487 = vpop.f32.mrf.mxu0
          %v488 = vpop.f32.mrf.mxu0
          %v489 = vpop.f32.mrf.mxu0
          %490 = vdwg.mxu0
          %v491 = vld [vmem:[#allocation2] sm:$0x1]
          %vm492 = vcmask 64512
          %v493 = vsel %vm492, %v486, -inf
          %v494 = vrot.slane %v493, 4
          %v495 = vmax.f32 %v493, %v494
          %v496 = vrot.slane %v495, 2
          %v497 = vmax.f32 %v495, %v496
          %v498 = vrot.slane %v497, 1
          %v499 = vmax.f32 %v497, %v498
          %v500 = vmax.f32 %v491, %v499
          %v501 = vsub.f32 %v491, %v500
          %v502 = vmul.f32 %v501, 1.442695
          %v503 = vpow.pop %v502
          %v505 = vlaneseq
          %v506 = vshrl.u32 %v505, 7
          %v507 = vsub.s32 0, %v506
          %v508 = vrot.slane %v500, %v507
          %v510 = vsub.f32 %v486, %v508
          %v511 = vmul.f32 %v510, 1.442695
          %v512 = vpow.pop %v511
          %v513 = vld [vmem:[#allocation3] sm:$0x1]
          %v514 = vmul.f32 %v503, %v513
          %v515 = vsel %vm492, %v512, 0.0
          %v516 = vrot.slane %v515, 4
          %v517 = vadd.f32 %v515, %v516
          %v518 = vrot.slane %v517, 2
          %v519 = vadd.f32 %v517, %v518
          %v520 = vrot.slane %v519, 1
          %v521 = vadd.f32 %v519, %v520
          %v522 = vadd.f32 %v514, %v521
          %vm523 = vcmask 57344
          %524 = vst.msk [vmem:[#allocation3] sm:$0x1] %vm523, %v522
          %v525 = vpack.c.bf16 %v512, %v512
          %526 = vxpose.xlu0.c.b16.start [1/8] %v443, 128
          %527 = vxpose.xlu0.c.b16.cont [2/8] 0, 128
          %528 = vxpose.xlu0.c.b16.cont [3/8] 0, 128
          %529 = vxpose.xlu0.c.b16.cont [4/8] 0, 128
          %530 = vxpose.xlu0.c.b16.cont [5/8] 0, 128
          %531 = vxpose.xlu0.c.b16.cont [6/8] 0, 128
          %532 = vxpose.xlu0.c.b16.cont [7/8] 0, 128
          %533 = vxpose.xlu0.c.b16.end [8/8] 0, 128
          %v534 = vpop.trf.xlu0
          %v535 = vpop.trf.xlu0
          %v536 = vpop.trf.xlu0
          %v537 = vpop.trf.xlu0
          %v538 = vpop.trf.xlu0
          %v539 = vpop.trf.xlu0
          %v540 = vpop.trf.xlu0
          %v541 = vpop.trf.xlu0
          %v543 = vsel %vm492, %v534, 0
          %v546 = vsel %vm492, %v535, 0
          %vm548 = vcmask 1043456
          %v550 = vsel %vm548, %v525, 0
          %552 = vmatprep.subr.bf16.mxu0 0
          %553 = vmatpush1.bf16.msra.mxu0 0
          %554 = vmatprep.subr.bf16.mxu0 0
          %555 = vmatpush1.bf16.msra.mxu0 0
          %556 = vmatprep.subr.bf16.mxu0 0
          %557 = vmatpush1.bf16.msra.mxu0 0
          %558 = vmatprep.subr.bf16.mxu0 0
          %559 = vmatpush1.bf16.msra.mxu0 0
          %560 = vmatprep.subr.bf16.mxu0 0
          %561 = vmatpush1.bf16.msra.mxu0 0
          %562 = vmatprep.subr.bf16.mxu0 0
          %563 = vmatpush1.bf16.msra.mxu0 0
          %564 = vmatprep.subr.bf16.mxu0 0
          %565 = vmatpush1.bf16.msra.mxu0 0
          %566 = vmatprep.subr.bf16.mxu0 0
          %567 = vmatpush1.bf16.msra.mxu0 %v550
          %568 = vmatprep.subr.bf16.mxu0 0
          %569 = vmatpush2.bf16.msra.mxu0 0
          %570 = vmatprep.subr.bf16.mxu0 0
          %571 = vmatpush2.bf16.msra.mxu0 0
          %572 = vmatprep.subr.bf16.mxu0 0
          %573 = vmatpush2.bf16.msra.mxu0 0
          %574 = vmatprep.subr.bf16.mxu0 0
          %575 = vmatpush2.bf16.msra.mxu0 0
          %576 = vmatprep.subr.bf16.mxu0 0
          %577 = vmatpush2.bf16.msra.mxu0 0
          %578 = vmatprep.subr.bf16.mxu0 0
          %579 = vmatpush2.bf16.msra.mxu0 0
          %580 = vmatprep.subr.bf16.mxu0 0
          %581 = vmatpush2.bf16.msra.mxu0 0
          %582 = vmatprep.subr.bf16.mxu0 0
          %583 = vmatpush2.bf16.msra.mxu0 0
          %584 = vmatprep.mubr.bf16.mxu0 0
          %585 = vmatmul.mubr.bf16.gmra.mxu0 %v543
          %v586 = vpop.f32.mrf.mxu0
          %v587 = vadd.f32 0.0, %v586
          %v588 = vpop.f32.mrf.mxu0
          %v589 = vpop.f32.mrf.mxu0
          %v590 = vadd.f32 0.0, %v589
          %v591 = vpop.f32.mrf.mxu0
          %592 = vmatprep.mubr.bf16.mxu0 0
          %593 = vmatmul.mubr.bf16.gmra.mxu0 %v546
          %v594 = vpop.f32.mrf.mxu0
          %v595 = vadd.f32 0.0, %v594
          %v596 = vpop.f32.mrf.mxu0
          %v597 = vpop.f32.mrf.mxu0
          %v598 = vadd.f32 0.0, %v597
          %v599 = vpop.f32.mrf.mxu0
          %600 = vdwg.mxu0
          %v601 = vld [vmem:[#allocation4] sm:$0xff]
          %v602 = vld [vmem:[#allocation4 + $0x8] sm:$0xff]
          %v603 = vld [vmem:[#allocation4 + $0x10] sm:$0xff]
          %v604 = vld [vmem:[#allocation4 + $0x18] sm:$0xff]
          %v606 = vlaneseq
          %v607 = vshrl.u32 %v606, 7
          %v608 = vsub.s32 0, %v607
          %v609 = vrot.slane %v503, %v608
          %v611 = vmul.f32 %v609, %v601
          %v612 = vmul.f32 %v609, %v602
          %v613 = vmul.f32 %v609, %v603
          %v614 = vmul.f32 %v609, %v604
          %v615 = vadd.f32 %v611, %v587
          %v616 = vadd.f32 %v612, %v590
          %v617 = vadd.f32 %v613, %v595
          %v618 = vadd.f32 %v614, %v598
          %619 = vst.msk [vmem:[#allocation4] sm:$0xff] %vm492, %v615
          %620 = vst.msk [vmem:[#allocation4 + $0x8] sm:$0xff] %vm492, %v616
          %621 = vst.msk [vmem:[#allocation4 + $0x10] sm:$0xff] %vm492, %v617
          %622 = vst.msk [vmem:[#allocation4 + $0x18] sm:$0xff] %vm492, %v618
          %623 = vst.msk [vmem:[#allocation2] sm:$0x1] %vm523, %v500
          %v624 = vld [vmem:[%s378] sm:$0xff]
          %v625 = vmul.f32 %v624, 0.17677669
          %v626 = vpack.c.bf16 %v625, %v625
          %v627 = vld [vmem:[%s308] sm:$0xff]
          %v628 = vpack.c.bf16 %v627, %v627
          %v629 = vld [vmem:[%s317] sm:$0xff]
          %v630 = vpack.c.bf16 %v629, %v629
          %632 = vrot.lane.b32.xlu0 %v628, 96
          %v633 = vpop.permute.xlu0 %632
          %635 = vrot.lane.b32.xlu0 %v626, 96
          %v636 = vpop.permute.xlu0 %635
          %v638 = vsel %vm444, %v633, 0
          %v641 = vsel %vm444, %v636, 0
          %643 = vmatprep.subr.bf16.mxu0 0
          %644 = vmatpush1.bf16.xpose.msra.mxu0 0
          %645 = vmatprep.subr.bf16.mxu0 0
          %646 = vmatpush1.bf16.xpose.msra.mxu0 0
          %647 = vmatprep.subr.bf16.mxu0 0
          %648 = vmatpush1.bf16.xpose.msra.mxu0 0
          %649 = vmatprep.subr.bf16.mxu0 0
          %650 = vmatpush1.bf16.xpose.msra.mxu0 0
          %651 = vmatprep.subr.bf16.mxu0 0
          %652 = vmatpush1.bf16.xpose.msra.mxu0 0
          %653 = vmatprep.subr.bf16.mxu0 0
          %654 = vmatpush1.bf16.xpose.msra.mxu0 0
          %655 = vmatprep.subr.bf16.mxu0 0
          %656 = vmatpush1.bf16.xpose.msra.mxu0 0
          %657 = vmatprep.subr.bf16.mxu0 0
          %658 = vmatpush1.bf16.xpose.msra.mxu0 %v641
          %659 = vmatprep.subr.bf16.mxu0 0
          %660 = vmatpush2.bf16.xpose.msra.mxu0 0
          %661 = vmatprep.subr.bf16.mxu0 0
          %662 = vmatpush2.bf16.xpose.msra.mxu0 0
          %663 = vmatprep.subr.bf16.mxu0 0
          %664 = vmatpush2.bf16.xpose.msra.mxu0 0
          %665 = vmatprep.subr.bf16.mxu0 0
          %666 = vmatpush2.bf16.xpose.msra.mxu0 0
          %667 = vmatprep.subr.bf16.mxu0 0
          %668 = vmatpush2.bf16.xpose.msra.mxu0 0
          %669 = vmatprep.subr.bf16.mxu0 0
          %670 = vmatpush2.bf16.xpose.msra.mxu0 0
          %671 = vmatprep.subr.bf16.mxu0 0
          %672 = vmatpush2.bf16.xpose.msra.mxu0 0
          %673 = vmatprep.subr.bf16.mxu0 0
          %674 = vmatpush2.bf16.xpose.msra.mxu0 0
          %675 = vmatprep.mubr.bf16.mxu0 0
          %676 = vmatmul.mubr.bf16.gmra.mxu0 %v638
          %v677 = vpop.f32.mrf.mxu0
          %v678 = vadd.f32 0.0, %v677
          %v679 = vpop.f32.mrf.mxu0
          %v680 = vpop.f32.mrf.mxu0
          %v681 = vpop.f32.mrf.mxu0
          %682 = vdwg.mxu0
          %s683 = scalar_lea.vmem [#allocation2], 1
          %v684 = vld [vmem:[%s683] sm:$0x1]
          %v685 = vsel %vm492, %v678, -inf
          %v686 = vrot.slane %v685, 4
          %v687 = vmax.f32 %v685, %v686
          %v688 = vrot.slane %v687, 2
          %v689 = vmax.f32 %v687, %v688
          %v690 = vrot.slane %v689, 1
          %v691 = vmax.f32 %v689, %v690
          %v692 = vmax.f32 %v684, %v691
          %v693 = vsub.f32 %v684, %v692
          %v694 = vmul.f32 %v693, 1.442695
          %v695 = vpow.pop %v694
          %v697 = vlaneseq
          %v698 = vshrl.u32 %v697, 7
          %v699 = vsub.s32 0, %v698
          %v700 = vrot.slane %v692, %v699
          %v702 = vsub.f32 %v678, %v700
          %v703 = vmul.f32 %v702, 1.442695
          %v704 = vpow.pop %v703
          %s705 = scalar_lea.vmem [#allocation3], 1
          %v706 = vld [vmem:[%s705] sm:$0x1]
          %v707 = vmul.f32 %v695, %v706
          %v708 = vsel %vm492, %v704, 0.0
          %v709 = vrot.slane %v708, 4
          %v710 = vadd.f32 %v708, %v709
          %v711 = vrot.slane %v710, 2
          %v712 = vadd.f32 %v710, %v711
          %v713 = vrot.slane %v712, 1
          %v714 = vadd.f32 %v712, %v713
          %v715 = vadd.f32 %v707, %v714
          %716 = vst.msk [vmem:[%s705] sm:$0x1] %vm523, %v715
          %v717 = vpack.c.bf16 %v704, %v704
          %719 = vrot.lane.b32.xlu0 %v630, 96
          %v720 = vpop.permute.xlu0 %719
          %722 = vxpose.xlu0.c.b16.start [1/8] %v720, 128
          %723 = vxpose.xlu0.c.b16.cont [2/8] 0, 128
          %724 = vxpose.xlu0.c.b16.cont [3/8] 0, 128
          %725 = vxpose.xlu0.c.b16.cont [4/8] 0, 128
          %726 = vxpose.xlu0.c.b16.cont [5/8] 0, 128
          %727 = vxpose.xlu0.c.b16.cont [6/8] 0, 128
          %728 = vxpose.xlu0.c.b16.cont [7/8] 0, 128
          %729 = vxpose.xlu0.c.b16.end [8/8] 0, 128
          %v730 = vpop.trf.xlu0
          %v731 = vpop.trf.xlu0
          %v732 = vpop.trf.xlu0
          %v733 = vpop.trf.xlu0
          %v734 = vpop.trf.xlu0
          %v735 = vpop.trf.xlu0
          %v736 = vpop.trf.xlu0
          %v737 = vpop.trf.xlu0
          %v739 = vsel %vm492, %v730, 0
          %v742 = vsel %vm492, %v731, 0
          %v745 = vsel %vm548, %v717, 0
          %747 = vmatprep.subr.bf16.mxu0 0
          %748 = vmatpush1.bf16.msra.mxu0 0
          %749 = vmatprep.subr.bf16.mxu0 0
          %750 = vmatpush1.bf16.msra.mxu0 0
          %751 = vmatprep.subr.bf16.mxu0 0
          %752 = vmatpush1.bf16.msra.mxu0 0
          %753 = vmatprep.subr.bf16.mxu0 0
          %754 = vmatpush1.bf16.msra.mxu0 0
          %755 = vmatprep.subr.bf16.mxu0 0
          %756 = vmatpush1.bf16.msra.mxu0 0
          %757 = vmatprep.subr.bf16.mxu0 0
          %758 = vmatpush1.bf16.msra.mxu0 0
          %759 = vmatprep.subr.bf16.mxu0 0
          %760 = vmatpush1.bf16.msra.mxu0 0
          %761 = vmatprep.subr.bf16.mxu0 0
          %762 = vmatpush1.bf16.msra.mxu0 %v745
          %763 = vmatprep.subr.bf16.mxu0 0
          %764 = vmatpush2.bf16.msra.mxu0 0
          %765 = vmatprep.subr.bf16.mxu0 0
          %766 = vmatpush2.bf16.msra.mxu0 0
          %767 = vmatprep.subr.bf16.mxu0 0
          %768 = vmatpush2.bf16.msra.mxu0 0
          %769 = vmatprep.subr.bf16.mxu0 0
          %770 = vmatpush2.bf16.msra.mxu0 0
          %771 = vmatprep.subr.bf16.mxu0 0
          %772 = vmatpush2.bf16.msra.mxu0 0
          %773 = vmatprep.subr.bf16.mxu0 0
          %774 = vmatpush2.bf16.msra.mxu0 0
          %775 = vmatprep.subr.bf16.mxu0 0
          %776 = vmatpush2.bf16.msra.mxu0 0
          %777 = vmatprep.subr.bf16.mxu0 0
          %778 = vmatpush2.bf16.msra.mxu0 0
          %779 = vmatprep.mubr.bf16.mxu0 0
          %780 = vmatmul.mubr.bf16.gmra.mxu0 %v739
          %v781 = vpop.f32.mrf.mxu0
          %v782 = vadd.f32 0.0, %v781
          %v783 = vpop.f32.mrf.mxu0
          %v784 = vpop.f32.mrf.mxu0
          %v785 = vadd.f32 0.0, %v784
          %v786 = vpop.f32.mrf.mxu0
          %787 = vmatprep.mubr.bf16.mxu0 0
          %788 = vmatmul.mubr.bf16.gmra.mxu0 %v742
          %v789 = vpop.f32.mrf.mxu0
          %v790 = vadd.f32 0.0, %v789
          %v791 = vpop.f32.mrf.mxu0
          %v792 = vpop.f32.mrf.mxu0
          %v793 = vadd.f32 0.0, %v792
          %v794 = vpop.f32.mrf.mxu0
          %795 = vdwg.mxu0
          %s796 = scalar_lea.vmem [#allocation4], 32
          %v797 = vld [vmem:[%s796] sm:$0xff]
          %v798 = vld [vmem:[%s796 + $0x8] sm:$0xff]
          %v799 = vld [vmem:[%s796 + $0x10] sm:$0xff]
          %v800 = vld [vmem:[%s796 + $0x18] sm:$0xff]
          %v802 = vlaneseq
          %v803 = vshrl.u32 %v802, 7
          %v804 = vsub.s32 0, %v803
          %v805 = vrot.slane %v695, %v804
          %v807 = vmul.f32 %v805, %v797
          %v808 = vmul.f32 %v805, %v798
          %v809 = vmul.f32 %v805, %v799
          %v810 = vmul.f32 %v805, %v800
          %v811 = vadd.f32 %v807, %v782
          %v812 = vadd.f32 %v808, %v785
          %v813 = vadd.f32 %v809, %v790
          %v814 = vadd.f32 %v810, %v793
          %815 = vst.msk [vmem:[%s796] sm:$0xff] %vm492, %v811
          %816 = vst.msk [vmem:[%s796 + $0x8] sm:$0xff] %vm492, %v812
          %817 = vst.msk [vmem:[%s796 + $0x10] sm:$0xff] %vm492, %v813
          %818 = vst.msk [vmem:[%s796 + $0x18] sm:$0xff] %vm492, %v814
          %819 = vst.msk [vmem:[%s683] sm:$0x1] %vm523, %v692
          %v820 = vld [vmem:[%s378] sm:$0xff]
          %v821 = vmul.f32 %v820, 0.17677669
          %v822 = vpack.c.bf16 %v821, %v821
          %v823 = vld [vmem:[%s308] sm:$0xff]
          %v824 = vpack.c.bf16 %v823, %v823
          %v825 = vld [vmem:[%s317] sm:$0xff]
          %v826 = vpack.c.bf16 %v825, %v825
          %828 = vrot.lane.b32.xlu0 %v824, 64
          %v829 = vpop.permute.xlu0 %828
          %831 = vrot.lane.b32.xlu0 %v822, 64
          %v832 = vpop.permute.xlu0 %831
          %v834 = vsel %vm444, %v829, 0
          %v837 = vsel %vm444, %v832, 0
          %839 = vmatprep.subr.bf16.mxu0 0
          %840 = vmatpush1.bf16.xpose.msra.mxu0 0
          %841 = vmatprep.subr.bf16.mxu0 0
          %842 = vmatpush1.bf16.xpose.msra.mxu0 0
          %843 = vmatprep.subr.bf16.mxu0 0
          %844 = vmatpush1.bf16.xpose.msra.mxu0 0
          %845 = vmatprep.subr.bf16.mxu0 0
          %846 = vmatpush1.bf16.xpose.msra.mxu0 0
          %847 = vmatprep.subr.bf16.mxu0 0
          %848 = vmatpush1.bf16.xpose.msra.mxu0 0
          %849 = vmatprep.subr.bf16.mxu0 0
          %850 = vmatpush1.bf16.xpose.msra.mxu0 0
          %851 = vmatprep.subr.bf16.mxu0 0
          %852 = vmatpush1.bf16.xpose.msra.mxu0 0
          %853 = vmatprep.subr.bf16.mxu0 0
          %854 = vmatpush1.bf16.xpose.msra.mxu0 %v837
          %855 = vmatprep.subr.bf16.mxu0 0
          %856 = vmatpush2.bf16.xpose.msra.mxu0 0
          %857 = vmatprep.subr.bf16.mxu0 0
          %858 = vmatpush2.bf16.xpose.msra.mxu0 0
          %859 = vmatprep.subr.bf16.mxu0 0
          %860 = vmatpush2.bf16.xpose.msra.mxu0 0
          %861 = vmatprep.subr.bf16.mxu0 0
          %862 = vmatpush2.bf16.xpose.msra.mxu0 0
          %863 = vmatprep.subr.bf16.mxu0 0
          %864 = vmatpush2.bf16.xpose.msra.mxu0 0
          %865 = vmatprep.subr.bf16.mxu0 0
          %866 = vmatpush2.bf16.xpose.msra.mxu0 0
          %867 = vmatprep.subr.bf16.mxu0 0
          %868 = vmatpush2.bf16.xpose.msra.mxu0 0
          %869 = vmatprep.subr.bf16.mxu0 0
          %870 = vmatpush2.bf16.xpose.msra.mxu0 0
          %871 = vmatprep.mubr.bf16.mxu0 0
          %872 = vmatmul.mubr.bf16.gmra.mxu0 %v834
          %v873 = vpop.f32.mrf.mxu0
          %v874 = vadd.f32 0.0, %v873
          %v875 = vpop.f32.mrf.mxu0
          %v876 = vpop.f32.mrf.mxu0
          %v877 = vpop.f32.mrf.mxu0
          %878 = vdwg.mxu0
          %s879 = scalar_lea.vmem [#allocation2], 2
          %v880 = vld [vmem:[%s879] sm:$0x1]
          %v881 = vsel %vm492, %v874, -inf
          %v882 = vrot.slane %v881, 4
          %v883 = vmax.f32 %v881, %v882
          %v884 = vrot.slane %v883, 2
          %v885 = vmax.f32 %v883, %v884
          %v886 = vrot.slane %v885, 1
          %v887 = vmax.f32 %v885, %v886
          %v888 = vmax.f32 %v880, %v887
          %v889 = vsub.f32 %v880, %v888
          %v890 = vmul.f32 %v889, 1.442695
          %v891 = vpow.pop %v890
          %v893 = vlaneseq
          %v894 = vshrl.u32 %v893, 7
          %v895 = vsub.s32 0, %v894
          %v896 = vrot.slane %v888, %v895
          %v898 = vsub.f32 %v874, %v896
          %v899 = vmul.f32 %v898, 1.442695
          %v900 = vpow.pop %v899
          %s901 = scalar_lea.vmem [#allocation3], 2
          %v902 = vld [vmem:[%s901] sm:$0x1]
          %v903 = vmul.f32 %v891, %v902
          %v904 = vsel %vm492, %v900, 0.0
          %v905 = vrot.slane %v904, 4
          %v906 = vadd.f32 %v904, %v905
          %v907 = vrot.slane %v906, 2
          %v908 = vadd.f32 %v906, %v907
          %v909 = vrot.slane %v908, 1
          %v910 = vadd.f32 %v908, %v909
          %v911 = vadd.f32 %v903, %v910
          %912 = vst.msk [vmem:[%s901] sm:$0x1] %vm523, %v911
          %v913 = vpack.c.bf16 %v900, %v900
          %915 = vrot.lane.b32.xlu0 %v826, 64
          %v916 = vpop.permute.xlu0 %915
          %918 = vxpose.xlu0.c.b16.start [1/8] %v916, 128
          %919 = vxpose.xlu0.c.b16.cont [2/8] 0, 128
          %920 = vxpose.xlu0.c.b16.cont [3/8] 0, 128
          %921 = vxpose.xlu0.c.b16.cont [4/8] 0, 128
          %922 = vxpose.xlu0.c.b16.cont [5/8] 0, 128
          %923 = vxpose.xlu0.c.b16.cont [6/8] 0, 128
          %924 = vxpose.xlu0.c.b16.cont [7/8] 0, 128
          %925 = vxpose.xlu0.c.b16.end [8/8] 0, 128
          %v926 = vpop.trf.xlu0
          %v927 = vpop.trf.xlu0
          %v928 = vpop.trf.xlu0
          %v929 = vpop.trf.xlu0
          %v930 = vpop.trf.xlu0
          %v931 = vpop.trf.xlu0
          %v932 = vpop.trf.xlu0
          %v933 = vpop.trf.xlu0
          %v935 = vsel %vm492, %v926, 0
          %v938 = vsel %vm492, %v927, 0
          %v941 = vsel %vm548, %v913, 0
          %943 = vmatprep.subr.bf16.mxu0 0
          %944 = vmatpush1.bf16.msra.mxu0 0
          %945 = vmatprep.subr.bf16.mxu0 0
          %946 = vmatpush1.bf16.msra.mxu0 0
          %947 = vmatprep.subr.bf16.mxu0 0
          %948 = vmatpush1.bf16.msra.mxu0 0
          %949 = vmatprep.subr.bf16.mxu0 0
          %950 = vmatpush1.bf16.msra.mxu0 0
          %951 = vmatprep.subr.bf16.mxu0 0
          %952 = vmatpush1.bf16.msra.mxu0 0
          %953 = vmatprep.subr.bf16.mxu0 0
          %954 = vmatpush1.bf16.msra.mxu0 0
          %955 = vmatprep.subr.bf16.mxu0 0
          %956 = vmatpush1.bf16.msra.mxu0 0
          %957 = vmatprep.subr.bf16.mxu0 0
          %958 = vmatpush1.bf16.msra.mxu0 %v941
          %959 = vmatprep.subr.bf16.mxu0 0
          %960 = vmatpush2.bf16.msra.mxu0 0
          %961 = vmatprep.subr.bf16.mxu0 0
          %962 = vmatpush2.bf16.msra.mxu0 0
          %963 = vmatprep.subr.bf16.mxu0 0
          %964 = vmatpush2.bf16.msra.mxu0 0
          %965 = vmatprep.subr.bf16.mxu0 0
          %966 = vmatpush2.bf16.msra.mxu0 0
          %967 = vmatprep.subr.bf16.mxu0 0
          %968 = vmatpush2.bf16.msra.mxu0 0
          %969 = vmatprep.subr.bf16.mxu0 0
          %970 = vmatpush2.bf16.msra.mxu0 0
          %971 = vmatprep.subr.bf16.mxu0 0
          %972 = vmatpush2.bf16.msra.mxu0 0
          %973 = vmatprep.subr.bf16.mxu0 0
          %974 = vmatpush2.bf16.msra.mxu0 0
          %975 = vmatprep.mubr.bf16.mxu0 0
          %976 = vmatmul.mubr.bf16.gmra.mxu0 %v935
          %v977 = vpop.f32.mrf.mxu0
          %v978 = vadd.f32 0.0, %v977
          %v979 = vpop.f32.mrf.mxu0
          %v980 = vpop.f32.mrf.mxu0
          %v981 = vadd.f32 0.0, %v980
          %v982 = vpop.f32.mrf.mxu0
          %983 = vmatprep.mubr.bf16.mxu0 0
          %984 = vmatmul.mubr.bf16.gmra.mxu0 %v938
          %v985 = vpop.f32.mrf.mxu0
          %v986 = vadd.f32 0.0, %v985
          %v987 = vpop.f32.mrf.mxu0
          %v988 = vpop.f32.mrf.mxu0
          %v989 = vadd.f32 0.0, %v988
          %v990 = vpop.f32.mrf.mxu0
          %991 = vdwg.mxu0
          %s992 = scalar_lea.vmem [#allocation4], 64
          %v993 = vld [vmem:[%s992] sm:$0xff]
          %v994 = vld [vmem:[%s992 + $0x8] sm:$0xff]
          %v995 = vld [vmem:[%s992 + $0x10] sm:$0xff]
          %v996 = vld [vmem:[%s992 + $0x18] sm:$0xff]
          %v998 = vlaneseq
          %v999 = vshrl.u32 %v998, 7
          %v1000 = vsub.s32 0, %v999
          %v1001 = vrot.slane %v891, %v1000
          %v1003 = vmul.f32 %v1001, %v993
          %v1004 = vmul.f32 %v1001, %v994
          %v1005 = vmul.f32 %v1001, %v995
          %v1006 = vmul.f32 %v1001, %v996
          %v1007 = vadd.f32 %v1003, %v978
          %v1008 = vadd.f32 %v1004, %v981
          %v1009 = vadd.f32 %v1005, %v986
          %v1010 = vadd.f32 %v1006, %v989
          %1011 = vst.msk [vmem:[%s992] sm:$0xff] %vm492, %v1007
          %1012 = vst.msk [vmem:[%s992 + $0x8] sm:$0xff] %vm492, %v1008
          %1013 = vst.msk [vmem:[%s992 + $0x10] sm:$0xff] %vm492, %v1009
          %1014 = vst.msk [vmem:[%s992 + $0x18] sm:$0xff] %vm492, %v1010
          %1015 = vst.msk [vmem:[%s879] sm:$0x1] %vm523, %v888
          %v1016 = vld [vmem:[%s378] sm:$0xff]
          %v1017 = vmul.f32 %v1016, 0.17677669
          %v1018 = vpack.c.bf16 %v1017, %v1017
          %v1019 = vld [vmem:[%s308] sm:$0xff]
          %v1020 = vpack.c.bf16 %v1019, %v1019
          %v1021 = vld [vmem:[%s317] sm:$0xff]
          %v1022 = vpack.c.bf16 %v1021, %v1021
          %1024 = vrot.lane.b32.xlu0 %v1020, 32
          %v1025 = vpop.permute.xlu0 %1024
          %1027 = vrot.lane.b32.xlu0 %v1018, 32
          %v1028 = vpop.permute.xlu0 %1027
          %v1030 = vsel %vm444, %v1025, 0
          %v1033 = vsel %vm444, %v1028, 0
          %1035 = vmatprep.subr.bf16.mxu0 0
          %1036 = vmatpush1.bf16.xpose.msra.mxu0 0
          %1037 = vmatprep.subr.bf16.mxu0 0
          %1038 = vmatpush1.bf16.xpose.msra.mxu0 0
          %1039 = vmatprep.subr.bf16.mxu0 0
          %1040 = vmatpush1.bf16.xpose.msra.mxu0 0
          %1041 = vmatprep.subr.bf16.mxu0 0
          %1042 = vmatpush1.bf16.xpose.msra.mxu0 0
          %1043 = vmatprep.subr.bf16.mxu0 0
          %1044 = vmatpush1.bf16.xpose.msra.mxu0 0
          %1045 = vmatprep.subr.bf16.mxu0 0
          %1046 = vmatpush1.bf16.xpose.msra.mxu0 0
          %1047 = vmatprep.subr.bf16.mxu0 0
          %1048 = vmatpush1.bf16.xpose.msra.mxu0 0
          %1049 = vmatprep.subr.bf16.mxu0 0
          %1050 = vmatpush1.bf16.xpose.msra.mxu0 %v1033
          %1051 = vmatprep.subr.bf16.mxu0 0
          %1052 = vmatpush2.bf16.xpose.msra.mxu0 0
          %1053 = vmatprep.subr.bf16.mxu0 0
          %1054 = vmatpush2.bf16.xpose.msra.mxu0 0
          %1055 = vmatprep.subr.bf16.mxu0 0
          %1056 = vmatpush2.bf16.xpose.msra.mxu0 0
          %1057 = vmatprep.subr.bf16.mxu0 0
          %1058 = vmatpush2.bf16.xpose.msra.mxu0 0
          %1059 = vmatprep.subr.bf16.mxu0 0
          %1060 = vmatpush2.bf16.xpose.msra.mxu0 0
          %1061 = vmatprep.subr.bf16.mxu0 0
          %1062 = vmatpush2.bf16.xpose.msra.mxu0 0
          %1063 = vmatprep.subr.bf16.mxu0 0
          %1064 = vmatpush2.bf16.xpose.msra.mxu0 0
          %1065 = vmatprep.subr.bf16.mxu0 0
          %1066 = vmatpush2.bf16.xpose.msra.mxu0 0
          %1067 = vmatprep.mubr.bf16.mxu0 0
          %1068 = vmatmul.mubr.bf16.gmra.mxu0 %v1030
          %v1069 = vpop.f32.mrf.mxu0
          %v1070 = vadd.f32 0.0, %v1069
          %v1071 = vpop.f32.mrf.mxu0
          %v1072 = vpop.f32.mrf.mxu0
          %v1073 = vpop.f32.mrf.mxu0
          %1074 = vdwg.mxu0
          %s1075 = scalar_lea.vmem [#allocation2], 3
          %v1076 = vld [vmem:[%s1075] sm:$0x1]
          %v1077 = vsel %vm492, %v1070, -inf
          %v1078 = vrot.slane %v1077, 4
          %v1079 = vmax.f32 %v1077, %v1078
          %v1080 = vrot.slane %v1079, 2
          %v1081 = vmax.f32 %v1079, %v1080
          %v1082 = vrot.slane %v1081, 1
          %v1083 = vmax.f32 %v1081, %v1082
          %v1084 = vmax.f32 %v1076, %v1083
          %v1085 = vsub.f32 %v1076, %v1084
          %v1086 = vmul.f32 %v1085, 1.442695
          %v1087 = vpow.pop %v1086
          %v1089 = vlaneseq
          %v1090 = vshrl.u32 %v1089, 7
          %v1091 = vsub.s32 0, %v1090
          %v1092 = vrot.slane %v1084, %v1091
          %v1094 = vsub.f32 %v1070, %v1092
          %v1095 = vmul.f32 %v1094, 1.442695
          %v1096 = vpow.pop %v1095
          %s1097 = scalar_lea.vmem [#allocation3], 3
          %v1098 = vld [vmem:[%s1097] sm:$0x1]
          %v1099 = vmul.f32 %v1087, %v1098
          %v1100 = vsel %vm492, %v1096, 0.0
          %v1101 = vrot.slane %v1100, 4
          %v1102 = vadd.f32 %v1100, %v1101
          %v1103 = vrot.slane %v1102, 2
          %v1104 = vadd.f32 %v1102, %v1103
          %v1105 = vrot.slane %v1104, 1
          %v1106 = vadd.f32 %v1104, %v1105
          %v1107 = vadd.f32 %v1099, %v1106
          %1108 = vst.msk [vmem:[%s1097] sm:$0x1] %vm523, %v1107
          %v1109 = vpack.c.bf16 %v1096, %v1096
          %1111 = vrot.lane.b32.xlu0 %v1022, 32
          %v1112 = vpop.permute.xlu0 %1111
          %1114 = vxpose.xlu0.c.b16.start [1/8] %v1112, 128
          %1115 = vxpose.xlu0.c.b16.cont [2/8] 0, 128
          %1116 = vxpose.xlu0.c.b16.cont [3/8] 0, 128
          %1117 = vxpose.xlu0.c.b16.cont [4/8] 0, 128
          %1118 = vxpose.xlu0.c.b16.cont [5/8] 0, 128
          %1119 = vxpose.xlu0.c.b16.cont [6/8] 0, 128
          %1120 = vxpose.xlu0.c.b16.cont [7/8] 0, 128
          %1121 = vxpose.xlu0.c.b16.end [8/8] 0, 128
          %v1122 = vpop.trf.xlu0
          %v1123 = vpop.trf.xlu0
          %v1124 = vpop.trf.xlu0
          %v1125 = vpop.trf.xlu0
          %v1126 = vpop.trf.xlu0
          %v1127 = vpop.trf.xlu0
          %v1128 = vpop.trf.xlu0
          %v1129 = vpop.trf.xlu0
          %v1131 = vsel %vm492, %v1122, 0
          %v1134 = vsel %vm492, %v1123, 0
          %v1137 = vsel %vm548, %v1109, 0
          %1139 = vmatprep.subr.bf16.mxu0 0
          %1140 = vmatpush1.bf16.msra.mxu0 0
          %1141 = vmatprep.subr.bf16.mxu0 0
          %1142 = vmatpush1.bf16.msra.mxu0 0
          %1143 = vmatprep.subr.bf16.mxu0 0
          %1144 = vmatpush1.bf16.msra.mxu0 0
          %1145 = vmatprep.subr.bf16.mxu0 0
          %1146 = vmatpush1.bf16.msra.mxu0 0
          %1147 = vmatprep.subr.bf16.mxu0 0
          %1148 = vmatpush1.bf16.msra.mxu0 0
          %1149 = vmatprep.subr.bf16.mxu0 0
          %1150 = vmatpush1.bf16.msra.mxu0 0
          %1151 = vmatprep.subr.bf16.mxu0 0
          %1152 = vmatpush1.bf16.msra.mxu0 0
          %1153 = vmatprep.subr.bf16.mxu0 0
          %1154 = vmatpush1.bf16.msra.mxu0 %v1137
          %1155 = vmatprep.subr.bf16.mxu0 0
          %1156 = vmatpush2.bf16.msra.mxu0 0
          %1157 = vmatprep.subr.bf16.mxu0 0
          %1158 = vmatpush2.bf16.msra.mxu0 0
          %1159 = vmatprep.subr.bf16.mxu0 0
          %1160 = vmatpush2.bf16.msra.mxu0 0
          %1161 = vmatprep.subr.bf16.mxu0 0
          %1162 = vmatpush2.bf16.msra.mxu0 0
          %1163 = vmatprep.subr.bf16.mxu0 0
          %1164 = vmatpush2.bf16.msra.mxu0 0
          %1165 = vmatprep.subr.bf16.mxu0 0
          %1166 = vmatpush2.bf16.msra.mxu0 0
          %1167 = vmatprep.subr.bf16.mxu0 0
          %1168 = vmatpush2.bf16.msra.mxu0 0
          %1169 = vmatprep.subr.bf16.mxu0 0
          %1170 = vmatpush2.bf16.msra.mxu0 0
          %1171 = vmatprep.mubr.bf16.mxu0 0
          %1172 = vmatmul.mubr.bf16.gmra.mxu0 %v1131
          %v1173 = vpop.f32.mrf.mxu0
          %v1174 = vadd.f32 0.0, %v1173
          %v1175 = vpop.f32.mrf.mxu0
          %v1176 = vpop.f32.mrf.mxu0
          %v1177 = vadd.f32 0.0, %v1176
          %v1178 = vpop.f32.mrf.mxu0
          %1179 = vmatprep.mubr.bf16.mxu0 0
          %1180 = vmatmul.mubr.bf16.gmra.mxu0 %v1134
          %v1181 = vpop.f32.mrf.mxu0
          %v1182 = vadd.f32 0.0, %v1181
          %v1183 = vpop.f32.mrf.mxu0
          %v1184 = vpop.f32.mrf.mxu0
          %v1185 = vadd.f32 0.0, %v1184
          %v1186 = vpop.f32.mrf.mxu0
          %1187 = vdwg.mxu0
          %s1188 = scalar_lea.vmem [#allocation4], 96
          %v1189 = vld [vmem:[%s1188] sm:$0xff]
          %v1190 = vld [vmem:[%s1188 + $0x8] sm:$0xff]
          %v1191 = vld [vmem:[%s1188 + $0x10] sm:$0xff]
          %v1192 = vld [vmem:[%s1188 + $0x18] sm:$0xff]
          %v1194 = vlaneseq
          %v1195 = vshrl.u32 %v1194, 7
          %v1196 = vsub.s32 0, %v1195
          %v1197 = vrot.slane %v1087, %v1196
          %v1199 = vmul.f32 %v1197, %v1189
          %v1200 = vmul.f32 %v1197, %v1190
          %v1201 = vmul.f32 %v1197, %v1191
          %v1202 = vmul.f32 %v1197, %v1192
          %v1203 = vadd.f32 %v1199, %v1174
          %v1204 = vadd.f32 %v1200, %v1177
          %v1205 = vadd.f32 %v1201, %v1182
          %v1206 = vadd.f32 %v1202, %v1185
          %1207 = vst.msk [vmem:[%s1188] sm:$0xff] %vm492, %v1203
          %1208 = vst.msk [vmem:[%s1188 + $0x8] sm:$0xff] %vm492, %v1204
          %1209 = vst.msk [vmem:[%s1188 + $0x10] sm:$0xff] %vm492, %v1205
          %1210 = vst.msk [vmem:[%s1188 + $0x18] sm:$0xff] %vm492, %v1206
          %1211 = vst.msk [vmem:[%s1075] sm:$0x1] %vm523, %v1084
        $region56: #{tpu_custom_call.1} parent=39 // pred_fallthru
          _
        %p1212 = scmp.eq.s32.totalorder %s432, 1
        // Predicated region
        $region57: #{tpu_custom_call.1} parent=39 // pred_check
          %p1213 = pneg %p1212
        $region58: #{tpu_custom_call.1} parent=39 // pred_check_branch
          %1215 = sbr.rel (%p1213) target = $region60
        $region59: #{tpu_custom_call.1} parent=39 // pred_region
          %v1216 = vld [vmem:[%s391] sm:$0xff]
          %v1217 = vld [vmem:[%s378] sm:$0xff]
          %v1218 = vmul.f32 %v1217, 0.17677669
          %v1219 = vpack.c.bf16 %v1218, %v1218
          %v1220 = vld [vmem:[%s308] sm:$0xff]
          %v1221 = vpack.c.bf16 %v1220, %v1220
          %v1222 = vld [vmem:[%s317] sm:$0xff]
          %v1223 = vpack.c.bf16 %v1222, %v1222
          %1225 = vset.pattern.permute.xlu0 0
          %1226 = vperm.xlu0 %1225, %v1216
          %v1227 = vpop.permute.xlu0 %1226
          %vm1229 = vcmask 261120
          %v1231 = vsel %vm1229, %v1221, 0
          %v1234 = vsel %vm1229, %v1219, 0
          %1236 = vmatprep.subr.bf16.mxu0 0
          %1237 = vmatpush1.bf16.xpose.msra.mxu0 0
          %1238 = vmatprep.subr.bf16.mxu0 0
          %1239 = vmatpush1.bf16.xpose.msra.mxu0 0
          %1240 = vmatprep.subr.bf16.mxu0 0
          %1241 = vmatpush1.bf16.xpose.msra.mxu0 0
          %1242 = vmatprep.subr.bf16.mxu0 0
          %1243 = vmatpush1.bf16.xpose.msra.mxu0 0
          %1244 = vmatprep.subr.bf16.mxu0 0
          %1245 = vmatpush1.bf16.xpose.msra.mxu0 0
          %1246 = vmatprep.subr.bf16.mxu0 0
          %1247 = vmatpush1.bf16.xpose.msra.mxu0 0
          %1248 = vmatprep.subr.bf16.mxu0 0
          %1249 = vmatpush1.bf16.xpose.msra.mxu0 0
          %1250 = vmatprep.subr.bf16.mxu0 0
          %1251 = vmatpush1.bf16.xpose.msra.mxu0 %v1234
          %1252 = vmatprep.subr.bf16.mxu0 0
          %1253 = vmatpush2.bf16.xpose.msra.mxu0 0
          %1254 = vmatprep.subr.bf16.mxu0 0
          %1255 = vmatpush2.bf16.xpose.msra.mxu0 0
          %1256 = vmatprep.subr.bf16.mxu0 0
          %1257 = vmatpush2.bf16.xpose.msra.mxu0 0
          %1258 = vmatprep.subr.bf16.mxu0 0
          %1259 = vmatpush2.bf16.xpose.msra.mxu0 0
          %1260 = vmatprep.subr.bf16.mxu0 0
          %1261 = vmatpush2.bf16.xpose.msra.mxu0 0
          %1262 = vmatprep.subr.bf16.mxu0 0
          %1263 = vmatpush2.bf16.xpose.msra.mxu0 0
          %1264 = vmatprep.subr.bf16.mxu0 0
          %1265 = vmatpush2.bf16.xpose.msra.mxu0 0
          %1266 = vmatprep.subr.bf16.mxu0 0
          %1267 = vmatpush2.bf16.xpose.msra.mxu0 0
          %1268 = vmatprep.mubr.bf16.mxu0 0
          %1269 = vmatmul.mubr.bf16.gmra.mxu0 %v1231
          %v1270 = vpop.f32.mrf.mxu0
          %v1271 = vadd.f32 %v1227, %v1270
          %v1272 = vpop.f32.mrf.mxu0
          %v1273 = vpop.f32.mrf.mxu0
          %v1274 = vpop.f32.mrf.mxu0
          %1275 = vdwg.mxu0
          %v1276 = vld [vmem:[#allocation2] sm:$0x1]
          %vm1277 = vcmask 64512
          %v1278 = vsel %vm1277, %v1271, -inf
          %v1279 = vrot.slane %v1278, 4
          %v1280 = vmax.f32 %v1278, %v1279
          %v1281 = vrot.slane %v1280, 2
          %v1282 = vmax.f32 %v1280, %v1281
          %v1283 = vrot.slane %v1282, 1
          %v1284 = vmax.f32 %v1282, %v1283
          %v1285 = vmax.f32 %v1276, %v1284
          %v1286 = vsub.f32 %v1276, %v1285
          %v1287 = vmul.f32 %v1286, 1.442695
          %v1288 = vpow.pop %v1287
          %v1290 = vlaneseq
          %v1291 = vshrl.u32 %v1290, 7
          %v1292 = vsub.s32 0, %v1291
          %v1293 = vrot.slane %v1285, %v1292
          %v1295 = vsub.f32 %v1271, %v1293
          %v1296 = vmul.f32 %v1295, 1.442695
          %v1297 = vpow.pop %v1296
          %v1298 = vld [vmem:[#allocation3] sm:$0x1]
          %v1299 = vmul.f32 %v1288, %v1298
          %v1300 = vsel %vm1277, %v1297, 0.0
          %v1301 = vrot.slane %v1300, 4
          %v1302 = vadd.f32 %v1300, %v1301
          %v1303 = vrot.slane %v1302, 2
          %v1304 = vadd.f32 %v1302, %v1303
          %v1305 = vrot.slane %v1304, 1
          %v1306 = vadd.f32 %v1304, %v1305
          %v1307 = vadd.f32 %v1299, %v1306
          %vm1308 = vcmask 57344
          %1309 = vst.msk [vmem:[#allocation3] sm:$0x1] %vm1308, %v1307
          %v1310 = vpack.c.bf16 %v1297, %v1297
          %1311 = vxpose.xlu0.c.b16.start [1/8] %v1223, 128
          %1312 = vxpose.xlu0.c.b16.cont [2/8] 0, 128
          %1313 = vxpose.xlu0.c.b16.cont [3/8] 0, 128
          %1314 = vxpose.xlu0.c.b16.cont [4/8] 0, 128
          %1315 = vxpose.xlu0.c.b16.cont [5/8] 0, 128
          %1316 = vxpose.xlu0.c.b16.cont [6/8] 0, 128
          %1317 = vxpose.xlu0.c.b16.cont [7/8] 0, 128
          %1318 = vxpose.xlu0.c.b16.end [8/8] 0, 128
          %v1319 = vpop.trf.xlu0
          %v1320 = vpop.trf.xlu0
          %v1321 = vpop.trf.xlu0
          %v1322 = vpop.trf.xlu0
          %v1323 = vpop.trf.xlu0
          %v1324 = vpop.trf.xlu0
          %v1325 = vpop.trf.xlu0
          %v1326 = vpop.trf.xlu0
          %v1328 = vsel %vm1277, %v1319, 0
          %v1331 = vsel %vm1277, %v1320, 0
          %vm1333 = vcmask 1043456
          %v1335 = vsel %vm1333, %v1310, 0
          %1337 = vmatprep.subr.bf16.mxu0 0
          %1338 = vmatpush1.bf16.msra.mxu0 0
          %1339 = vmatprep.subr.bf16.mxu0 0
          %1340 = vmatpush1.bf16.msra.mxu0 0
          %1341 = vmatprep.subr.bf16.mxu0 0
          %1342 = vmatpush1.bf16.msra.mxu0 0
          %1343 = vmatprep.subr.bf16.mxu0 0
          %1344 = vmatpush1.bf16.msra.mxu0 0
          %1345 = vmatprep.subr.bf16.mxu0 0
          %1346 = vmatpush1.bf16.msra.mxu0 0
          %1347 = vmatprep.subr.bf16.mxu0 0
          %1348 = vmatpush1.bf16.msra.mxu0 0
          %1349 = vmatprep.subr.bf16.mxu0 0
          %1350 = vmatpush1.bf16.msra.mxu0 0
          %1351 = vmatprep.subr.bf16.mxu0 0
          %1352 = vmatpush1.bf16.msra.mxu0 %v1335
          %1353 = vmatprep.subr.bf16.mxu0 0
          %1354 = vmatpush2.bf16.msra.mxu0 0
          %1355 = vmatprep.subr.bf16.mxu0 0
          %1356 = vmatpush2.bf16.msra.mxu0 0
          %1357 = vmatprep.subr.bf16.mxu0 0
          %1358 = vmatpush2.bf16.msra.mxu0 0
          %1359 = vmatprep.subr.bf16.mxu0 0
          %1360 = vmatpush2.bf16.msra.mxu0 0
          %1361 = vmatprep.subr.bf16.mxu0 0
          %1362 = vmatpush2.bf16.msra.mxu0 0
          %1363 = vmatprep.subr.bf16.mxu0 0
          %1364 = vmatpush2.bf16.msra.mxu0 0
          %1365 = vmatprep.subr.bf16.mxu0 0
          %1366 = vmatpush2.bf16.msra.mxu0 0
          %1367 = vmatprep.subr.bf16.mxu0 0
          %1368 = vmatpush2.bf16.msra.mxu0 0
          %1369 = vmatprep.mubr.bf16.mxu0 0
          %1370 = vmatmul.mubr.bf16.gmra.mxu0 %v1328
          %v1371 = vpop.f32.mrf.mxu0
          %v1372 = vadd.f32 0.0, %v1371
          %v1373 = vpop.f32.mrf.mxu0
          %v1374 = vpop.f32.mrf.mxu0
          %v1375 = vadd.f32 0.0, %v1374
          %v1376 = vpop.f32.mrf.mxu0
          %1377 = vmatprep.mubr.bf16.mxu0 0
          %1378 = vmatmul.mubr.bf16.gmra.mxu0 %v1331
          %v1379 = vpop.f32.mrf.mxu0
          %v1380 = vadd.f32 0.0, %v1379
          %v1381 = vpop.f32.mrf.mxu0
          %v1382 = vpop.f32.mrf.mxu0
          %v1383 = vadd.f32 0.0, %v1382
          %v1384 = vpop.f32.mrf.mxu0
          %1385 = vdwg.mxu0
          %v1386 = vld [vmem:[#allocation4] sm:$0xff]
          %v1387 = vld [vmem:[#allocation4 + $0x8] sm:$0xff]
          %v1388 = vld [vmem:[#allocation4 + $0x10] sm:$0xff]
          %v1389 = vld [vmem:[#allocation4 + $0x18] sm:$0xff]
          %v1391 = vlaneseq
          %v1392 = vshrl.u32 %v1391, 7
          %v1393 = vsub.s32 0, %v1392
          %v1394 = vrot.slane %v1288, %v1393
          %v1396 = vmul.f32 %v1394, %v1386
          %v1397 = vmul.f32 %v1394, %v1387
          %v1398 = vmul.f32 %v1394, %v1388
          %v1399 = vmul.f32 %v1394, %v1389
          %v1400 = vadd.f32 %v1396, %v1372
          %v1401 = vadd.f32 %v1397, %v1375
          %v1402 = vadd.f32 %v1398, %v1380
          %v1403 = vadd.f32 %v1399, %v1383
          %1404 = vst.msk [vmem:[#allocation4] sm:$0xff] %vm1277, %v1400
          %1405 = vst.msk [vmem:[#allocation4 + $0x8] sm:$0xff] %vm1277, %v1401
          %1406 = vst.msk [vmem:[#allocation4 + $0x10] sm:$0xff] %vm1277, %v1402
          %1407 = vst.msk [vmem:[#allocation4 + $0x18] sm:$0xff] %vm1277, %v1403
          %1408 = vst.msk [vmem:[#allocation2] sm:$0x1] %vm1308, %v1285
          %v1409 = vld [vmem:[%s378] sm:$0xff]
          %v1410 = vmul.f32 %v1409, 0.17677669
          %v1411 = vpack.c.bf16 %v1410, %v1410
          %v1412 = vld [vmem:[%s308] sm:$0xff]
          %v1413 = vpack.c.bf16 %v1412, %v1412
          %v1414 = vld [vmem:[%s317] sm:$0xff]
          %v1415 = vpack.c.bf16 %v1414, %v1414
          %1417 = vrot.lane.b32.xlu0 %v1413, 96
          %v1418 = vpop.permute.xlu0 %1417
          %1420 = vrot.lane.b32.xlu0 %v1411, 96
          %v1421 = vpop.permute.xlu0 %1420
          %v1423 = vsel %vm1229, %v1418, 0
          %v1426 = vsel %vm1229, %v1421, 0
          %1428 = vmatprep.subr.bf16.mxu0 0
          %1429 = vmatpush1.bf16.xpose.msra.mxu0 0
          %1430 = vmatprep.subr.bf16.mxu0 0
          %1431 = vmatpush1.bf16.xpose.msra.mxu0 0
          %1432 = vmatprep.subr.bf16.mxu0 0
          %1433 = vmatpush1.bf16.xpose.msra.mxu0 0
          %1434 = vmatprep.subr.bf16.mxu0 0
          %1435 = vmatpush1.bf16.xpose.msra.mxu0 0
          %1436 = vmatprep.subr.bf16.mxu0 0
          %1437 = vmatpush1.bf16.xpose.msra.mxu0 0
          %1438 = vmatprep.subr.bf16.mxu0 0
          %1439 = vmatpush1.bf16.xpose.msra.mxu0 0
          %1440 = vmatprep.subr.bf16.mxu0 0
          %1441 = vmatpush1.bf16.xpose.msra.mxu0 0
          %1442 = vmatprep.subr.bf16.mxu0 0
          %1443 = vmatpush1.bf16.xpose.msra.mxu0 %v1426
          %1444 = vmatprep.subr.bf16.mxu0 0
          %1445 = vmatpush2.bf16.xpose.msra.mxu0 0
          %1446 = vmatprep.subr.bf16.mxu0 0
          %1447 = vmatpush2.bf16.xpose.msra.mxu0 0
          %1448 = vmatprep.subr.bf16.mxu0 0
          %1449 = vmatpush2.bf16.xpose.msra.mxu0 0
          %1450 = vmatprep.subr.bf16.mxu0 0
          %1451 = vmatpush2.bf16.xpose.msra.mxu0 0
          %1452 = vmatprep.subr.bf16.mxu0 0
          %1453 = vmatpush2.bf16.xpose.msra.mxu0 0
          %1454 = vmatprep.subr.bf16.mxu0 0
          %1455 = vmatpush2.bf16.xpose.msra.mxu0 0
          %1456 = vmatprep.subr.bf16.mxu0 0
          %1457 = vmatpush2.bf16.xpose.msra.mxu0 0
          %1458 = vmatprep.subr.bf16.mxu0 0
          %1459 = vmatpush2.bf16.xpose.msra.mxu0 0
          %1460 = vmatprep.mubr.bf16.mxu0 0
          %1461 = vmatmul.mubr.bf16.gmra.mxu0 %v1423
          %v1462 = vpop.f32.mrf.mxu0
          %v1463 = vadd.f32 %v1227, %v1462
          %v1464 = vpop.f32.mrf.mxu0
          %v1465 = vpop.f32.mrf.mxu0
          %v1466 = vpop.f32.mrf.mxu0
          %1467 = vdwg.mxu0
          %s1468 = scalar_lea.vmem [#allocation2], 1
          %v1469 = vld [vmem:[%s1468] sm:$0x1]
          %v1470 = vsel %vm1277, %v1463, -inf
          %v1471 = vrot.slane %v1470, 4
          %v1472 = vmax.f32 %v1470, %v1471
          %v1473 = vrot.slane %v1472, 2
          %v1474 = vmax.f32 %v1472, %v1473
          %v1475 = vrot.slane %v1474, 1
          %v1476 = vmax.f32 %v1474, %v1475
          %v1477 = vmax.f32 %v1469, %v1476
          %v1478 = vsub.f32 %v1469, %v1477
          %v1479 = vmul.f32 %v1478, 1.442695
          %v1480 = vpow.pop %v1479
          %v1482 = vlaneseq
          %v1483 = vshrl.u32 %v1482, 7
          %v1484 = vsub.s32 0, %v1483
          %v1485 = vrot.slane %v1477, %v1484
          %v1487 = vsub.f32 %v1463, %v1485
          %v1488 = vmul.f32 %v1487, 1.442695
          %v1489 = vpow.pop %v1488
          %s1490 = scalar_lea.vmem [#allocation3], 1
          %v1491 = vld [vmem:[%s1490] sm:$0x1]
          %v1492 = vmul.f32 %v1480, %v1491
          %v1493 = vsel %vm1277, %v1489, 0.0
          %v1494 = vrot.slane %v1493, 4
          %v1495 = vadd.f32 %v1493, %v1494
          %v1496 = vrot.slane %v1495, 2
          %v1497 = vadd.f32 %v1495, %v1496
          %v1498 = vrot.slane %v1497, 1
          %v1499 = vadd.f32 %v1497, %v1498
          %v1500 = vadd.f32 %v1492, %v1499
          %1501 = vst.msk [vmem:[%s1490] sm:$0x1] %vm1308, %v1500
          %v1502 = vpack.c.bf16 %v1489, %v1489
          %1504 = vrot.lane.b32.xlu0 %v1415, 96
          %v1505 = vpop.permute.xlu0 %1504
          %1507 = vxpose.xlu0.c.b16.start [1/8] %v1505, 128
          %1508 = vxpose.xlu0.c.b16.cont [2/8] 0, 128
          %1509 = vxpose.xlu0.c.b16.cont [3/8] 0, 128
          %1510 = vxpose.xlu0.c.b16.cont [4/8] 0, 128
          %1511 = vxpose.xlu0.c.b16.cont [5/8] 0, 128
          %1512 = vxpose.xlu0.c.b16.cont [6/8] 0, 128
          %1513 = vxpose.xlu0.c.b16.cont [7/8] 0, 128
          %1514 = vxpose.xlu0.c.b16.end [8/8] 0, 128
          %v1515 = vpop.trf.xlu0
          %v1516 = vpop.trf.xlu0
          %v1517 = vpop.trf.xlu0
          %v1518 = vpop.trf.xlu0
          %v1519 = vpop.trf.xlu0
          %v1520 = vpop.trf.xlu0
          %v1521 = vpop.trf.xlu0
          %v1522 = vpop.trf.xlu0
          %v1524 = vsel %vm1277, %v1515, 0
          %v1527 = vsel %vm1277, %v1516, 0
          %v1530 = vsel %vm1333, %v1502, 0
          %1532 = vmatprep.subr.bf16.mxu0 0
          %1533 = vmatpush1.bf16.msra.mxu0 0
          %1534 = vmatprep.subr.bf16.mxu0 0
          %1535 = vmatpush1.bf16.msra.mxu0 0
          %1536 = vmatprep.subr.bf16.mxu0 0
          %1537 = vmatpush1.bf16.msra.mxu0 0
          %1538 = vmatprep.subr.bf16.mxu0 0
          %1539 = vmatpush1.bf16.msra.mxu0 0
          %1540 = vmatprep.subr.bf16.mxu0 0
          %1541 = vmatpush1.bf16.msra.mxu0 0
          %1542 = vmatprep.subr.bf16.mxu0 0
          %1543 = vmatpush1.bf16.msra.mxu0 0
          %1544 = vmatprep.subr.bf16.mxu0 0
          %1545 = vmatpush1.bf16.msra.mxu0 0
          %1546 = vmatprep.subr.bf16.mxu0 0
          %1547 = vmatpush1.bf16.msra.mxu0 %v1530
          %1548 = vmatprep.subr.bf16.mxu0 0
          %1549 = vmatpush2.bf16.msra.mxu0 0
          %1550 = vmatprep.subr.bf16.mxu0 0
          %1551 = vmatpush2.bf16.msra.mxu0 0
          %1552 = vmatprep.subr.bf16.mxu0 0
          %1553 = vmatpush2.bf16.msra.mxu0 0
          %1554 = vmatprep.subr.bf16.mxu0 0
          %1555 = vmatpush2.bf16.msra.mxu0 0
          %1556 = vmatprep.subr.bf16.mxu0 0
          %1557 = vmatpush2.bf16.msra.mxu0 0
          %1558 = vmatprep.subr.bf16.mxu0 0
          %1559 = vmatpush2.bf16.msra.mxu0 0
          %1560 = vmatprep.subr.bf16.mxu0 0
          %1561 = vmatpush2.bf16.msra.mxu0 0
          %1562 = vmatprep.subr.bf16.mxu0 0
          %1563 = vmatpush2.bf16.msra.mxu0 0
          %1564 = vmatprep.mubr.bf16.mxu0 0
          %1565 = vmatmul.mubr.bf16.gmra.mxu0 %v1524
          %v1566 = vpop.f32.mrf.mxu0
          %v1567 = vadd.f32 0.0, %v1566
          %v1568 = vpop.f32.mrf.mxu0
          %v1569 = vpop.f32.mrf.mxu0
          %v1570 = vadd.f32 0.0, %v1569
          %v1571 = vpop.f32.mrf.mxu0
          %1572 = vmatprep.mubr.bf16.mxu0 0
          %1573 = vmatmul.mubr.bf16.gmra.mxu0 %v1527
          %v1574 = vpop.f32.mrf.mxu0
          %v1575 = vadd.f32 0.0, %v1574
          %v1576 = vpop.f32.mrf.mxu0
          %v1577 = vpop.f32.mrf.mxu0
          %v1578 = vadd.f32 0.0, %v1577
          %v1579 = vpop.f32.mrf.mxu0
          %1580 = vdwg.mxu0
          %s1581 = scalar_lea.vmem [#allocation4], 32
          %v1582 = vld [vmem:[%s1581] sm:$0xff]
          %v1583 = vld [vmem:[%s1581 + $0x8] sm:$0xff]
          %v1584 = vld [vmem:[%s1581 + $0x10] sm:$0xff]
          %v1585 = vld [vmem:[%s1581 + $0x18] sm:$0xff]
          %v1587 = vlaneseq
          %v1588 = vshrl.u32 %v1587, 7
          %v1589 = vsub.s32 0, %v1588
          %v1590 = vrot.slane %v1480, %v1589
          %v1592 = vmul.f32 %v1590, %v1582
          %v1593 = vmul.f32 %v1590, %v1583
          %v1594 = vmul.f32 %v1590, %v1584
          %v1595 = vmul.f32 %v1590, %v1585
          %v1596 = vadd.f32 %v1592, %v1567
          %v1597 = vadd.f32 %v1593, %v1570
          %v1598 = vadd.f32 %v1594, %v1575
          %v1599 = vadd.f32 %v1595, %v1578
          %1600 = vst.msk [vmem:[%s1581] sm:$0xff] %vm1277, %v1596
          %1601 = vst.msk [vmem:[%s1581 + $0x8] sm:$0xff] %vm1277, %v1597
          %1602 = vst.msk [vmem:[%s1581 + $0x10] sm:$0xff] %vm1277, %v1598
          %1603 = vst.msk [vmem:[%s1581 + $0x18] sm:$0xff] %vm1277, %v1599
          %1604 = vst.msk [vmem:[%s1468] sm:$0x1] %vm1308, %v1477
          %v1605 = vld [vmem:[%s378] sm:$0xff]
          %v1606 = vmul.f32 %v1605, 0.17677669
          %v1607 = vpack.c.bf16 %v1606, %v1606
          %v1608 = vld [vmem:[%s308] sm:$0xff]
          %v1609 = vpack.c.bf16 %v1608, %v1608
          %v1610 = vld [vmem:[%s317] sm:$0xff]
          %v1611 = vpack.c.bf16 %v1610, %v1610
          %1613 = vrot.lane.b32.xlu0 %v1609, 64
          %v1614 = vpop.permute.xlu0 %1613
          %1616 = vrot.lane.b32.xlu0 %v1607, 64
          %v1617 = vpop.permute.xlu0 %1616
          %v1619 = vsel %vm1229, %v1614, 0
          %v1622 = vsel %vm1229, %v1617, 0
          %1624 = vmatprep.subr.bf16.mxu0 0
          %1625 = vmatpush1.bf16.xpose.msra.mxu0 0
          %1626 = vmatprep.subr.bf16.mxu0 0
          %1627 = vmatpush1.bf16.xpose.msra.mxu0 0
          %1628 = vmatprep.subr.bf16.mxu0 0
          %1629 = vmatpush1.bf16.xpose.msra.mxu0 0
          %1630 = vmatprep.subr.bf16.mxu0 0
          %1631 = vmatpush1.bf16.xpose.msra.mxu0 0
          %1632 = vmatprep.subr.bf16.mxu0 0
          %1633 = vmatpush1.bf16.xpose.msra.mxu0 0
          %1634 = vmatprep.subr.bf16.mxu0 0
          %1635 = vmatpush1.bf16.xpose.msra.mxu0 0
          %1636 = vmatprep.subr.bf16.mxu0 0
          %1637 = vmatpush1.bf16.xpose.msra.mxu0 0
          %1638 = vmatprep.subr.bf16.mxu0 0
          %1639 = vmatpush1.bf16.xpose.msra.mxu0 %v1622
          %1640 = vmatprep.subr.bf16.mxu0 0
          %1641 = vmatpush2.bf16.xpose.msra.mxu0 0
          %1642 = vmatprep.subr.bf16.mxu0 0
          %1643 = vmatpush2.bf16.xpose.msra.mxu0 0
          %1644 = vmatprep.subr.bf16.mxu0 0
          %1645 = vmatpush2.bf16.xpose.msra.mxu0 0
          %1646 = vmatprep.subr.bf16.mxu0 0
          %1647 = vmatpush2.bf16.xpose.msra.mxu0 0
          %1648 = vmatprep.subr.bf16.mxu0 0
          %1649 = vmatpush2.bf16.xpose.msra.mxu0 0
          %1650 = vmatprep.subr.bf16.mxu0 0
          %1651 = vmatpush2.bf16.xpose.msra.mxu0 0
          %1652 = vmatprep.subr.bf16.mxu0 0
          %1653 = vmatpush2.bf16.xpose.msra.mxu0 0
          %1654 = vmatprep.subr.bf16.mxu0 0
          %1655 = vmatpush2.bf16.xpose.msra.mxu0 0
          %1656 = vmatprep.mubr.bf16.mxu0 0
          %1657 = vmatmul.mubr.bf16.gmra.mxu0 %v1619
          %v1658 = vpop.f32.mrf.mxu0
          %v1659 = vadd.f32 %v1227, %v1658
          %v1660 = vpop.f32.mrf.mxu0
          %v1661 = vpop.f32.mrf.mxu0
          %v1662 = vpop.f32.mrf.mxu0
          %1663 = vdwg.mxu0
          %s1664 = scalar_lea.vmem [#allocation2], 2
          %v1665 = vld [vmem:[%s1664] sm:$0x1]
          %v1666 = vsel %vm1277, %v1659, -inf
          %v1667 = vrot.slane %v1666, 4
          %v1668 = vmax.f32 %v1666, %v1667
          %v1669 = vrot.slane %v1668, 2
          %v1670 = vmax.f32 %v1668, %v1669
          %v1671 = vrot.slane %v1670, 1
          %v1672 = vmax.f32 %v1670, %v1671
          %v1673 = vmax.f32 %v1665, %v1672
          %v1674 = vsub.f32 %v1665, %v1673
          %v1675 = vmul.f32 %v1674, 1.442695
          %v1676 = vpow.pop %v1675
          %v1678 = vlaneseq
          %v1679 = vshrl.u32 %v1678, 7
          %v1680 = vsub.s32 0, %v1679
          %v1681 = vrot.slane %v1673, %v1680
          %v1683 = vsub.f32 %v1659, %v1681
          %v1684 = vmul.f32 %v1683, 1.442695
          %v1685 = vpow.pop %v1684
          %s1686 = scalar_lea.vmem [#allocation3], 2
          %v1687 = vld [vmem:[%s1686] sm:$0x1]
          %v1688 = vmul.f32 %v1676, %v1687
          %v1689 = vsel %vm1277, %v1685, 0.0
          %v1690 = vrot.slane %v1689, 4
          %v1691 = vadd.f32 %v1689, %v1690
          %v1692 = vrot.slane %v1691, 2
          %v1693 = vadd.f32 %v1691, %v1692
          %v1694 = vrot.slane %v1693, 1
          %v1695 = vadd.f32 %v1693, %v1694
          %v1696 = vadd.f32 %v1688, %v1695
          %1697 = vst.msk [vmem:[%s1686] sm:$0x1] %vm1308, %v1696
          %v1698 = vpack.c.bf16 %v1685, %v1685
          %1700 = vrot.lane.b32.xlu0 %v1611, 64
          %v1701 = vpop.permute.xlu0 %1700
          %1703 = vxpose.xlu0.c.b16.start [1/8] %v1701, 128
          %1704 = vxpose.xlu0.c.b16.cont [2/8] 0, 128
          %1705 = vxpose.xlu0.c.b16.cont [3/8] 0, 128
          %1706 = vxpose.xlu0.c.b16.cont [4/8] 0, 128
          %1707 = vxpose.xlu0.c.b16.cont [5/8] 0, 128
          %1708 = vxpose.xlu0.c.b16.cont [6/8] 0, 128
          %1709 = vxpose.xlu0.c.b16.cont [7/8] 0, 128
          %1710 = vxpose.xlu0.c.b16.end [8/8] 0, 128
          %v1711 = vpop.trf.xlu0
          %v1712 = vpop.trf.xlu0
          %v1713 = vpop.trf.xlu0
          %v1714 = vpop.trf.xlu0
          %v1715 = vpop.trf.xlu0
          %v1716 = vpop.trf.xlu0
          %v1717 = vpop.trf.xlu0
          %v1718 = vpop.trf.xlu0
          %v1720 = vsel %vm1277, %v1711, 0
          %v1723 = vsel %vm1277, %v1712, 0
          %v1726 = vsel %vm1333, %v1698, 0
          %1728 = vmatprep.subr.bf16.mxu0 0
          %1729 = vmatpush1.bf16.msra.mxu0 0
          %1730 = vmatprep.subr.bf16.mxu0 0
          %1731 = vmatpush1.bf16.msra.mxu0 0
          %1732 = vmatprep.subr.bf16.mxu0 0
          %1733 = vmatpush1.bf16.msra.mxu0 0
          %1734 = vmatprep.subr.bf16.mxu0 0
          %1735 = vmatpush1.bf16.msra.mxu0 0
          %1736 = vmatprep.subr.bf16.mxu0 0
          %1737 = vmatpush1.bf16.msra.mxu0 0
          %1738 = vmatprep.subr.bf16.mxu0 0
          %1739 = vmatpush1.bf16.msra.mxu0 0
          %1740 = vmatprep.subr.bf16.mxu0 0
          %1741 = vmatpush1.bf16.msra.mxu0 0
          %1742 = vmatprep.subr.bf16.mxu0 0
          %1743 = vmatpush1.bf16.msra.mxu0 %v1726
          %1744 = vmatprep.subr.bf16.mxu0 0
          %1745 = vmatpush2.bf16.msra.mxu0 0
          %1746 = vmatprep.subr.bf16.mxu0 0
          %1747 = vmatpush2.bf16.msra.mxu0 0
          %1748 = vmatprep.subr.bf16.mxu0 0
          %1749 = vmatpush2.bf16.msra.mxu0 0
          %1750 = vmatprep.subr.bf16.mxu0 0
          %1751 = vmatpush2.bf16.msra.mxu0 0
          %1752 = vmatprep.subr.bf16.mxu0 0
          %1753 = vmatpush2.bf16.msra.mxu0 0
          %1754 = vmatprep.subr.bf16.mxu0 0
          %1755 = vmatpush2.bf16.msra.mxu0 0
          %1756 = vmatprep.subr.bf16.mxu0 0
          %1757 = vmatpush2.bf16.msra.mxu0 0
          %1758 = vmatprep.subr.bf16.mxu0 0
          %1759 = vmatpush2.bf16.msra.mxu0 0
          %1760 = vmatprep.mubr.bf16.mxu0 0
          %1761 = vmatmul.mubr.bf16.gmra.mxu0 %v1720
          %v1762 = vpop.f32.mrf.mxu0
          %v1763 = vadd.f32 0.0, %v1762
          %v1764 = vpop.f32.mrf.mxu0
          %v1765 = vpop.f32.mrf.mxu0
          %v1766 = vadd.f32 0.0, %v1765
          %v1767 = vpop.f32.mrf.mxu0
          %1768 = vmatprep.mubr.bf16.mxu0 0
          %1769 = vmatmul.mubr.bf16.gmra.mxu0 %v1723
          %v1770 = vpop.f32.mrf.mxu0
          %v1771 = vadd.f32 0.0, %v1770
          %v1772 = vpop.f32.mrf.mxu0
          %v1773 = vpop.f32.mrf.mxu0
          %v1774 = vadd.f32 0.0, %v1773
          %v1775 = vpop.f32.mrf.mxu0
          %1776 = vdwg.mxu0
          %s1777 = scalar_lea.vmem [#allocation4], 64
          %v1778 = vld [vmem:[%s1777] sm:$0xff]
          %v1779 = vld [vmem:[%s1777 + $0x8] sm:$0xff]
          %v1780 = vld [vmem:[%s1777 + $0x10] sm:$0xff]
          %v1781 = vld [vmem:[%s1777 + $0x18] sm:$0xff]
          %v1783 = vlaneseq
          %v1784 = vshrl.u32 %v1783, 7
          %v1785 = vsub.s32 0, %v1784
          %v1786 = vrot.slane %v1676, %v1785
          %v1788 = vmul.f32 %v1786, %v1778
          %v1789 = vmul.f32 %v1786, %v1779
          %v1790 = vmul.f32 %v1786, %v1780
          %v1791 = vmul.f32 %v1786, %v1781
          %v1792 = vadd.f32 %v1788, %v1763
          %v1793 = vadd.f32 %v1789, %v1766
          %v1794 = vadd.f32 %v1790, %v1771
          %v1795 = vadd.f32 %v1791, %v1774
          %1796 = vst.msk [vmem:[%s1777] sm:$0xff] %vm1277, %v1792
          %1797 = vst.msk [vmem:[%s1777 + $0x8] sm:$0xff] %vm1277, %v1793
          %1798 = vst.msk [vmem:[%s1777 + $0x10] sm:$0xff] %vm1277, %v1794
          %1799 = vst.msk [vmem:[%s1777 + $0x18] sm:$0xff] %vm1277, %v1795
          %1800 = vst.msk [vmem:[%s1664] sm:$0x1] %vm1308, %v1673
          %v1801 = vld [vmem:[%s378] sm:$0xff]
          %v1802 = vmul.f32 %v1801, 0.17677669
          %v1803 = vpack.c.bf16 %v1802, %v1802
          %v1804 = vld [vmem:[%s308] sm:$0xff]
          %v1805 = vpack.c.bf16 %v1804, %v1804
          %v1806 = vld [vmem:[%s317] sm:$0xff]
          %v1807 = vpack.c.bf16 %v1806, %v1806
          %1809 = vrot.lane.b32.xlu0 %v1805, 32
          %v1810 = vpop.permute.xlu0 %1809
          %1812 = vrot.lane.b32.xlu0 %v1803, 32
          %v1813 = vpop.permute.xlu0 %1812
          %v1815 = vsel %vm1229, %v1810, 0
          %v1818 = vsel %vm1229, %v1813, 0
          %1820 = vmatprep.subr.bf16.mxu0 0
          %1821 = vmatpush1.bf16.xpose.msra.mxu0 0
          %1822 = vmatprep.subr.bf16.mxu0 0
          %1823 = vmatpush1.bf16.xpose.msra.mxu0 0
          %1824 = vmatprep.subr.bf16.mxu0 0
          %1825 = vmatpush1.bf16.xpose.msra.mxu0 0
          %1826 = vmatprep.subr.bf16.mxu0 0
          %1827 = vmatpush1.bf16.xpose.msra.mxu0 0
          %1828 = vmatprep.subr.bf16.mxu0 0
          %1829 = vmatpush1.bf16.xpose.msra.mxu0 0
          %1830 = vmatprep.subr.bf16.mxu0 0
          %1831 = vmatpush1.bf16.xpose.msra.mxu0 0
          %1832 = vmatprep.subr.bf16.mxu0 0
          %1833 = vmatpush1.bf16.xpose.msra.mxu0 0
          %1834 = vmatprep.subr.bf16.mxu0 0
          %1835 = vmatpush1.bf16.xpose.msra.mxu0 %v1818
          %1836 = vmatprep.subr.bf16.mxu0 0
          %1837 = vmatpush2.bf16.xpose.msra.mxu0 0
          %1838 = vmatprep.subr.bf16.mxu0 0
          %1839 = vmatpush2.bf16.xpose.msra.mxu0 0
          %1840 = vmatprep.subr.bf16.mxu0 0
          %1841 = vmatpush2.bf16.xpose.msra.mxu0 0
          %1842 = vmatprep.subr.bf16.mxu0 0
          %1843 = vmatpush2.bf16.xpose.msra.mxu0 0
          %1844 = vmatprep.subr.bf16.mxu0 0
          %1845 = vmatpush2.bf16.xpose.msra.mxu0 0
          %1846 = vmatprep.subr.bf16.mxu0 0
          %1847 = vmatpush2.bf16.xpose.msra.mxu0 0
          %1848 = vmatprep.subr.bf16.mxu0 0
          %1849 = vmatpush2.bf16.xpose.msra.mxu0 0
          %1850 = vmatprep.subr.bf16.mxu0 0
          %1851 = vmatpush2.bf16.xpose.msra.mxu0 0
          %1852 = vmatprep.mubr.bf16.mxu0 0
          %1853 = vmatmul.mubr.bf16.gmra.mxu0 %v1815
          %v1854 = vpop.f32.mrf.mxu0
          %v1855 = vadd.f32 %v1227, %v1854
          %v1856 = vpop.f32.mrf.mxu0
          %v1857 = vpop.f32.mrf.mxu0
          %v1858 = vpop.f32.mrf.mxu0
          %1859 = vdwg.mxu0
          %s1860 = scalar_lea.vmem [#allocation2], 3
          %v1861 = vld [vmem:[%s1860] sm:$0x1]
          %v1862 = vsel %vm1277, %v1855, -inf
          %v1863 = vrot.slane %v1862, 4
          %v1864 = vmax.f32 %v1862, %v1863
          %v1865 = vrot.slane %v1864, 2
          %v1866 = vmax.f32 %v1864, %v1865
          %v1867 = vrot.slane %v1866, 1
          %v1868 = vmax.f32 %v1866, %v1867
          %v1869 = vmax.f32 %v1861, %v1868
          %v1870 = vsub.f32 %v1861, %v1869
          %v1871 = vmul.f32 %v1870, 1.442695
          %v1872 = vpow.pop %v1871
          %v1874 = vlaneseq
          %v1875 = vshrl.u32 %v1874, 7
          %v1876 = vsub.s32 0, %v1875
          %v1877 = vrot.slane %v1869, %v1876
          %v1879 = vsub.f32 %v1855, %v1877
          %v1880 = vmul.f32 %v1879, 1.442695
          %v1881 = vpow.pop %v1880
          %s1882 = scalar_lea.vmem [#allocation3], 3
          %v1883 = vld [vmem:[%s1882] sm:$0x1]
          %v1884 = vmul.f32 %v1872, %v1883
          %v1885 = vsel %vm1277, %v1881, 0.0
          %v1886 = vrot.slane %v1885, 4
          %v1887 = vadd.f32 %v1885, %v1886
          %v1888 = vrot.slane %v1887, 2
          %v1889 = vadd.f32 %v1887, %v1888
          %v1890 = vrot.slane %v1889, 1
          %v1891 = vadd.f32 %v1889, %v1890
          %v1892 = vadd.f32 %v1884, %v1891
          %1893 = vst.msk [vmem:[%s1882] sm:$0x1] %vm1308, %v1892
          %v1894 = vpack.c.bf16 %v1881, %v1881
          %1896 = vrot.lane.b32.xlu0 %v1807, 32
          %v1897 = vpop.permute.xlu0 %1896
          %1899 = vxpose.xlu0.c.b16.start [1/8] %v1897, 128
          %1900 = vxpose.xlu0.c.b16.cont [2/8] 0, 128
          %1901 = vxpose.xlu0.c.b16.cont [3/8] 0, 128
          %1902 = vxpose.xlu0.c.b16.cont [4/8] 0, 128
          %1903 = vxpose.xlu0.c.b16.cont [5/8] 0, 128
          %1904 = vxpose.xlu0.c.b16.cont [6/8] 0, 128
          %1905 = vxpose.xlu0.c.b16.cont [7/8] 0, 128
          %1906 = vxpose.xlu0.c.b16.end [8/8] 0, 128
          %v1907 = vpop.trf.xlu0
          %v1908 = vpop.trf.xlu0
          %v1909 = vpop.trf.xlu0
          %v1910 = vpop.trf.xlu0
          %v1911 = vpop.trf.xlu0
          %v1912 = vpop.trf.xlu0
          %v1913 = vpop.trf.xlu0
          %v1914 = vpop.trf.xlu0
          %v1916 = vsel %vm1277, %v1907, 0
          %v1919 = vsel %vm1277, %v1908, 0
          %v1922 = vsel %vm1333, %v1894, 0
          %1924 = vmatprep.subr.bf16.mxu0 0
          %1925 = vmatpush1.bf16.msra.mxu0 0
          %1926 = vmatprep.subr.bf16.mxu0 0
          %1927 = vmatpush1.bf16.msra.mxu0 0
          %1928 = vmatprep.subr.bf16.mxu0 0
          %1929 = vmatpush1.bf16.msra.mxu0 0
          %1930 = vmatprep.subr.bf16.mxu0 0
          %1931 = vmatpush1.bf16.msra.mxu0 0
          %1932 = vmatprep.subr.bf16.mxu0 0
          %1933 = vmatpush1.bf16.msra.mxu0 0
          %1934 = vmatprep.subr.bf16.mxu0 0
          %1935 = vmatpush1.bf16.msra.mxu0 0
          %1936 = vmatprep.subr.bf16.mxu0 0
          %1937 = vmatpush1.bf16.msra.mxu0 0
          %1938 = vmatprep.subr.bf16.mxu0 0
          %1939 = vmatpush1.bf16.msra.mxu0 %v1922
          %1940 = vmatprep.subr.bf16.mxu0 0
          %1941 = vmatpush2.bf16.msra.mxu0 0
          %1942 = vmatprep.subr.bf16.mxu0 0
          %1943 = vmatpush2.bf16.msra.mxu0 0
          %1944 = vmatprep.subr.bf16.mxu0 0
          %1945 = vmatpush2.bf16.msra.mxu0 0
          %1946 = vmatprep.subr.bf16.mxu0 0
          %1947 = vmatpush2.bf16.msra.mxu0 0
          %1948 = vmatprep.subr.bf16.mxu0 0
          %1949 = vmatpush2.bf16.msra.mxu0 0
          %1950 = vmatprep.subr.bf16.mxu0 0
          %1951 = vmatpush2.bf16.msra.mxu0 0
          %1952 = vmatprep.subr.bf16.mxu0 0
          %1953 = vmatpush2.bf16.msra.mxu0 0
          %1954 = vmatprep.subr.bf16.mxu0 0
          %1955 = vmatpush2.bf16.msra.mxu0 0
          %1956 = vmatprep.mubr.bf16.mxu0 0
          %1957 = vmatmul.mubr.bf16.gmra.mxu0 %v1916
          %v1958 = vpop.f32.mrf.mxu0
          %v1959 = vadd.f32 0.0, %v1958
          %v1960 = vpop.f32.mrf.mxu0
          %v1961 = vpop.f32.mrf.mxu0
          %v1962 = vadd.f32 0.0, %v1961
          %v1963 = vpop.f32.mrf.mxu0
          %1964 = vmatprep.mubr.bf16.mxu0 0
          %1965 = vmatmul.mubr.bf16.gmra.mxu0 %v1919
          %v1966 = vpop.f32.mrf.mxu0
          %v1967 = vadd.f32 0.0, %v1966
          %v1968 = vpop.f32.mrf.mxu0
          %v1969 = vpop.f32.mrf.mxu0
          %v1970 = vadd.f32 0.0, %v1969
          %v1971 = vpop.f32.mrf.mxu0
          %1972 = vdwg.mxu0
          %s1973 = scalar_lea.vmem [#allocation4], 96
          %v1974 = vld [vmem:[%s1973] sm:$0xff]
          %v1975 = vld [vmem:[%s1973 + $0x8] sm:$0xff]
          %v1976 = vld [vmem:[%s1973 + $0x10] sm:$0xff]
          %v1977 = vld [vmem:[%s1973 + $0x18] sm:$0xff]
          %v1979 = vlaneseq
          %v1980 = vshrl.u32 %v1979, 7
          %v1981 = vsub.s32 0, %v1980
          %v1982 = vrot.slane %v1872, %v1981
          %v1984 = vmul.f32 %v1982, %v1974
          %v1985 = vmul.f32 %v1982, %v1975
          %v1986 = vmul.f32 %v1982, %v1976
          %v1987 = vmul.f32 %v1982, %v1977
          %v1988 = vadd.f32 %v1984, %v1959
          %v1989 = vadd.f32 %v1985, %v1962
          %v1990 = vadd.f32 %v1986, %v1967
          %v1991 = vadd.f32 %v1987, %v1970
          %1992 = vst.msk [vmem:[%s1973] sm:$0xff] %vm1277, %v1988
          %1993 = vst.msk [vmem:[%s1973 + $0x8] sm:$0xff] %vm1277, %v1989
          %1994 = vst.msk [vmem:[%s1973 + $0x10] sm:$0xff] %vm1277, %v1990
          %1995 = vst.msk [vmem:[%s1973 + $0x18] sm:$0xff] %vm1277, %v1991
          %1996 = vst.msk [vmem:[%s1860] sm:$0x1] %vm1308, %v1869
        $region60: #{tpu_custom_call.1} parent=39 // pred_fallthru
          _
        // Predicated region
        $region61: #{tpu_custom_call.1} parent=39 // pred_check
          %p1997 = pneg %p401
        $region62: #{tpu_custom_call.1} parent=39 // pred_check_branch
          %1999 = sbr.rel (%p1997) target = $region64
        $region63: #{tpu_custom_call.1} parent=39 // pred_region
          %v2000 = vld [vmem:[#allocation3] sm:$0x1]
          %v2001 = vld [vmem:[#allocation3 + $0x1] sm:$0x1]
          %v2002 = vld [vmem:[#allocation3 + $0x2] sm:$0x1]
          %v2003 = vld [vmem:[#allocation3 + $0x3] sm:$0x1]
          %v2004 = vmax.f32 %v2000, 1e-30
          %v2005 = vmax.f32 %v2001, 1e-30
          %v2006 = vmax.f32 %v2002, 1e-30
          %v2007 = vmax.f32 %v2003, 1e-30
          %v2008 = vrcp.pop %v2004
          %v2009 = vmul.f32 1.0, %v2008
          %v2010 = vrcp.pop %v2005
          %v2011 = vmul.f32 1.0, %v2010
          %v2012 = vrcp.pop %v2006
          %v2013 = vmul.f32 1.0, %v2012
          %v2014 = vrcp.pop %v2007
          %v2015 = vmul.f32 1.0, %v2014
          %v2016 = vld [vmem:[#allocation4] sm:$0xff]
          %v2017 = vld [vmem:[#allocation4 + $0x8] sm:$0xff]
          %v2018 = vld [vmem:[#allocation4 + $0x10] sm:$0xff]
          %v2019 = vld [vmem:[#allocation4 + $0x18] sm:$0xff]
          %v2020 = vld [vmem:[#allocation4 + $0x20] sm:$0xff]
          %v2021 = vld [vmem:[#allocation4 + $0x28] sm:$0xff]
          %v2022 = vld [vmem:[#allocation4 + $0x30] sm:$0xff]
          %v2023 = vld [vmem:[#allocation4 + $0x38] sm:$0xff]
          %v2024 = vld [vmem:[#allocation4 + $0x40] sm:$0xff]
          %v2025 = vld [vmem:[#allocation4 + $0x48] sm:$0xff]
          %v2026 = vld [vmem:[#allocation4 + $0x50] sm:$0xff]
          %v2027 = vld [vmem:[#allocation4 + $0x58] sm:$0xff]
          %v2028 = vld [vmem:[#allocation4 + $0x60] sm:$0xff]
          %v2029 = vld [vmem:[#allocation4 + $0x68] sm:$0xff]
          %v2030 = vld [vmem:[#allocation4 + $0x70] sm:$0xff]
          %v2031 = vld [vmem:[#allocation4 + $0x78] sm:$0xff]
          %v2036 = vlaneseq
          %v2037 = vshrl.u32 %v2036, 7
          %v2038 = vsub.s32 0, %v2037
          %v2039 = vrot.slane %v2009, %v2038
          %v2040 = vlaneseq
          %v2041 = vshrl.u32 %v2040, 7
          %v2042 = vsub.s32 0, %v2041
          %v2043 = vrot.slane %v2011, %v2042
          %v2044 = vlaneseq
          %v2045 = vshrl.u32 %v2044, 7
          %v2046 = vsub.s32 0, %v2045
          %v2047 = vrot.slane %v2013, %v2046
          %v2048 = vlaneseq
          %v2049 = vshrl.u32 %v2048, 7
          %v2050 = vsub.s32 0, %v2049
          %v2051 = vrot.slane %v2015, %v2050
          %v2056 = vmul.f32 %v2016, %v2039
          %v2057 = vmul.f32 %v2017, %v2039
          %v2058 = vmul.f32 %v2018, %v2039
          %v2059 = vmul.f32 %v2019, %v2039
          %v2060 = vmul.f32 %v2020, %v2043
          %v2061 = vmul.f32 %v2021, %v2043
          %v2062 = vmul.f32 %v2022, %v2043
          %v2063 = vmul.f32 %v2023, %v2043
          %v2064 = vmul.f32 %v2024, %v2047
          %v2065 = vmul.f32 %v2025, %v2047
          %v2066 = vmul.f32 %v2026, %v2047
          %v2067 = vmul.f32 %v2027, %v2047
          %v2068 = vmul.f32 %v2028, %v2051
          %v2069 = vmul.f32 %v2029, %v2051
          %v2070 = vmul.f32 %v2030, %v2051
          %v2071 = vmul.f32 %v2031, %v2051
          %v2072 = vld [vmem:[%s384] sm:$0x1]
          %v2074 = vlaneseq
          %v2075 = vshrl.u32 %v2074, 7
          %v2076 = vsub.s32 0, %v2075
          %v2077 = vrot.slane %v2072, %v2076
          %v2079 = vmul.f32 %v2056, %v2077
          %v2080 = vmul.f32 %v2057, %v2077
          %v2081 = vmul.f32 %v2058, %v2077
          %v2082 = vmul.f32 %v2059, %v2077
          %v2083 = vmul.f32 %v2060, %v2077
          %v2084 = vmul.f32 %v2061, %v2077
          %v2085 = vmul.f32 %v2062, %v2077
          %v2086 = vmul.f32 %v2063, %v2077
          %v2087 = vmul.f32 %v2064, %v2077
          %v2088 = vmul.f32 %v2065, %v2077
          %v2089 = vmul.f32 %v2066, %v2077
          %v2090 = vmul.f32 %v2067, %v2077
          %v2091 = vmul.f32 %v2068, %v2077
          %v2092 = vmul.f32 %v2069, %v2077
          %v2093 = vmul.f32 %v2070, %v2077
          %v2094 = vmul.f32 %v2071, %v2077
          %vm2095 = vcmask 64512
          %2096 = vst.msk [vmem:[%s399] sm:$0xff] %vm2095, %v2079
          %2097 = vst.msk [vmem:[%s399 + $0x8] sm:$0xff] %vm2095, %v2080
          %2098 = vst.msk [vmem:[%s399 + $0x10] sm:$0xff] %vm2095, %v2081
          %2099 = vst.msk [vmem:[%s399 + $0x18] sm:$0xff] %vm2095, %v2082
          %2100 = vst.msk [vmem:[%s399 + $0x20] sm:$0xff] %vm2095, %v2083
          %2101 = vst.msk [vmem:[%s399 + $0x28] sm:$0xff] %vm2095, %v2084
          %2102 = vst.msk [vmem:[%s399 + $0x30] sm:$0xff] %vm2095, %v2085
          %2103 = vst.msk [vmem:[%s399 + $0x38] sm:$0xff] %vm2095, %v2086
          %2104 = vst.msk [vmem:[%s399 + $0x40] sm:$0xff] %vm2095, %v2087
          %2105 = vst.msk [vmem:[%s399 + $0x48] sm:$0xff] %vm2095, %v2088
          %2106 = vst.msk [vmem:[%s399 + $0x50] sm:$0xff] %vm2095, %v2089
          %2107 = vst.msk [vmem:[%s399 + $0x58] sm:$0xff] %vm2095, %v2090
          %2108 = vst.msk [vmem:[%s399 + $0x60] sm:$0xff] %vm2095, %v2091
          %2109 = vst.msk [vmem:[%s399 + $0x68] sm:$0xff] %vm2095, %v2092
          %2110 = vst.msk [vmem:[%s399 + $0x70] sm:$0xff] %vm2095, %v2093
          %2111 = vst.msk [vmem:[%s399 + $0x78] sm:$0xff] %vm2095, %v2094
        $region64: #{tpu_custom_call.1} parent=39 // pred_fallthru
          _
        %p2112 = scmp.lt.s32.totalorder %s34, 1
        %s2113 = scalar_select %p2112, %s34, 1
        %p2114 = scmp.lt.s32.totalorder %s35, 0
        %s2115 = scalar_select %p2114, %s35, 0
        %s2116 = smul.addr %s2113, 16
        %s2117 = sadd.s32 %s2115, %s2116
        %s2118 = smul.addr %s2117, 8
        %s2119 = scalar_lea.vmem %s6, %s2118
        // Predicated region
        $region65: #{tpu_custom_call.1} parent=39 // pred_check
          %p2120 = pneg %p208
        $region66: #{tpu_custom_call.1} parent=39 // pred_check_branch
          %2122 = sbr.rel (%p2120) target = $region68
        $region67: #{tpu_custom_call.1} parent=39 // pred_region
          _
        $region68: #{tpu_custom_call.1} parent=39 // pred_fallthru
          _
      $region40: #{tpu_custom_call.1} parent=5 // pred_fallthru
        _
      %p2123 = scmp.le.s32.totalorder 2, %s24
      // Predicated region
      $region69: #{tpu_custom_call.1} parent=5 // pred_check
        %p2124 = pneg %p2123
      $region70: #{tpu_custom_call.1} parent=5 // pred_check_branch
        %2126 = sbr.rel (%p2124) target = $region72
      $region71: #{tpu_custom_call.1} parent=5 // pred_region
        %s2127 = ssub.s32 %s24, 2
        // Predicated region
        $region73: #{tpu_custom_call.1} parent=71 // pred_check
          %p2128 = pneg %p214
        $region74: #{tpu_custom_call.1} parent=71 // pred_check_branch
          %2130 = sbr.rel (%p2128) target = $region76
        $region75: #{tpu_custom_call.1} parent=71 // pred_region
          %p2131 = scmp.lt.s32.totalorder %s37, 1
          %s2132 = scalar_select %p2131, %s37, 1
          %p2133 = scmp.lt.s32.totalorder %s38, 0
          %s2134 = scalar_select %p2133, %s38, 0
          %s2135 = smul.addr %s2132, 16
          %s2136 = sadd.s32 %s2134, %s2135
          %s2137 = smul.addr %s2136, 8
          %s2138 = scalar_lea.vmem %s6, %s2137
        $region76: #{tpu_custom_call.1} parent=71 // pred_fallthru
          _
      $region72: #{tpu_custom_call.1} parent=5 // pred_fallthru
        _
    $region6: #{tpu_custom_call.1} parent=1 // loop_footer
      %s28 = sadd.s32 1, %s24
    $region7: #{tpu_custom_call.1} parent=1 // loop_footer_branch
      %23 = sbr.rel target = $region3
    $region8: #{tpu_custom_call.1} parent=1 // loop_exit
      _
    %2139 = vsyncpa [#allocation8], 1
    %s2140 = scalar_lea.sflag [#allocation8], 1
    %2141 = vsyncpa %s2140, 1
    %2142 = vsyncpa [#allocation10], 1
    %s2143 = scalar_lea.sflag [#allocation10], 1
    %2144 = vsyncpa %s2143, 1

</llo_original>
